<compile_context>
chip_gen: v6e
topology: v6e:2x2x1
jax: 0.10.0
libtpu: 0.0.40
codegen_flags: <defaults>
</compile_context>

<pallas_src>
import jax
import jax.numpy as jnp
from jax import lax
from jax.experimental import pallas as pl
from jax.experimental.pallas import tpu as pltpu

H = 128          # hidden_size of the block (module default)
EDGE_TILE = 256  # edges per grid step (tunable; multiple of 128)


def _relu(x):
    return jnp.maximum(x, 0.0)


def _bf16(x):
    return x.astype(jnp.bfloat16)


def egcn_block_kernel(node_ref, edge_ref, send_ref, recv_ref,
                      ew1_ref, eb1_ref, ew2_ref, eb2_ref,
                      ew3_ref, eb3_ref, ew4_ref, eb4_ref,
                      nw1_ref, nb1_ref, nw2_ref, nb2_ref,
                      nw3_ref, nb3_ref, nw4_ref, nb4_ref,
                      x_out_ref, e_out_ref,
                      agg_ref, ps_ref, pr_ref):
    k = pl.program_id(0)
    n_pad = node_ref.shape[0]
    te = edge_ref.shape[0]

    # ---- first edge tile only: zero the aggregator and project node features
    # through the first edge-MLP layer (reassociated gather). -----------------
    @pl.when(k == 0)
    def _init():
        agg_ref[...] = jnp.zeros_like(agg_ref)
        node_bf = _bf16(node_ref[...])
        ps_ref[...] = _bf16(jnp.dot(node_bf, ew1_ref[0:H, :],
                                    preferred_element_type=jnp.float32))
        pr_ref[...] = _bf16(jnp.dot(node_bf, ew1_ref[H:2 * H, :],
                                    preferred_element_type=jnp.float32))

    # ---- EdgeBlock on this edge tile ----------------------------------------
    edge = edge_ref[...]                                        # (TE, H) f32
    node_ids = lax.broadcasted_iota(jnp.int32, (n_pad, te), 0)  # (N_pad, TE)
    oh_s = _bf16((node_ids == send_ref[...]).astype(jnp.float32))
    oh_r = _bf16((node_ids == recv_ref[...]).astype(jnp.float32))

    # gather the already-projected node features: contract node axis (dim 0)
    gdims = (((0,), (0,)), ((), ()))
    gs = lax.dot_general(oh_s, ps_ref[...], gdims,
                         preferred_element_type=jnp.float32)    # (TE, H)
    gr = lax.dot_general(oh_r, pr_ref[...], gdims,
                         preferred_element_type=jnp.float32)    # (TE, H)

    h = gs + gr + eb1_ref[...]
    h = h + jnp.dot(_bf16(edge), ew1_ref[2 * H:3 * H, :],
                    preferred_element_type=jnp.float32)
    h = _relu(h)
    h = _relu(jnp.dot(_bf16(h), ew2_ref[...],
                      preferred_element_type=jnp.float32) + eb2_ref[...])
    h = _relu(jnp.dot(_bf16(h), ew3_ref[...],
                      preferred_element_type=jnp.float32) + eb3_ref[...])
    edge_new = jnp.dot(_bf16(h), ew4_ref[...],
                       preferred_element_type=jnp.float32) + eb4_ref[...]

    e_out_ref[...] = edge + edge_new                            # residual

    # scatter-add over receivers: (N_pad, TE) @ (TE, H), accumulated in f32
    agg_ref[...] += jnp.dot(oh_r, _bf16(edge_new),
                            preferred_element_type=jnp.float32)

    # ---- last edge tile only: NodeBlock + residual --------------------------
    @pl.when(k == pl.num_programs(0) - 1)
    def _finalize():
        node = node_ref[...]                                    # (N_pad, H) f32
        node_bf = _bf16(node)
        agg_bf = _bf16(agg_ref[...])
        hn = (jnp.dot(node_bf, nw1_ref[0:H, :],
                      preferred_element_type=jnp.float32)
              + jnp.dot(agg_bf, nw1_ref[H:2 * H, :],
                        preferred_element_type=jnp.float32)
              + nb1_ref[...])
        hn = _relu(hn)
        hn = _relu(jnp.dot(_bf16(hn), nw2_ref[...],
                           preferred_element_type=jnp.float32) + nb2_ref[...])
        hn = _relu(jnp.dot(_bf16(hn), nw3_ref[...],
                           preferred_element_type=jnp.float32) + nb3_ref[...])
        node_new = jnp.dot(_bf16(hn), nw4_ref[...],
                           preferred_element_type=jnp.float32) + nb4_ref[...]
        x_out_ref[...] = node + node_new


def _round_up(x, m):
    return (x + m - 1) // m * m


def _egcn_block(node_attr, edge_attr, senders, receivers, params, *,
                edge_tile=EDGE_TILE):
    n, hn = node_attr.shape
    e, he = edge_attr.shape
    assert hn == H and he == H

    n_pad = _round_up(max(n, 128), 128)        # fill the 128-wide MXU / lanes
    te = edge_tile
    e_pad = _round_up(max(e, te), te)
    n_tiles = e_pad // te

    node_p = jnp.zeros((n_pad, H), jnp.float32).at[:n, :].set(
        node_attr.astype(jnp.float32))
    edge_p = jnp.zeros((e_pad, H), jnp.float32).at[:e, :].set(
        edge_attr.astype(jnp.float32))
    # Padded edges get index == n_pad -> all-zero one-hot columns: they gather
    # zeros and contribute nothing to the aggregation.
    send_p = jnp.full((1, e_pad), n_pad, jnp.int32).at[0, :e].set(
        senders.astype(jnp.int32))
    recv_p = jnp.full((1, e_pad), n_pad, jnp.int32).at[0, :e].set(
        receivers.astype(jnp.int32))

    # bf16 weights for the MXU (f32 accumulation); biases stay f32 (VPU adds).
    (ew1, eb1, ew2, eb2, ew3, eb3, ew4, eb4,
     nw1, nb1, nw2, nb2, nw3, nb3, nw4, nb4) = params
    bf = lambda w: w.astype(jnp.bfloat16)
    weights = (bf(ew1), eb1, bf(ew2), eb2, bf(ew3), eb3, bf(ew4), eb4,
               bf(nw1), nb1, bf(nw2), nb2, bf(nw3), nb3, bf(nw4), nb4)

    const = lambda shape: pl.BlockSpec(shape, lambda k: (0, 0))
    in_specs = [
        const((n_pad, H)),                                  # node (resident)
        pl.BlockSpec((te, H), lambda k: (k, 0)),            # edge tile
        pl.BlockSpec((1, te), lambda k: (0, k)),            # senders tile
        pl.BlockSpec((1, te), lambda k: (0, k)),            # receivers tile
        const((3 * H, H)), const((1, H)),                   # ew1, eb1
        const((H, H)), const((1, H)),                       # ew2, eb2
        const((H, H)), const((1, H)),                       # ew3, eb3
        const((H, H)), const((1, H)),                       # ew4, eb4
        const((2 * H, H)), const((1, H)),                   # nw1, nb1
        const((H, H)), const((1, H)),                       # nw2, nb2
        const((H, H)), const((1, H)),                       # nw3, nb3
        const((H, H)), const((1, H)),                       # nw4, nb4
    ]
    out_specs = (const((n_pad, H)),                         # x_out (resident)
                 pl.BlockSpec((te, H), lambda k: (k, 0)))   # e_out tile

    # Advisory cost estimate for the XLA scheduler.
    flops = (2 * H * H * (4 * e_pad + 7 * n_pad)            # MLP matmuls
             + 6 * e_pad * n_pad * H)                       # gather/scatter
    bytes_accessed = (4 * 2 * n_pad * H + 4 * 2 * e_pad * H + 8 * e_pad
                      + 2 * 11 * H * H + 4 * 8 * H)

    x_full, e_full = pl.pallas_call(
        egcn_block_kernel,
        grid=(n_tiles,),
        in_specs=in_specs,
        out_specs=out_specs,
        out_shape=(jax.ShapeDtypeStruct((n_pad, H), jnp.float32),
                   jax.ShapeDtypeStruct((e_pad, H), jnp.float32)),
        scratch_shapes=[pltpu.VMEM((n_pad, H), jnp.float32),    # agg accum
                        pltpu.VMEM((n_pad, H), jnp.bfloat16),   # node @ W1a
                        pltpu.VMEM((n_pad, H), jnp.bfloat16)],  # node @ W1b
        input_output_aliases={0: 0, 1: 1},                  # residual in-place
        compiler_params=pltpu.CompilerParams(
            dimension_semantics=("arbitrary",)),            # agg carried across
        cost_estimate=pl.CostEstimate(flops=flops, transcendentals=0,
                                      bytes_accessed=bytes_accessed),
    )(node_p, edge_p, send_p, recv_p, *weights)
    return x_full[:n, :], e_full[:e, :]


egcn_block = jax.jit(_egcn_block, static_argnames=("edge_tile",))


def init_params(key):
    # Deterministic synthetic init (PyTorch-Linear-style uniform bounds).
    # Weights stored as (fan_in, fan_out); biases as (1, fan_out).
    def linear(k, fan_in, fan_out):
        kw, kb = jax.random.split(k)
        bound = 1.0 / jnp.sqrt(jnp.float32(fan_in))
        w = jax.random.uniform(kw, (fan_in, fan_out), jnp.float32, -bound, bound)
        b = jax.random.uniform(kb, (1, fan_out), jnp.float32, -bound, bound)
        return w, b

    keys = jax.random.split(key, 8)
    eb = [linear(keys[0], 3 * H, H), linear(keys[1], H, H),
          linear(keys[2], H, H), linear(keys[3], H, H)]
    nb = [linear(keys[4], 2 * H, H), linear(keys[5], H, H),
          linear(keys[6], H, H), linear(keys[7], H, H)]
    flat = []
    for w, b in eb + nb:
        flat += [w, b]
    return tuple(flat)


def reference(node_attr, edge_attr, senders, receivers, params):
    (ew1, eb1, ew2, eb2, ew3, eb3, ew4, eb4,
     nw1, nb1, nw2, nb2, nw3, nb3, nw4, nb4) = params

    def mlp(x, w1, b1, w2, b2, w3, b3, w4, b4):
        h = jnp.maximum(x @ w1 + b1, 0.0)
        h = jnp.maximum(h @ w2 + b2, 0.0)
        h = jnp.maximum(h @ w3 + b3, 0.0)
        return h @ w4 + b4

    se = node_attr[senders]
    re = node_attr[receivers]
    ce = jnp.concatenate([se, re, edge_attr], axis=1)
    edge_new = mlp(ce, ew1, eb1, ew2, eb2, ew3, eb3, ew4, eb4)
    agg = jax.ops.segment_sum(edge_new, receivers,
                              num_segments=node_attr.shape[0])
    cn = jnp.concatenate([node_attr, agg], axis=1)
    node_new = mlp(cn, nw1, nb1, nw2, nb2, nw3, nb3, nw4, nb4)
    return node_attr + node_new, edge_attr + edge_new


if __name__ == "__main__":
    key = jax.random.PRNGKey(0)
    k_node, k_edge, k_send, k_recv, k_par = jax.random.split(key, 5)

    # Small graph; deliberately not multiples of the tile sizes so both the
    # node padding (60 -> 128) and edge padding (640 -> 768, 3 tiles) paths
    # are exercised.
    N, E = 60, 640
    node_attr = jax.random.normal(k_node, (N, H), jnp.float32)
    edge_attr = jax.random.normal(k_edge, (E, H), jnp.float32)
    senders = jax.random.randint(k_send, (E,), 0, N, jnp.int32)
    receivers = jax.random.randint(k_recv, (E,), 0, N, jnp.int32)
    params = init_params(k_par)

    x_out, e_out = egcn_block(node_attr, edge_attr, senders, receivers, params)
    jax.block_until_ready((x_out, e_out))

    x_ref, e_ref = reference(node_attr, edge_attr, senders, receivers, params)
    assert x_out.shape == (N, H) and e_out.shape == (E, H)
    # Kernel feeds the MXU bf16 operands (f32 accumulation); compare against
    # the f32 reference with a bf16-appropriate tolerance.
    assert jnp.allclose(x_out, x_ref, atol=2e-2, rtol=2e-2), \
        float(jnp.max(jnp.abs(x_out - x_ref)))
    assert jnp.allclose(e_out, e_ref, atol=2e-2, rtol=2e-2), \
        float(jnp.max(jnp.abs(e_out - e_ref)))

    print("KERNEL_OK")
</pallas_src>

<mosaic_0001>
module attributes {stable_mosaic.version = 11 : i64} {
  func.func @egcn_block_kernel(%arg0: i32, %arg1: memref<128x128xf32, #tpu.memory_space<vmem>>, %arg2: memref<256x128xf32, #tpu.memory_space<vmem>>, %arg3: memref<1x256xi32, #tpu.memory_space<vmem>>, %arg4: memref<1x256xi32, #tpu.memory_space<vmem>>, %arg5: memref<384x128xbf16, #tpu.memory_space<vmem>>, %arg6: memref<1x128xf32, #tpu.memory_space<vmem>>, %arg7: memref<128x128xbf16, #tpu.memory_space<vmem>>, %arg8: memref<1x128xf32, #tpu.memory_space<vmem>>, %arg9: memref<128x128xbf16, #tpu.memory_space<vmem>>, %arg10: memref<1x128xf32, #tpu.memory_space<vmem>>, %arg11: memref<128x128xbf16, #tpu.memory_space<vmem>>, %arg12: memref<1x128xf32, #tpu.memory_space<vmem>>, %arg13: memref<256x128xbf16, #tpu.memory_space<vmem>>, %arg14: memref<1x128xf32, #tpu.memory_space<vmem>>, %arg15: memref<128x128xbf16, #tpu.memory_space<vmem>>, %arg16: memref<1x128xf32, #tpu.memory_space<vmem>>, %arg17: memref<128x128xbf16, #tpu.memory_space<vmem>>, %arg18: memref<1x128xf32, #tpu.memory_space<vmem>>, %arg19: memref<128x128xbf16, #tpu.memory_space<vmem>>, %arg20: memref<1x128xf32, #tpu.memory_space<vmem>>, %arg21: memref<128x128xf32, #tpu.memory_space<vmem>>, %arg22: memref<256x128xf32, #tpu.memory_space<vmem>>, %arg23: memref<128x128xf32, #tpu.memory_space<vmem>>, %arg24: memref<128x128xbf16, #tpu.memory_space<vmem>>, %arg25: memref<128x128xbf16, #tpu.memory_space<vmem>>) attributes {dimension_semantics = [#tpu.dimension_semantics<arbitrary>], iteration_bounds = array<i64: 3>, scalar_prefetch = 0 : i64, scratch_operands = 3 : i64, tpu.core_type = #tpu.core_type<tc>, window_params = [{pipeline_mode = #tpu.pipeline_mode<synchronous>, transform_indices = @transform_0, window_bounds = array<i64: 128, 128>}, {transform_indices = @transform_1, window_bounds = array<i64: 256, 128>}, {transform_indices = @transform_2, window_bounds = array<i64: 1, 256>}, {transform_indices = @transform_3, window_bounds = array<i64: 1, 256>}, {pipeline_mode = #tpu.pipeline_mode<synchronous>, transform_indices = @transform_4, window_bounds = array<i64: 384, 128>}, {pipeline_mode = #tpu.pipeline_mode<synchronous>, transform_indices = @transform_5, window_bounds = array<i64: 1, 128>}, {pipeline_mode = #tpu.pipeline_mode<synchronous>, transform_indices = @transform_6, window_bounds = array<i64: 128, 128>}, {pipeline_mode = #tpu.pipeline_mode<synchronous>, transform_indices = @transform_7, window_bounds = array<i64: 1, 128>}, {pipeline_mode = #tpu.pipeline_mode<synchronous>, transform_indices = @transform_8, window_bounds = array<i64: 128, 128>}, {pipeline_mode = #tpu.pipeline_mode<synchronous>, transform_indices = @transform_9, window_bounds = array<i64: 1, 128>}, {pipeline_mode = #tpu.pipeline_mode<synchronous>, transform_indices = @transform_10, window_bounds = array<i64: 128, 128>}, {pipeline_mode = #tpu.pipeline_mode<synchronous>, transform_indices = @transform_11, window_bounds = array<i64: 1, 128>}, {pipeline_mode = #tpu.pipeline_mode<synchronous>, transform_indices = @transform_12, window_bounds = array<i64: 256, 128>}, {pipeline_mode = #tpu.pipeline_mode<synchronous>, transform_indices = @transform_13, window_bounds = array<i64: 1, 128>}, {pipeline_mode = #tpu.pipeline_mode<synchronous>, transform_indices = @transform_14, window_bounds = array<i64: 128, 128>}, {pipeline_mode = #tpu.pipeline_mode<synchronous>, transform_indices = @transform_15, window_bounds = array<i64: 1, 128>}, {pipeline_mode = #tpu.pipeline_mode<synchronous>, transform_indices = @transform_16, window_bounds = array<i64: 128, 128>}, {pipeline_mode = #tpu.pipeline_mode<synchronous>, transform_indices = @transform_17, window_bounds = array<i64: 1, 128>}, {pipeline_mode = #tpu.pipeline_mode<synchronous>, transform_indices = @transform_18, window_bounds = array<i64: 128, 128>}, {pipeline_mode = #tpu.pipeline_mode<synchronous>, transform_indices = @transform_19, window_bounds = array<i64: 1, 128>}, {pipeline_mode = #tpu.pipeline_mode<synchronous>, transform_indices = @transform_20, window_bounds = array<i64: 128, 128>}, {transform_indices = @transform_21, window_bounds = array<i64: 256, 128>}]} {
    %c0_i32 = arith.constant 0 : i32
    %0 = arith.cmpi eq, %arg0, %c0_i32 : i32
    %1 = arith.extui %0 : i1 to i32
    %c0_i32_0 = arith.constant 0 : i32
    %2 = arith.cmpi ne, %1, %c0_i32_0 : i32
    scf.if %2 {
      %cst_41 = arith.constant 0.000000e+00 : f32
      %63 = vector.broadcast %cst_41 : f32 to vector<128x128xf32>
      %c0_42 = arith.constant 0 : index
      %c0_43 = arith.constant 0 : index
      %64 = vector.load %arg23[%c0_42, %c0_43] : memref<128x128xf32, #tpu.memory_space<vmem>>, vector<128x128xf32>
      tpu.vector_store %arg23[%c0_42, %c0_43], %63 {strides = array<i32>} : memref<128x128xf32, #tpu.memory_space<vmem>>, vector<128x128xf32>,
      %c0_44 = arith.constant 0 : index
      %c0_45 = arith.constant 0 : index
      %65 = vector.load %arg1[%c0_44, %c0_45] : memref<128x128xf32, #tpu.memory_space<vmem>>, vector<128x128xf32>
      %66 = arith.truncf %65 : vector<128x128xf32> to vector<128x128xbf16>
      %c0_46 = arith.constant 0 : index
      %c0_47 = arith.constant 0 : index
      %67 = vector.load %arg5[%c0_46, %c0_47] : memref<384x128xbf16, #tpu.memory_space<vmem>>, vector<128x128xbf16>
      %cst_48 = arith.constant dense<0.000000e+00> : vector<128x128xf32>
      %68 = tpu.matmul %66, %67, %cst_48 {dimension_numbers = #tpu.dot_dimension_numbers<[1], [0], [0], [1], [0, 0, 1, 1], [], []>} : vector<128x128xbf16>, vector<128x128xbf16>, vector<128x128xf32> -> vector<128x128xf32>
      %69 = arith.truncf %68 : vector<128x128xf32> to vector<128x128xbf16>
      %c0_49 = arith.constant 0 : index
      %c0_50 = arith.constant 0 : index
      %70 = vector.load %arg24[%c0_49, %c0_50] : memref<128x128xbf16, #tpu.memory_space<vmem>>, vector<128x128xbf16>
      tpu.vector_store %arg24[%c0_49, %c0_50], %69 {strides = array<i32>} : memref<128x128xbf16, #tpu.memory_space<vmem>>, vector<128x128xbf16>,
      %c128 = arith.constant 128 : index
      %c0_51 = arith.constant 0 : index
      %71 = vector.load %arg5[%c128, %c0_51] : memref<384x128xbf16, #tpu.memory_space<vmem>>, vector<128x128xbf16>
      %cst_52 = arith.constant dense<0.000000e+00> : vector<128x128xf32>
      %72 = tpu.matmul %66, %71, %cst_52 {dimension_numbers = #tpu.dot_dimension_numbers<[1], [0], [0], [1], [0, 0, 1, 1], [], []>} : vector<128x128xbf16>, vector<128x128xbf16>, vector<128x128xf32> -> vector<128x128xf32>
      %73 = arith.truncf %72 : vector<128x128xf32> to vector<128x128xbf16>
      %c0_53 = arith.constant 0 : index
      %c0_54 = arith.constant 0 : index
      %74 = vector.load %arg25[%c0_53, %c0_54] : memref<128x128xbf16, #tpu.memory_space<vmem>>, vector<128x128xbf16>
      tpu.vector_store %arg25[%c0_53, %c0_54], %73 {strides = array<i32>} : memref<128x128xbf16, #tpu.memory_space<vmem>>, vector<128x128xbf16>,
    } else {
    }
    %c0 = arith.constant 0 : index
    %c0_1 = arith.constant 0 : index
    %3 = vector.load %arg2[%c0, %c0_1] : memref<256x128xf32, #tpu.memory_space<vmem>>, vector<256x128xf32>
    %4 = tpu.iota {dimensions = array<i32: 0>} : vector<128x256xi32>
    %c0_2 = arith.constant 0 : index
    %c0_3 = arith.constant 0 : index
    %5 = vector.load %arg3[%c0_2, %c0_3] : memref<1x256xi32, #tpu.memory_space<vmem>>, vector<1x256xi32>
    %6 = vector.broadcast %5 : vector<1x256xi32> to vector<128x256xi32>
    %7 = arith.cmpi eq, %4, %6 : vector<128x256xi32>
    %8 = arith.extui %7 : vector<128x256xi1> to vector<128x256xi32>
    %9 = arith.sitofp %8 : vector<128x256xi32> to vector<128x256xf32>
    %10 = arith.truncf %9 : vector<128x256xf32> to vector<128x256xbf16>
    %c0_4 = arith.constant 0 : index
    %c0_5 = arith.constant 0 : index
    %11 = vector.load %arg4[%c0_4, %c0_5] : memref<1x256xi32, #tpu.memory_space<vmem>>, vector<1x256xi32>
    %12 = vector.broadcast %11 : vector<1x256xi32> to vector<128x256xi32>
    %13 = arith.cmpi eq, %4, %12 : vector<128x256xi32>
    %14 = arith.extui %13 : vector<128x256xi1> to vector<128x256xi32>
    %15 = arith.sitofp %14 : vector<128x256xi32> to vector<128x256xf32>
    %16 = arith.truncf %15 : vector<128x256xf32> to vector<128x256xbf16>
    %c0_6 = arith.constant 0 : index
    %c0_7 = arith.constant 0 : index
    %17 = vector.load %arg24[%c0_6, %c0_7] : memref<128x128xbf16, #tpu.memory_space<vmem>>, vector<128x128xbf16>
    %cst = arith.constant dense<0.000000e+00> : vector<256x128xf32>
    %18 = tpu.matmul %10, %17, %cst {dimension_numbers = #tpu.dot_dimension_numbers<[0], [0], [1], [1], [0, 1, 1, 1], [], []>} : vector<128x256xbf16>, vector<128x128xbf16>, vector<256x128xf32> -> vector<256x128xf32>
    %c0_8 = arith.constant 0 : index
    %c0_9 = arith.constant 0 : index
    %19 = vector.load %arg25[%c0_8, %c0_9] : memref<128x128xbf16, #tpu.memory_space<vmem>>, vector<128x128xbf16>
    %cst_10 = arith.constant dense<0.000000e+00> : vector<256x128xf32>
    %20 = tpu.matmul %16, %19, %cst_10 {dimension_numbers = #tpu.dot_dimension_numbers<[0], [0], [1], [1], [0, 1, 1, 1], [], []>} : vector<128x256xbf16>, vector<128x128xbf16>, vector<256x128xf32> -> vector<256x128xf32>
    %21 = arith.addf %18, %20 : vector<256x128xf32>
    %c0_11 = arith.constant 0 : index
    %c0_12 = arith.constant 0 : index
    %22 = vector.load %arg6[%c0_11, %c0_12] : memref<1x128xf32, #tpu.memory_space<vmem>>, vector<1x128xf32>
    %23 = vector.broadcast %22 : vector<1x128xf32> to vector<256x128xf32>
    %24 = arith.addf %21, %23 : vector<256x128xf32>
    %25 = arith.truncf %3 : vector<256x128xf32> to vector<256x128xbf16>
    %c256 = arith.constant 256 : index
    %c0_13 = arith.constant 0 : index
    %26 = vector.load %arg5[%c256, %c0_13] : memref<384x128xbf16, #tpu.memory_space<vmem>>, vector<128x128xbf16>
    %cst_14 = arith.constant dense<0.000000e+00> : vector<256x128xf32>
    %27 = tpu.matmul %25, %26, %cst_14 {dimension_numbers = #tpu.dot_dimension_numbers<[1], [0], [0], [1], [0, 0, 1, 1], [], []>} : vector<256x128xbf16>, vector<128x128xbf16>, vector<256x128xf32> -> vector<256x128xf32>
    %28 = arith.addf %24, %27 : vector<256x128xf32>
    %cst_15 = arith.constant 0.000000e+00 : f32
    %29 = vector.broadcast %cst_15 : f32 to vector<256x128xf32>
    %30 = arith.maximumf %28, %29 : vector<256x128xf32>
    %31 = arith.truncf %30 : vector<256x128xf32> to vector<256x128xbf16>
    %c0_16 = arith.constant 0 : index
    %c0_17 = arith.constant 0 : index
    %32 = vector.load %arg7[%c0_16, %c0_17] : memref<128x128xbf16, #tpu.memory_space<vmem>>, vector<128x128xbf16>
    %cst_18 = arith.constant dense<0.000000e+00> : vector<256x128xf32>
    %33 = tpu.matmul %31, %32, %cst_18 {dimension_numbers = #tpu.dot_dimension_numbers<[1], [0], [0], [1], [0, 0, 1, 1], [], []>} : vector<256x128xbf16>, vector<128x128xbf16>, vector<256x128xf32> -> vector<256x128xf32>
    %c0_19 = arith.constant 0 : index
    %c0_20 = arith.constant 0 : index
    %34 = vector.load %arg8[%c0_19, %c0_20] : memref<1x128xf32, #tpu.memory_space<vmem>>, vector<1x128xf32>
    %35 = vector.broadcast %34 : vector<1x128xf32> to vector<256x128xf32>
    %36 = arith.addf %33, %35 : vector<256x128xf32>
    %cst_21 = arith.constant 0.000000e+00 : f32
    %37 = vector.broadcast %cst_21 : f32 to vector<256x128xf32>
    %38 = arith.maximumf %36, %37 : vector<256x128xf32>
    %39 = arith.truncf %38 : vector<256x128xf32> to vector<256x128xbf16>
    %c0_22 = arith.constant 0 : index
    %c0_23 = arith.constant 0 : index
    %40 = vector.load %arg9[%c0_22, %c0_23] : memref<128x128xbf16, #tpu.memory_space<vmem>>, vector<128x128xbf16>
    %cst_24 = arith.constant dense<0.000000e+00> : vector<256x128xf32>
    %41 = tpu.matmul %39, %40, %cst_24 {dimension_numbers = #tpu.dot_dimension_numbers<[1], [0], [0], [1], [0, 0, 1, 1], [], []>} : vector<256x128xbf16>, vector<128x128xbf16>, vector<256x128xf32> -> vector<256x128xf32>
    %c0_25 = arith.constant 0 : index
    %c0_26 = arith.constant 0 : index
    %42 = vector.load %arg10[%c0_25, %c0_26] : memref<1x128xf32, #tpu.memory_space<vmem>>, vector<1x128xf32>
    %43 = vector.broadcast %42 : vector<1x128xf32> to vector<256x128xf32>
    %44 = arith.addf %41, %43 : vector<256x128xf32>
    %cst_27 = arith.constant 0.000000e+00 : f32
    %45 = vector.broadcast %cst_27 : f32 to vector<256x128xf32>
    %46 = arith.maximumf %44, %45 : vector<256x128xf32>
    %47 = arith.truncf %46 : vector<256x128xf32> to vector<256x128xbf16>
    %c0_28 = arith.constant 0 : index
    %c0_29 = arith.constant 0 : index
    %48 = vector.load %arg11[%c0_28, %c0_29] : memref<128x128xbf16, #tpu.memory_space<vmem>>, vector<128x128xbf16>
    %cst_30 = arith.constant dense<0.000000e+00> : vector<256x128xf32>
    %49 = tpu.matmul %47, %48, %cst_30 {dimension_numbers = #tpu.dot_dimension_numbers<[1], [0], [0], [1], [0, 0, 1, 1], [], []>} : vector<256x128xbf16>, vector<128x128xbf16>, vector<256x128xf32> -> vector<256x128xf32>
    %c0_31 = arith.constant 0 : index
    %c0_32 = arith.constant 0 : index
    %50 = vector.load %arg12[%c0_31, %c0_32] : memref<1x128xf32, #tpu.memory_space<vmem>>, vector<1x128xf32>
    %51 = vector.broadcast %50 : vector<1x128xf32> to vector<256x128xf32>
    %52 = arith.addf %49, %51 : vector<256x128xf32>
    %53 = arith.addf %3, %52 : vector<256x128xf32>
    %c0_33 = arith.constant 0 : index
    %c0_34 = arith.constant 0 : index
    %54 = vector.load %arg22[%c0_33, %c0_34] : memref<256x128xf32, #tpu.memory_space<vmem>>, vector<256x128xf32>
    tpu.vector_store %arg22[%c0_33, %c0_34], %53 {strides = array<i32>} : memref<256x128xf32, #tpu.memory_space<vmem>>, vector<256x128xf32>,
    %c0_35 = arith.constant 0 : index
    %c0_36 = arith.constant 0 : index
    %55 = vector.load %arg23[%c0_35, %c0_36] : memref<128x128xf32, #tpu.memory_space<vmem>>, vector<128x128xf32>
    %56 = arith.truncf %52 : vector<256x128xf32> to vector<256x128xbf16>
    %cst_37 = arith.constant dense<0.000000e+00> : vector<128x128xf32>
    %57 = tpu.matmul %16, %56, %cst_37 {dimension_numbers = #tpu.dot_dimension_numbers<[1], [0], [0], [1], [0, 0, 1, 1], [], []>} : vector<128x256xbf16>, vector<256x128xbf16>, vector<128x128xf32> -> vector<128x128xf32>
    %58 = arith.addf %55, %57 : vector<128x128xf32>
    %c0_38 = arith.constant 0 : index
    %c0_39 = arith.constant 0 : index
    %59 = vector.load %arg23[%c0_38, %c0_39] : memref<128x128xf32, #tpu.memory_space<vmem>>, vector<128x128xf32>
    tpu.vector_store %arg23[%c0_38, %c0_39], %58 {strides = array<i32>} : memref<128x128xf32, #tpu.memory_space<vmem>>, vector<128x128xf32>,
    %c2_i32 = arith.constant 2 : i32
    %60 = arith.cmpi eq, %arg0, %c2_i32 : i32
    %61 = arith.extui %60 : i1 to i32
    %c0_i32_40 = arith.constant 0 : i32
    %62 = arith.cmpi ne, %61, %c0_i32_40 : i32
    scf.if %62 {
      %c0_41 = arith.constant 0 : index
      %c0_42 = arith.constant 0 : index
      %63 = vector.load %arg1[%c0_41, %c0_42] : memref<128x128xf32, #tpu.memory_space<vmem>>, vector<128x128xf32>
      %64 = arith.truncf %63 : vector<128x128xf32> to vector<128x128xbf16>
      %c0_43 = arith.constant 0 : index
      %c0_44 = arith.constant 0 : index
      %65 = vector.load %arg23[%c0_43, %c0_44] : memref<128x128xf32, #tpu.memory_space<vmem>>, vector<128x128xf32>
      %66 = arith.truncf %65 : vector<128x128xf32> to vector<128x128xbf16>
      %c0_45 = arith.constant 0 : index
      %c0_46 = arith.constant 0 : index
      %67 = vector.load %arg13[%c0_45, %c0_46] : memref<256x128xbf16, #tpu.memory_space<vmem>>, vector<128x128xbf16>
      %cst_47 = arith.constant dense<0.000000e+00> : vector<128x128xf32>
      %68 = tpu.matmul %64, %67, %cst_47 {dimension_numbers = #tpu.dot_dimension_numbers<[1], [0], [0], [1], [0, 0, 1, 1], [], []>} : vector<128x128xbf16>, vector<128x128xbf16>, vector<128x128xf32> -> vector<128x128xf32>
      %c128 = arith.constant 128 : index
      %c0_48 = arith.constant 0 : index
      %69 = vector.load %arg13[%c128, %c0_48] : memref<256x128xbf16, #tpu.memory_space<vmem>>, vector<128x128xbf16>
      %cst_49 = arith.constant dense<0.000000e+00> : vector<128x128xf32>
      %70 = tpu.matmul %66, %69, %cst_49 {dimension_numbers = #tpu.dot_dimension_numbers<[1], [0], [0], [1], [0, 0, 1, 1], [], []>} : vector<128x128xbf16>, vector<128x128xbf16>, vector<128x128xf32> -> vector<128x128xf32>
      %71 = arith.addf %68, %70 : vector<128x128xf32>
      %c0_50 = arith.constant 0 : index
      %c0_51 = arith.constant 0 : index
      %72 = vector.load %arg14[%c0_50, %c0_51] : memref<1x128xf32, #tpu.memory_space<vmem>>, vector<1x128xf32>
      %73 = vector.broadcast %72 : vector<1x128xf32> to vector<128x128xf32>
      %74 = arith.addf %71, %73 : vector<128x128xf32>
      %cst_52 = arith.constant 0.000000e+00 : f32
      %75 = vector.broadcast %cst_52 : f32 to vector<128x128xf32>
      %76 = arith.maximumf %74, %75 : vector<128x128xf32>
      %77 = arith.truncf %76 : vector<128x128xf32> to vector<128x128xbf16>
      %c0_53 = arith.constant 0 : index
      %c0_54 = arith.constant 0 : index
      %78 = vector.load %arg15[%c0_53, %c0_54] : memref<128x128xbf16, #tpu.memory_space<vmem>>, vector<128x128xbf16>
      %cst_55 = arith.constant dense<0.000000e+00> : vector<128x128xf32>
      %79 = tpu.matmul %77, %78, %cst_55 {dimension_numbers = #tpu.dot_dimension_numbers<[1], [0], [0], [1], [0, 0, 1, 1], [], []>} : vector<128x128xbf16>, vector<128x128xbf16>, vector<128x128xf32> -> vector<128x128xf32>
      %c0_56 = arith.constant 0 : index
      %c0_57 = arith.constant 0 : index
      %80 = vector.load %arg16[%c0_56, %c0_57] : memref<1x128xf32, #tpu.memory_space<vmem>>, vector<1x128xf32>
      %81 = vector.broadcast %80 : vector<1x128xf32> to vector<128x128xf32>
      %82 = arith.addf %79, %81 : vector<128x128xf32>
      %cst_58 = arith.constant 0.000000e+00 : f32
      %83 = vector.broadcast %cst_58 : f32 to vector<128x128xf32>
      %84 = arith.maximumf %82, %83 : vector<128x128xf32>
      %85 = arith.truncf %84 : vector<128x128xf32> to vector<128x128xbf16>
      %c0_59 = arith.constant 0 : index
      %c0_60 = arith.constant 0 : index
      %86 = vector.load %arg17[%c0_59, %c0_60] : memref<128x128xbf16, #tpu.memory_space<vmem>>, vector<128x128xbf16>
      %cst_61 = arith.constant dense<0.000000e+00> : vector<128x128xf32>
      %87 = tpu.matmul %85, %86, %cst_61 {dimension_numbers = #tpu.dot_dimension_numbers<[1], [0], [0], [1], [0, 0, 1, 1], [], []>} : vector<128x128xbf16>, vector<128x128xbf16>, vector<128x128xf32> -> vector<128x128xf32>
      %c0_62 = arith.constant 0 : index
      %c0_63 = arith.constant 0 : index
      %88 = vector.load %arg18[%c0_62, %c0_63] : memref<1x128xf32, #tpu.memory_space<vmem>>, vector<1x128xf32>
      %89 = vector.broadcast %88 : vector<1x128xf32> to vector<128x128xf32>
      %90 = arith.addf %87, %89 : vector<128x128xf32>
      %cst_64 = arith.constant 0.000000e+00 : f32
      %91 = vector.broadcast %cst_64 : f32 to vector<128x128xf32>
      %92 = arith.maximumf %90, %91 : vector<128x128xf32>
      %93 = arith.truncf %92 : vector<128x128xf32> to vector<128x128xbf16>
      %c0_65 = arith.constant 0 : index
      %c0_66 = arith.constant 0 : index
      %94 = vector.load %arg19[%c0_65, %c0_66] : memref<128x128xbf16, #tpu.memory_space<vmem>>, vector<128x128xbf16>
      %cst_67 = arith.constant dense<0.000000e+00> : vector<128x128xf32>
      %95 = tpu.matmul %93, %94, %cst_67 {dimension_numbers = #tpu.dot_dimension_numbers<[1], [0], [0], [1], [0, 0, 1, 1], [], []>} : vector<128x128xbf16>, vector<128x128xbf16>, vector<128x128xf32> -> vector<128x128xf32>
      %c0_68 = arith.constant 0 : index
      %c0_69 = arith.constant 0 : index
      %96 = vector.load %arg20[%c0_68, %c0_69] : memref<1x128xf32, #tpu.memory_space<vmem>>, vector<1x128xf32>
      %97 = vector.broadcast %96 : vector<1x128xf32> to vector<128x128xf32>
      %98 = arith.addf %95, %97 : vector<128x128xf32>
      %99 = arith.addf %63, %98 : vector<128x128xf32>
      %c0_70 = arith.constant 0 : index
      %c0_71 = arith.constant 0 : index
      %100 = vector.load %arg21[%c0_70, %c0_71] : memref<128x128xf32, #tpu.memory_space<vmem>>, vector<128x128xf32>
      tpu.vector_store %arg21[%c0_70, %c0_71], %99 {strides = array<i32>} : memref<128x128xf32, #tpu.memory_space<vmem>>, vector<128x128xf32>,
    } else {
    }
    return
  }
  func.func @transform_0(%arg0: i32) -> (i32, i32) {
    %c0_i32 = arith.constant 0 : i32
    %c0_i32_0 = arith.constant 0 : i32
    %c0_i32_1 = arith.constant 0 : i32
    return %c0_i32, %c0_i32_0 : i32, i32
  }
  func.func @transform_1(%arg0: i32) -> (i32, i32) {
    %c0_i32 = arith.constant 0 : i32
    %c0_i32_0 = arith.constant 0 : i32
    return %arg0, %c0_i32 : i32, i32
  }
  func.func @transform_2(%arg0: i32) -> (i32, i32) {
    %c0_i32 = arith.constant 0 : i32
    %c0_i32_0 = arith.constant 0 : i32
    return %c0_i32, %arg0 : i32, i32
  }
  func.func @transform_3(%arg0: i32) -> (i32, i32) {
    %c0_i32 = arith.constant 0 : i32
    %c0_i32_0 = arith.constant 0 : i32
    return %c0_i32, %arg0 : i32, i32
  }
  func.func @transform_4(%arg0: i32) -> (i32, i32) {
    %c0_i32 = arith.constant 0 : i32
    %c0_i32_0 = arith.constant 0 : i32
    %c0_i32_1 = arith.constant 0 : i32
    return %c0_i32, %c0_i32_0 : i32, i32
  }
  func.func @transform_5(%arg0: i32) -> (i32, i32) {
    %c0_i32 = arith.constant 0 : i32
    %c0_i32_0 = arith.constant 0 : i32
    %c0_i32_1 = arith.constant 0 : i32
    return %c0_i32, %c0_i32_0 : i32, i32
  }
  func.func @transform_6(%arg0: i32) -> (i32, i32) {
    %c0_i32 = arith.constant 0 : i32
    %c0_i32_0 = arith.constant 0 : i32
    %c0_i32_1 = arith.constant 0 : i32
    return %c0_i32, %c0_i32_0 : i32, i32
  }
  func.func @transform_7(%arg0: i32) -> (i32, i32) {
    %c0_i32 = arith.constant 0 : i32
    %c0_i32_0 = arith.constant 0 : i32
    %c0_i32_1 = arith.constant 0 : i32
    return %c0_i32, %c0_i32_0 : i32, i32
  }
  func.func @transform_8(%arg0: i32) -> (i32, i32) {
    %c0_i32 = arith.constant 0 : i32
    %c0_i32_0 = arith.constant 0 : i32
    %c0_i32_1 = arith.constant 0 : i32
    return %c0_i32, %c0_i32_0 : i32, i32
  }
  func.func @transform_9(%arg0: i32) -> (i32, i32) {
    %c0_i32 = arith.constant 0 : i32
    %c0_i32_0 = arith.constant 0 : i32
    %c0_i32_1 = arith.constant 0 : i32
    return %c0_i32, %c0_i32_0 : i32, i32
  }
  func.func @transform_10(%arg0: i32) -> (i32, i32) {
    %c0_i32 = arith.constant 0 : i32
    %c0_i32_0 = arith.constant 0 : i32
    %c0_i32_1 = arith.constant 0 : i32
    return %c0_i32, %c0_i32_0 : i32, i32
  }
  func.func @transform_11(%arg0: i32) -> (i32, i32) {
    %c0_i32 = arith.constant 0 : i32
    %c0_i32_0 = arith.constant 0 : i32
    %c0_i32_1 = arith.constant 0 : i32
    return %c0_i32, %c0_i32_0 : i32, i32
  }
  func.func @transform_12(%arg0: i32) -> (i32, i32) {
    %c0_i32 = arith.constant 0 : i32
    %c0_i32_0 = arith.constant 0 : i32
    %c0_i32_1 = arith.constant 0 : i32
    return %c0_i32, %c0_i32_0 : i32, i32
  }
  func.func @transform_13(%arg0: i32) -> (i32, i32) {
    %c0_i32 = arith.constant 0 : i32
    %c0_i32_0 = arith.constant 0 : i32
    %c0_i32_1 = arith.constant 0 : i32
    return %c0_i32, %c0_i32_0 : i32, i32
  }
  func.func @transform_14(%arg0: i32) -> (i32, i32) {
    %c0_i32 = arith.constant 0 : i32
    %c0_i32_0 = arith.constant 0 : i32
    %c0_i32_1 = arith.constant 0 : i32
    return %c0_i32, %c0_i32_0 : i32, i32
  }
  func.func @transform_15(%arg0: i32) -> (i32, i32) {
    %c0_i32 = arith.constant 0 : i32
    %c0_i32_0 = arith.constant 0 : i32
    %c0_i32_1 = arith.constant 0 : i32
    return %c0_i32, %c0_i32_0 : i32, i32
  }
  func.func @transform_16(%arg0: i32) -> (i32, i32) {
    %c0_i32 = arith.constant 0 : i32
    %c0_i32_0 = arith.constant 0 : i32
    %c0_i32_1 = arith.constant 0 : i32
    return %c0_i32, %c0_i32_0 : i32, i32
  }
  func.func @transform_17(%arg0: i32) -> (i32, i32) {
    %c0_i32 = arith.constant 0 : i32
    %c0_i32_0 = arith.constant 0 : i32
    %c0_i32_1 = arith.constant 0 : i32
    return %c0_i32, %c0_i32_0 : i32, i32
  }
  func.func @transform_18(%arg0: i32) -> (i32, i32) {
    %c0_i32 = arith.constant 0 : i32
    %c0_i32_0 = arith.constant 0 : i32
    %c0_i32_1 = arith.constant 0 : i32
    return %c0_i32, %c0_i32_0 : i32, i32
  }
  func.func @transform_19(%arg0: i32) -> (i32, i32) {
    %c0_i32 = arith.constant 0 : i32
    %c0_i32_0 = arith.constant 0 : i32
    %c0_i32_1 = arith.constant 0 : i32
    return %c0_i32, %c0_i32_0 : i32, i32
  }
  func.func @transform_20(%arg0: i32) -> (i32, i32) {
    %c0_i32 = arith.constant 0 : i32
    %c0_i32_0 = arith.constant 0 : i32
    %c0_i32_1 = arith.constant 0 : i32
    return %c0_i32, %c0_i32_0 : i32, i32
  }
  func.func @transform_21(%arg0: i32) -> (i32, i32) {
    %c0_i32 = arith.constant 0 : i32
    %c0_i32_0 = arith.constant 0 : i32
    return %arg0, %c0_i32 : i32, i32
  }
}

</mosaic_0001>

<llo_original>
// kernel: _egcn_block.1
$region0: #{_egcn_block.1}
  #allocation0 [shape = 'u32[]', space=smem, size = 0x4, offset = 0x4, fixed_abs, tag = 'smem constant byte address 0x4 - core index']
  #allocation1 [shape = 'u32[144,128]{1,0:T(1,128)}', space=vmem, size = 0x12000, scoped, tag = 'internal scratch']
  #allocation2 [shape = 'f32[128,128]{1,0:T(8,128)}', space=vmem, size = 0x10000, scoped, tag = 'scratch operand']
  #allocation3 [shape = 'bf16[128,128]{1,0:T(8,128)(2,1)}', space=vmem, size = 0x8000, scoped, tag = 'scratch operand']
  #allocation4 [shape = 'bf16[128,128]{1,0:T(8,128)(2,1)}', space=vmem, size = 0x8000, scoped, tag = 'scratch operand']
  %s0 = inlined_call_operand.vmem [shape: f32[128,128], index: 0, kind: input, shape index: {}, may-alias: {0,20}]
  %s1 = inlined_call_operand.vmem [shape: f32[768,128], index: 1, kind: input, shape index: {}, may-alias: {1,21}]
  %s2 = inlined_call_operand.vmem [shape: s32[1,768], index: 2, kind: input, shape index: {}]
  %s3 = inlined_call_operand.vmem [shape: s32[1,768], index: 3, kind: input, shape index: {}]
  %s4 = inlined_call_operand.vmem [shape: bf16[384,128], index: 4, kind: input, shape index: {}]
  %s5 = inlined_call_operand.vmem [shape: f32[1,128], index: 5, kind: input, shape index: {}]
  %s6 = inlined_call_operand.vmem [shape: bf16[128,128], index: 6, kind: input, shape index: {}]
  %s7 = inlined_call_operand.vmem [shape: f32[1,128], index: 7, kind: input, shape index: {}]
  %s8 = inlined_call_operand.vmem [shape: bf16[128,128], index: 8, kind: input, shape index: {}]
  %s9 = inlined_call_operand.vmem [shape: f32[1,128], index: 9, kind: input, shape index: {}]
  %s10 = inlined_call_operand.vmem [shape: bf16[128,128], index: 10, kind: input, shape index: {}]
  %s11 = inlined_call_operand.vmem [shape: f32[1,128], index: 11, kind: input, shape index: {}]
  %s12 = inlined_call_operand.vmem [shape: bf16[256,128], index: 12, kind: input, shape index: {}]
  %s13 = inlined_call_operand.vmem [shape: f32[1,128], index: 13, kind: input, shape index: {}]
  %s14 = inlined_call_operand.vmem [shape: bf16[128,128], index: 14, kind: input, shape index: {}]
  %s15 = inlined_call_operand.vmem [shape: f32[1,128], index: 15, kind: input, shape index: {}]
  %s16 = inlined_call_operand.vmem [shape: bf16[128,128], index: 16, kind: input, shape index: {}]
  %s17 = inlined_call_operand.vmem [shape: f32[1,128], index: 17, kind: input, shape index: {}]
  %s18 = inlined_call_operand.vmem [shape: bf16[128,128], index: 18, kind: input, shape index: {}]
  %s19 = inlined_call_operand.vmem [shape: f32[1,128], index: 19, kind: input, shape index: {}]
  %s20 = inlined_call_operand.vmem [shape: f32[128,128], index: 20, kind: output, shape index: {0}, may-alias: {0,20}]
  %s21 = inlined_call_operand.vmem [shape: f32[768,128], index: 21, kind: output, shape index: {1}, may-alias: {1,21}]
  %22 = xla_tuple %s20, %s21
  %s23 = sld [smem:[#allocation0]]
  $region129: #{_egcn_block.1} parent=0
    _
  %s25 = ssub.s32 1, %s23
  %s26 = scalar_select 0, %s25, %s23
  loop: start=0, step=1, limit=5
  $region2: #{_egcn_block.1} parent=0 // loop_pre_header
    _
  $region3: #{_egcn_block.1} parent=0 // loop_header
    %s28 = sphi 0, %s32
    %p29 = scmp.ge.s32.totalorder %s28, 5
    %s36 = sphi 0, %s36
    %s38 = sphi 0, %s36
    %s39 = sphi 0, %s38
    %s53 = sphi 0, %s39
    %s59 = sphi 0, %s61
    %s62 = sphi 0, %s59
    %s63 = sphi 0, %s62
    %s79 = sphi 0, %s63
    %s85 = sphi 0, %s87
    %s88 = sphi 0, %s85
    %s89 = sphi 0, %s88
    %s105 = sphi 0, %s89
    %s111 = sphi 0, %s113
    %s114 = sphi 0, %s111
    %s115 = sphi 0, %s114
    %s131 = sphi 0, %s115
    %s135 = sphi 0, %s135
    %s137 = sphi 0, %s135
    %s138 = sphi 0, %s137
    %s152 = sphi 0, %s138
    %s156 = sphi 0, %s156
    %s158 = sphi 0, %s156
    %s159 = sphi 0, %s158
    %s173 = sphi 0, %s159
    %s177 = sphi 0, %s177
    %s179 = sphi 0, %s177
    %s180 = sphi 0, %s179
    %s194 = sphi 0, %s180
    %s198 = sphi 0, %s198
    %s200 = sphi 0, %s198
    %s201 = sphi 0, %s200
    %s215 = sphi 0, %s201
    %s219 = sphi 0, %s219
    %s221 = sphi 0, %s219
    %s222 = sphi 0, %s221
    %s236 = sphi 0, %s222
    %s240 = sphi 0, %s240
    %s242 = sphi 0, %s240
    %s243 = sphi 0, %s242
    %s257 = sphi 0, %s243
    %s261 = sphi 0, %s261
    %s263 = sphi 0, %s261
    %s264 = sphi 0, %s263
    %s278 = sphi 0, %s264
    %s282 = sphi 0, %s282
    %s284 = sphi 0, %s282
    %s285 = sphi 0, %s284
    %s299 = sphi 0, %s285
    %s303 = sphi 0, %s303
    %s305 = sphi 0, %s303
    %s306 = sphi 0, %s305
    %s320 = sphi 0, %s306
    %s324 = sphi 0, %s324
    %s326 = sphi 0, %s324
    %s327 = sphi 0, %s326
    %s341 = sphi 0, %s327
    %s345 = sphi 0, %s345
    %s347 = sphi 0, %s345
    %s348 = sphi 0, %s347
    %s362 = sphi 0, %s348
    %s366 = sphi 0, %s366
    %s368 = sphi 0, %s366
    %s369 = sphi 0, %s368
    %s383 = sphi 0, %s369
    %s387 = sphi 0, %s387
    %s389 = sphi 0, %s387
    %s390 = sphi 0, %s389
    %s404 = sphi 0, %s390
    %s408 = sphi 0, %s408
    %s410 = sphi 0, %s408
    %s411 = sphi 0, %s410
    %s425 = sphi 0, %s411
    %s429 = sphi 0, %s429
    %s431 = sphi 0, %s429
    %s432 = sphi 0, %s431
    %s446 = sphi 0, %s432
    %s450 = sphi 0, %s450
    %s452 = sphi 0, %s450
    %s453 = sphi 0, %s452
    %s467 = sphi 0, %s453
    %s471 = sphi 0, %s471
    %s473 = sphi 0, %s471
    %s474 = sphi 0, %s473
    %s488 = sphi 0, %s474
    %s494 = sphi 0, %s496
    %s497 = sphi 0, %s494
    %s498 = sphi 0, %s497
    %s514 = sphi 0, %s498
  $region4: #{_egcn_block.1} parent=0 // loop_header_branch
    %31 = sbr.rel (%p29) target = $region8
  $region5: #{_egcn_block.1} parent=0 // loop_body
    %s33 = ssub.s32 %s28, 1
    %s34 = ssub.s32 %s28, 2
    %s35 = sadd.s32 %s28, 1
    %s37 = sadd.s32 %s36, 1
    %p40 = scmp.eq.s32.totalorder %s28, 2
    %p41 = scmp.ne.s32.totalorder %s36, %s38
    %p42 = scmp.eq.s32.totalorder %s28, 0
    %p43 = por %p41, %p42
    %p44 = scmp.ne.s32.totalorder %s36, %s38
    %p45 = scmp.eq.s32.totalorder %s33, 2
    %p46 = por %p44, %p45
    %p47 = scmp.ne.s32.totalorder %s38, %s39
    %p48 = scmp.eq.s32.totalorder %s33, 0
    %p49 = por %p47, %p48
    %p50 = scmp.ne.s32.totalorder %s38, %s39
    %p51 = scmp.eq.s32.totalorder %s34, 2
    %p52 = por %p50, %p51
    %p54 = scmp.ne.s32.totalorder %s39, %s53
    %p55 = scmp.eq.s32.totalorder %s34, 0
    %p56 = por %p54, %p55
    %s57 = ssub.s32 %s28, %s35
    %p58 = scmp.eq.s32.totalorder %s57, 0
    %s60 = sadd.s32 %s59, 1
    %s61 = scalar_select %p58, %s59, %s60
    %p64 = pneg %p58
    %p65 = scmp.eq.s32.totalorder %s28, 2
    %p66 = por %p64, %p65
    %p67 = scmp.ne.s32.totalorder %s59, %s62
    %p68 = scmp.eq.s32.totalorder %s28, 0
    %p69 = por %p67, %p68
    %p70 = scmp.ne.s32.totalorder %s59, %s62
    %p71 = scmp.eq.s32.totalorder %s33, 2
    %p72 = por %p70, %p71
    %p73 = scmp.ne.s32.totalorder %s62, %s63
    %p74 = scmp.eq.s32.totalorder %s33, 0
    %p75 = por %p73, %p74
    %p76 = scmp.ne.s32.totalorder %s62, %s63
    %p77 = scmp.eq.s32.totalorder %s34, 2
    %p78 = por %p76, %p77
    %p80 = scmp.ne.s32.totalorder %s63, %s79
    %p81 = scmp.eq.s32.totalorder %s34, 0
    %p82 = por %p80, %p81
    %s83 = ssub.s32 %s28, %s35
    %p84 = scmp.eq.s32.totalorder %s83, 0
    %s86 = sadd.s32 %s85, 1
    %s87 = scalar_select %p84, %s85, %s86
    %p90 = pneg %p84
    %p91 = scmp.eq.s32.totalorder %s28, 2
    %p92 = por %p90, %p91
    %p93 = scmp.ne.s32.totalorder %s85, %s88
    %p94 = scmp.eq.s32.totalorder %s28, 0
    %p95 = por %p93, %p94
    %p96 = scmp.ne.s32.totalorder %s85, %s88
    %p97 = scmp.eq.s32.totalorder %s33, 2
    %p98 = por %p96, %p97
    %p99 = scmp.ne.s32.totalorder %s88, %s89
    %p100 = scmp.eq.s32.totalorder %s33, 0
    %p101 = por %p99, %p100
    %p102 = scmp.ne.s32.totalorder %s88, %s89
    %p103 = scmp.eq.s32.totalorder %s34, 2
    %p104 = por %p102, %p103
    %p106 = scmp.ne.s32.totalorder %s89, %s105
    %p107 = scmp.eq.s32.totalorder %s34, 0
    %p108 = por %p106, %p107
    %s109 = ssub.s32 %s28, %s35
    %p110 = scmp.eq.s32.totalorder %s109, 0
    %s112 = sadd.s32 %s111, 1
    %s113 = scalar_select %p110, %s111, %s112
    %p116 = pneg %p110
    %p117 = scmp.eq.s32.totalorder %s28, 2
    %p118 = por %p116, %p117
    %p119 = scmp.ne.s32.totalorder %s111, %s114
    %p120 = scmp.eq.s32.totalorder %s28, 0
    %p121 = por %p119, %p120
    %p122 = scmp.ne.s32.totalorder %s111, %s114
    %p123 = scmp.eq.s32.totalorder %s33, 2
    %p124 = por %p122, %p123
    %p125 = scmp.ne.s32.totalorder %s114, %s115
    %p126 = scmp.eq.s32.totalorder %s33, 0
    %p127 = por %p125, %p126
    %p128 = scmp.ne.s32.totalorder %s114, %s115
    %p129 = scmp.eq.s32.totalorder %s34, 2
    %p130 = por %p128, %p129
    %p132 = scmp.ne.s32.totalorder %s115, %s131
    %p133 = scmp.eq.s32.totalorder %s34, 0
    %p134 = por %p132, %p133
    %s136 = sadd.s32 %s135, 1
    %p139 = scmp.eq.s32.totalorder %s28, 2
    %p140 = scmp.ne.s32.totalorder %s135, %s137
    %p141 = scmp.eq.s32.totalorder %s28, 0
    %p142 = por %p140, %p141
    %p143 = scmp.ne.s32.totalorder %s135, %s137
    %p144 = scmp.eq.s32.totalorder %s33, 2
    %p145 = por %p143, %p144
    %p146 = scmp.ne.s32.totalorder %s137, %s138
    %p147 = scmp.eq.s32.totalorder %s33, 0
    %p148 = por %p146, %p147
    %p149 = scmp.ne.s32.totalorder %s137, %s138
    %p150 = scmp.eq.s32.totalorder %s34, 2
    %p151 = por %p149, %p150
    %p153 = scmp.ne.s32.totalorder %s138, %s152
    %p154 = scmp.eq.s32.totalorder %s34, 0
    %p155 = por %p153, %p154
    %s157 = sadd.s32 %s156, 1
    %p160 = scmp.eq.s32.totalorder %s28, 2
    %p161 = scmp.ne.s32.totalorder %s156, %s158
    %p162 = scmp.eq.s32.totalorder %s28, 0
    %p163 = por %p161, %p162
    %p164 = scmp.ne.s32.totalorder %s156, %s158
    %p165 = scmp.eq.s32.totalorder %s33, 2
    %p166 = por %p164, %p165
    %p167 = scmp.ne.s32.totalorder %s158, %s159
    %p168 = scmp.eq.s32.totalorder %s33, 0
    %p169 = por %p167, %p168
    %p170 = scmp.ne.s32.totalorder %s158, %s159
    %p171 = scmp.eq.s32.totalorder %s34, 2
    %p172 = por %p170, %p171
    %p174 = scmp.ne.s32.totalorder %s159, %s173
    %p175 = scmp.eq.s32.totalorder %s34, 0
    %p176 = por %p174, %p175
    %s178 = sadd.s32 %s177, 1
    %p181 = scmp.eq.s32.totalorder %s28, 2
    %p182 = scmp.ne.s32.totalorder %s177, %s179
    %p183 = scmp.eq.s32.totalorder %s28, 0
    %p184 = por %p182, %p183
    %p185 = scmp.ne.s32.totalorder %s177, %s179
    %p186 = scmp.eq.s32.totalorder %s33, 2
    %p187 = por %p185, %p186
    %p188 = scmp.ne.s32.totalorder %s179, %s180
    %p189 = scmp.eq.s32.totalorder %s33, 0
    %p190 = por %p188, %p189
    %p191 = scmp.ne.s32.totalorder %s179, %s180
    %p192 = scmp.eq.s32.totalorder %s34, 2
    %p193 = por %p191, %p192
    %p195 = scmp.ne.s32.totalorder %s180, %s194
    %p196 = scmp.eq.s32.totalorder %s34, 0
    %p197 = por %p195, %p196
    %s199 = sadd.s32 %s198, 1
    %p202 = scmp.eq.s32.totalorder %s28, 2
    %p203 = scmp.ne.s32.totalorder %s198, %s200
    %p204 = scmp.eq.s32.totalorder %s28, 0
    %p205 = por %p203, %p204
    %p206 = scmp.ne.s32.totalorder %s198, %s200
    %p207 = scmp.eq.s32.totalorder %s33, 2
    %p208 = por %p206, %p207
    %p209 = scmp.ne.s32.totalorder %s200, %s201
    %p210 = scmp.eq.s32.totalorder %s33, 0
    %p211 = por %p209, %p210
    %p212 = scmp.ne.s32.totalorder %s200, %s201
    %p213 = scmp.eq.s32.totalorder %s34, 2
    %p214 = por %p212, %p213
    %p216 = scmp.ne.s32.totalorder %s201, %s215
    %p217 = scmp.eq.s32.totalorder %s34, 0
    %p218 = por %p216, %p217
    %s220 = sadd.s32 %s219, 1
    %p223 = scmp.eq.s32.totalorder %s28, 2
    %p224 = scmp.ne.s32.totalorder %s219, %s221
    %p225 = scmp.eq.s32.totalorder %s28, 0
    %p226 = por %p224, %p225
    %p227 = scmp.ne.s32.totalorder %s219, %s221
    %p228 = scmp.eq.s32.totalorder %s33, 2
    %p229 = por %p227, %p228
    %p230 = scmp.ne.s32.totalorder %s221, %s222
    %p231 = scmp.eq.s32.totalorder %s33, 0
    %p232 = por %p230, %p231
    %p233 = scmp.ne.s32.totalorder %s221, %s222
    %p234 = scmp.eq.s32.totalorder %s34, 2
    %p235 = por %p233, %p234
    %p237 = scmp.ne.s32.totalorder %s222, %s236
    %p238 = scmp.eq.s32.totalorder %s34, 0
    %p239 = por %p237, %p238
    %s241 = sadd.s32 %s240, 1
    %p244 = scmp.eq.s32.totalorder %s28, 2
    %p245 = scmp.ne.s32.totalorder %s240, %s242
    %p246 = scmp.eq.s32.totalorder %s28, 0
    %p247 = por %p245, %p246
    %p248 = scmp.ne.s32.totalorder %s240, %s242
    %p249 = scmp.eq.s32.totalorder %s33, 2
    %p250 = por %p248, %p249
    %p251 = scmp.ne.s32.totalorder %s242, %s243
    %p252 = scmp.eq.s32.totalorder %s33, 0
    %p253 = por %p251, %p252
    %p254 = scmp.ne.s32.totalorder %s242, %s243
    %p255 = scmp.eq.s32.totalorder %s34, 2
    %p256 = por %p254, %p255
    %p258 = scmp.ne.s32.totalorder %s243, %s257
    %p259 = scmp.eq.s32.totalorder %s34, 0
    %p260 = por %p258, %p259
    %s262 = sadd.s32 %s261, 1
    %p265 = scmp.eq.s32.totalorder %s28, 2
    %p266 = scmp.ne.s32.totalorder %s261, %s263
    %p267 = scmp.eq.s32.totalorder %s28, 0
    %p268 = por %p266, %p267
    %p269 = scmp.ne.s32.totalorder %s261, %s263
    %p270 = scmp.eq.s32.totalorder %s33, 2
    %p271 = por %p269, %p270
    %p272 = scmp.ne.s32.totalorder %s263, %s264
    %p273 = scmp.eq.s32.totalorder %s33, 0
    %p274 = por %p272, %p273
    %p275 = scmp.ne.s32.totalorder %s263, %s264
    %p276 = scmp.eq.s32.totalorder %s34, 2
    %p277 = por %p275, %p276
    %p279 = scmp.ne.s32.totalorder %s264, %s278
    %p280 = scmp.eq.s32.totalorder %s34, 0
    %p281 = por %p279, %p280
    %s283 = sadd.s32 %s282, 1
    %p286 = scmp.eq.s32.totalorder %s28, 2
    %p287 = scmp.ne.s32.totalorder %s282, %s284
    %p288 = scmp.eq.s32.totalorder %s28, 0
    %p289 = por %p287, %p288
    %p290 = scmp.ne.s32.totalorder %s282, %s284
    %p291 = scmp.eq.s32.totalorder %s33, 2
    %p292 = por %p290, %p291
    %p293 = scmp.ne.s32.totalorder %s284, %s285
    %p294 = scmp.eq.s32.totalorder %s33, 0
    %p295 = por %p293, %p294
    %p296 = scmp.ne.s32.totalorder %s284, %s285
    %p297 = scmp.eq.s32.totalorder %s34, 2
    %p298 = por %p296, %p297
    %p300 = scmp.ne.s32.totalorder %s285, %s299
    %p301 = scmp.eq.s32.totalorder %s34, 0
    %p302 = por %p300, %p301
    %s304 = sadd.s32 %s303, 1
    %p307 = scmp.eq.s32.totalorder %s28, 2
    %p308 = scmp.ne.s32.totalorder %s303, %s305
    %p309 = scmp.eq.s32.totalorder %s28, 0
    %p310 = por %p308, %p309
    %p311 = scmp.ne.s32.totalorder %s303, %s305
    %p312 = scmp.eq.s32.totalorder %s33, 2
    %p313 = por %p311, %p312
    %p314 = scmp.ne.s32.totalorder %s305, %s306
    %p315 = scmp.eq.s32.totalorder %s33, 0
    %p316 = por %p314, %p315
    %p317 = scmp.ne.s32.totalorder %s305, %s306
    %p318 = scmp.eq.s32.totalorder %s34, 2
    %p319 = por %p317, %p318
    %p321 = scmp.ne.s32.totalorder %s306, %s320
    %p322 = scmp.eq.s32.totalorder %s34, 0
    %p323 = por %p321, %p322
    %s325 = sadd.s32 %s324, 1
    %p328 = scmp.eq.s32.totalorder %s28, 2
    %p329 = scmp.ne.s32.totalorder %s324, %s326
    %p330 = scmp.eq.s32.totalorder %s28, 0
    %p331 = por %p329, %p330
    %p332 = scmp.ne.s32.totalorder %s324, %s326
    %p333 = scmp.eq.s32.totalorder %s33, 2
    %p334 = por %p332, %p333
    %p335 = scmp.ne.s32.totalorder %s326, %s327
    %p336 = scmp.eq.s32.totalorder %s33, 0
    %p337 = por %p335, %p336
    %p338 = scmp.ne.s32.totalorder %s326, %s327
    %p339 = scmp.eq.s32.totalorder %s34, 2
    %p340 = por %p338, %p339
    %p342 = scmp.ne.s32.totalorder %s327, %s341
    %p343 = scmp.eq.s32.totalorder %s34, 0
    %p344 = por %p342, %p343
    %s346 = sadd.s32 %s345, 1
    %p349 = scmp.eq.s32.totalorder %s28, 2
    %p350 = scmp.ne.s32.totalorder %s345, %s347
    %p351 = scmp.eq.s32.totalorder %s28, 0
    %p352 = por %p350, %p351
    %p353 = scmp.ne.s32.totalorder %s345, %s347
    %p354 = scmp.eq.s32.totalorder %s33, 2
    %p355 = por %p353, %p354
    %p356 = scmp.ne.s32.totalorder %s347, %s348
    %p357 = scmp.eq.s32.totalorder %s33, 0
    %p358 = por %p356, %p357
    %p359 = scmp.ne.s32.totalorder %s347, %s348
    %p360 = scmp.eq.s32.totalorder %s34, 2
    %p361 = por %p359, %p360
    %p363 = scmp.ne.s32.totalorder %s348, %s362
    %p364 = scmp.eq.s32.totalorder %s34, 0
    %p365 = por %p363, %p364
    %s367 = sadd.s32 %s366, 1
    %p370 = scmp.eq.s32.totalorder %s28, 2
    %p371 = scmp.ne.s32.totalorder %s366, %s368
    %p372 = scmp.eq.s32.totalorder %s28, 0
    %p373 = por %p371, %p372
    %p374 = scmp.ne.s32.totalorder %s366, %s368
    %p375 = scmp.eq.s32.totalorder %s33, 2
    %p376 = por %p374, %p375
    %p377 = scmp.ne.s32.totalorder %s368, %s369
    %p378 = scmp.eq.s32.totalorder %s33, 0
    %p379 = por %p377, %p378
    %p380 = scmp.ne.s32.totalorder %s368, %s369
    %p381 = scmp.eq.s32.totalorder %s34, 2
    %p382 = por %p380, %p381
    %p384 = scmp.ne.s32.totalorder %s369, %s383
    %p385 = scmp.eq.s32.totalorder %s34, 0
    %p386 = por %p384, %p385
    %s388 = sadd.s32 %s387, 1
    %p391 = scmp.eq.s32.totalorder %s28, 2
    %p392 = scmp.ne.s32.totalorder %s387, %s389
    %p393 = scmp.eq.s32.totalorder %s28, 0
    %p394 = por %p392, %p393
    %p395 = scmp.ne.s32.totalorder %s387, %s389
    %p396 = scmp.eq.s32.totalorder %s33, 2
    %p397 = por %p395, %p396
    %p398 = scmp.ne.s32.totalorder %s389, %s390
    %p399 = scmp.eq.s32.totalorder %s33, 0
    %p400 = por %p398, %p399
    %p401 = scmp.ne.s32.totalorder %s389, %s390
    %p402 = scmp.eq.s32.totalorder %s34, 2
    %p403 = por %p401, %p402
    %p405 = scmp.ne.s32.totalorder %s390, %s404
    %p406 = scmp.eq.s32.totalorder %s34, 0
    %p407 = por %p405, %p406
    %s409 = sadd.s32 %s408, 1
    %p412 = scmp.eq.s32.totalorder %s28, 2
    %p413 = scmp.ne.s32.totalorder %s408, %s410
    %p414 = scmp.eq.s32.totalorder %s28, 0
    %p415 = por %p413, %p414
    %p416 = scmp.ne.s32.totalorder %s408, %s410
    %p417 = scmp.eq.s32.totalorder %s33, 2
    %p418 = por %p416, %p417
    %p419 = scmp.ne.s32.totalorder %s410, %s411
    %p420 = scmp.eq.s32.totalorder %s33, 0
    %p421 = por %p419, %p420
    %p422 = scmp.ne.s32.totalorder %s410, %s411
    %p423 = scmp.eq.s32.totalorder %s34, 2
    %p424 = por %p422, %p423
    %p426 = scmp.ne.s32.totalorder %s411, %s425
    %p427 = scmp.eq.s32.totalorder %s34, 0
    %p428 = por %p426, %p427
    %s430 = sadd.s32 %s429, 1
    %p433 = scmp.eq.s32.totalorder %s28, 2
    %p434 = scmp.ne.s32.totalorder %s429, %s431
    %p435 = scmp.eq.s32.totalorder %s28, 0
    %p436 = por %p434, %p435
    %p437 = scmp.ne.s32.totalorder %s429, %s431
    %p438 = scmp.eq.s32.totalorder %s33, 2
    %p439 = por %p437, %p438
    %p440 = scmp.ne.s32.totalorder %s431, %s432
    %p441 = scmp.eq.s32.totalorder %s33, 0
    %p442 = por %p440, %p441
    %p443 = scmp.ne.s32.totalorder %s431, %s432
    %p444 = scmp.eq.s32.totalorder %s34, 2
    %p445 = por %p443, %p444
    %p447 = scmp.ne.s32.totalorder %s432, %s446
    %p448 = scmp.eq.s32.totalorder %s34, 0
    %p449 = por %p447, %p448
    %s451 = sadd.s32 %s450, 1
    %p454 = scmp.eq.s32.totalorder %s28, 2
    %p455 = scmp.ne.s32.totalorder %s450, %s452
    %p456 = scmp.eq.s32.totalorder %s28, 0
    %p457 = por %p455, %p456
    %p458 = scmp.ne.s32.totalorder %s450, %s452
    %p459 = scmp.eq.s32.totalorder %s33, 2
    %p460 = por %p458, %p459
    %p461 = scmp.ne.s32.totalorder %s452, %s453
    %p462 = scmp.eq.s32.totalorder %s33, 0
    %p463 = por %p461, %p462
    %p464 = scmp.ne.s32.totalorder %s452, %s453
    %p465 = scmp.eq.s32.totalorder %s34, 2
    %p466 = por %p464, %p465
    %p468 = scmp.ne.s32.totalorder %s453, %s467
    %p469 = scmp.eq.s32.totalorder %s34, 0
    %p470 = por %p468, %p469
    %s472 = sadd.s32 %s471, 1
    %p475 = scmp.eq.s32.totalorder %s28, 2
    %p476 = scmp.ne.s32.totalorder %s471, %s473
    %p477 = scmp.eq.s32.totalorder %s28, 0
    %p478 = por %p476, %p477
    %p479 = scmp.ne.s32.totalorder %s471, %s473
    %p480 = scmp.eq.s32.totalorder %s33, 2
    %p481 = por %p479, %p480
    %p482 = scmp.ne.s32.totalorder %s473, %s474
    %p483 = scmp.eq.s32.totalorder %s33, 0
    %p484 = por %p482, %p483
    %p485 = scmp.ne.s32.totalorder %s473, %s474
    %p486 = scmp.eq.s32.totalorder %s34, 2
    %p487 = por %p485, %p486
    %p489 = scmp.ne.s32.totalorder %s474, %s488
    %p490 = scmp.eq.s32.totalorder %s34, 0
    %p491 = por %p489, %p490
    %s492 = ssub.s32 %s28, %s35
    %p493 = scmp.eq.s32.totalorder %s492, 0
    %s495 = sadd.s32 %s494, 1
    %s496 = scalar_select %p493, %s494, %s495
    %p499 = pneg %p493
    %p500 = scmp.eq.s32.totalorder %s28, 2
    %p501 = por %p499, %p500
    %p502 = scmp.ne.s32.totalorder %s494, %s497
    %p503 = scmp.eq.s32.totalorder %s28, 0
    %p504 = por %p502, %p503
    %p505 = scmp.ne.s32.totalorder %s494, %s497
    %p506 = scmp.eq.s32.totalorder %s33, 2
    %p507 = por %p505, %p506
    %p508 = scmp.ne.s32.totalorder %s497, %s498
    %p509 = scmp.eq.s32.totalorder %s33, 0
    %p510 = por %p508, %p509
    %p511 = scmp.ne.s32.totalorder %s497, %s498
    %p512 = scmp.eq.s32.totalorder %s34, 2
    %p513 = por %p511, %p512
    %p515 = scmp.ne.s32.totalorder %s498, %s514
    %p516 = scmp.eq.s32.totalorder %s34, 0
    %p517 = por %p515, %p516
    %p518 = scmp.le.s32.totalorder 1, %s28
    %p519 = scmp.lt.s32.totalorder %s28, 4
    %p520 = pnand %p518, %p519
    %p521 = pneg %p520
    // Predicated region
    $region9: #{_egcn_block.1} parent=5 // pred_check
      _
    $region10: #{_egcn_block.1} parent=5 // pred_check_branch
      %523 = sbr.rel (%p520) target = $region12
    $region11: #{_egcn_block.1} parent=5 // pred_region
      %s524 = ssub.s32 %s28, 1
      // Predicated region
      $region13: #{_egcn_block.1} parent=11 // pred_check
        %p525 = pneg %p49
      $region14: #{_egcn_block.1} parent=11 // pred_check_branch
        %527 = sbr.rel (%p525) target = $region16
      $region15: #{_egcn_block.1} parent=11 // pred_region
        _
      $region16: #{_egcn_block.1} parent=11 // pred_fallthru
        _
      // Predicated region
      $region17: #{_egcn_block.1} parent=11 // pred_check
        %p528 = pneg %p148
      $region18: #{_egcn_block.1} parent=11 // pred_check_branch
        %530 = sbr.rel (%p528) target = $region20
      $region19: #{_egcn_block.1} parent=11 // pred_region
        _
      $region20: #{_egcn_block.1} parent=11 // pred_fallthru
        _
      // Predicated region
      $region21: #{_egcn_block.1} parent=11 // pred_check
        %p531 = pneg %p169
      $region22: #{_egcn_block.1} parent=11 // pred_check_branch
        %533 = sbr.rel (%p531) target = $region24
      $region23: #{_egcn_block.1} parent=11 // pred_region
        _
      $region24: #{_egcn_block.1} parent=11 // pred_fallthru
        _
      // Predicated region
      $region25: #{_egcn_block.1} parent=11 // pred_check
        %p534 = pneg %p190
      $region26: #{_egcn_block.1} parent=11 // pred_check_branch
        %536 = sbr.rel (%p534) target = $region28
      $region27: #{_egcn_block.1} parent=11 // pred_region
        _
      $region28: #{_egcn_block.1} parent=11 // pred_fallthru
        _
      // Predicated region
      $region29: #{_egcn_block.1} parent=11 // pred_check
        %p537 = pneg %p211
      $region30: #{_egcn_block.1} parent=11 // pred_check_branch
        %539 = sbr.rel (%p537) target = $region32
      $region31: #{_egcn_block.1} parent=11 // pred_region
        _
      $region32: #{_egcn_block.1} parent=11 // pred_fallthru
        _
      // Predicated region
      $region33: #{_egcn_block.1} parent=11 // pred_check
        %p540 = pneg %p232
      $region34: #{_egcn_block.1} parent=11 // pred_check_branch
        %542 = sbr.rel (%p540) target = $region36
      $region35: #{_egcn_block.1} parent=11 // pred_region
        _
      $region36: #{_egcn_block.1} parent=11 // pred_fallthru
        _
      // Predicated region
      $region37: #{_egcn_block.1} parent=11 // pred_check
        %p543 = pneg %p253
      $region38: #{_egcn_block.1} parent=11 // pred_check_branch
        %545 = sbr.rel (%p543) target = $region40
      $region39: #{_egcn_block.1} parent=11 // pred_region
        _
      $region40: #{_egcn_block.1} parent=11 // pred_fallthru
        _
      // Predicated region
      $region41: #{_egcn_block.1} parent=11 // pred_check
        %p546 = pneg %p274
      $region42: #{_egcn_block.1} parent=11 // pred_check_branch
        %548 = sbr.rel (%p546) target = $region44
      $region43: #{_egcn_block.1} parent=11 // pred_region
        _
      $region44: #{_egcn_block.1} parent=11 // pred_fallthru
        _
      // Predicated region
      $region45: #{_egcn_block.1} parent=11 // pred_check
        %p549 = pneg %p295
      $region46: #{_egcn_block.1} parent=11 // pred_check_branch
        %551 = sbr.rel (%p549) target = $region48
      $region47: #{_egcn_block.1} parent=11 // pred_region
        _
      $region48: #{_egcn_block.1} parent=11 // pred_fallthru
        _
      // Predicated region
      $region49: #{_egcn_block.1} parent=11 // pred_check
        %p552 = pneg %p316
      $region50: #{_egcn_block.1} parent=11 // pred_check_branch
        %554 = sbr.rel (%p552) target = $region52
      $region51: #{_egcn_block.1} parent=11 // pred_region
        _
      $region52: #{_egcn_block.1} parent=11 // pred_fallthru
        _
      // Predicated region
      $region53: #{_egcn_block.1} parent=11 // pred_check
        %p555 = pneg %p337
      $region54: #{_egcn_block.1} parent=11 // pred_check_branch
        %557 = sbr.rel (%p555) target = $region56
      $region55: #{_egcn_block.1} parent=11 // pred_region
        _
      $region56: #{_egcn_block.1} parent=11 // pred_fallthru
        _
      // Predicated region
      $region57: #{_egcn_block.1} parent=11 // pred_check
        %p558 = pneg %p358
      $region58: #{_egcn_block.1} parent=11 // pred_check_branch
        %560 = sbr.rel (%p558) target = $region60
      $region59: #{_egcn_block.1} parent=11 // pred_region
        _
      $region60: #{_egcn_block.1} parent=11 // pred_fallthru
        _
      // Predicated region
      $region61: #{_egcn_block.1} parent=11 // pred_check
        %p561 = pneg %p379
      $region62: #{_egcn_block.1} parent=11 // pred_check_branch
        %563 = sbr.rel (%p561) target = $region64
      $region63: #{_egcn_block.1} parent=11 // pred_region
        _
      $region64: #{_egcn_block.1} parent=11 // pred_fallthru
        _
      // Predicated region
      $region65: #{_egcn_block.1} parent=11 // pred_check
        %p564 = pneg %p400
      $region66: #{_egcn_block.1} parent=11 // pred_check_branch
        %566 = sbr.rel (%p564) target = $region68
      $region67: #{_egcn_block.1} parent=11 // pred_region
        _
      $region68: #{_egcn_block.1} parent=11 // pred_fallthru
        _
      // Predicated region
      $region69: #{_egcn_block.1} parent=11 // pred_check
        %p567 = pneg %p421
      $region70: #{_egcn_block.1} parent=11 // pred_check_branch
        %569 = sbr.rel (%p567) target = $region72
      $region71: #{_egcn_block.1} parent=11 // pred_region
        _
      $region72: #{_egcn_block.1} parent=11 // pred_fallthru
        _
      // Predicated region
      $region73: #{_egcn_block.1} parent=11 // pred_check
        %p570 = pneg %p442
      $region74: #{_egcn_block.1} parent=11 // pred_check_branch
        %572 = sbr.rel (%p570) target = $region76
      $region75: #{_egcn_block.1} parent=11 // pred_region
        _
      $region76: #{_egcn_block.1} parent=11 // pred_fallthru
        _
      // Predicated region
      $region77: #{_egcn_block.1} parent=11 // pred_check
        %p573 = pneg %p463
      $region78: #{_egcn_block.1} parent=11 // pred_check_branch
        %575 = sbr.rel (%p573) target = $region80
      $region79: #{_egcn_block.1} parent=11 // pred_region
        _
      $region80: #{_egcn_block.1} parent=11 // pred_fallthru
        _
    $region12: #{_egcn_block.1} parent=5 // pred_fallthru
      _
    %p576 = scmp.lt.s32.totalorder %s28, 3
    // Predicated region
    $region81: #{_egcn_block.1} parent=5 // pred_check
      %p577 = pneg %p576
    $region82: #{_egcn_block.1} parent=5 // pred_check_branch
      %579 = sbr.rel (%p577) target = $region84
    $region83: #{_egcn_block.1} parent=5 // pred_region
      // Predicated region
      $region85: #{_egcn_block.1} parent=83 // pred_check
        %p580 = pneg %p69
      $region86: #{_egcn_block.1} parent=83 // pred_check_branch
        %582 = sbr.rel (%p580) target = $region88
      $region87: #{_egcn_block.1} parent=83 // pred_region
        %s583 = smul.u32 32, %s28
        %p584 = scmp.lt.s32.totalorder %s583, 95
        %s585 = scalar_select %p584, %s583, 95
        %s586 = smul.addr %s585, 8
        %s587 = scalar_lea.vmem %s1, %s586
        %s588 = smul.u32 32, %s28
      $region88: #{_egcn_block.1} parent=83 // pred_fallthru
        _
      // Predicated region
      $region89: #{_egcn_block.1} parent=83 // pred_check
        %p589 = pneg %p95
      $region90: #{_egcn_block.1} parent=83 // pred_check_branch
        %591 = sbr.rel (%p589) target = $region92
      $region91: #{_egcn_block.1} parent=83 // pred_region
        %s592 = smul.u32 2, %s28
        %p593 = scmp.lt.s32.totalorder %s592, 5
        %s594 = scalar_select %p593, %s592, 5
        %s595 = scalar_lea.vmem %s2, %s594
        %s596 = smul.u32 2, %s28
      $region92: #{_egcn_block.1} parent=83 // pred_fallthru
        _
      // Predicated region
      $region93: #{_egcn_block.1} parent=83 // pred_check
        %p597 = pneg %p121
      $region94: #{_egcn_block.1} parent=83 // pred_check_branch
        %599 = sbr.rel (%p597) target = $region96
      $region95: #{_egcn_block.1} parent=83 // pred_region
        %s600 = smul.u32 2, %s28
        %p601 = scmp.lt.s32.totalorder %s600, 5
        %s602 = scalar_select %p601, %s600, 5
        %s603 = scalar_lea.vmem %s3, %s602
        %s604 = smul.u32 2, %s28
      $region96: #{_egcn_block.1} parent=83 // pred_fallthru
        _
    $region84: #{_egcn_block.1} parent=5 // pred_fallthru
      _
    %p605 = scmp.le.s32.totalorder 1, %s28
    %p606 = scmp.lt.s32.totalorder %s28, 4
    %p607 = pnand %p605, %p606
    %p608 = pneg %p607
    // Predicated region
    $region97: #{_egcn_block.1} parent=5 // pred_check
      _
    $region98: #{_egcn_block.1} parent=5 // pred_check_branch
      %610 = sbr.rel (%p607) target = $region100
    $region99: #{_egcn_block.1} parent=5 // pred_region
      %s611 = ssub.s32 %s28, 1
      %p612 = pneg %p49
      %p613 = pneg %p46
      %s614 = smul.u32 32, %s33
      %p615 = scmp.lt.s32.totalorder %s614, 95
      %s616 = scalar_select %p615, %s614, 95
      %s617 = smul.addr %s616, 8
      %s618 = scalar_lea.vmem %s1, %s617
      %p619 = pneg %p75
      %p620 = pneg %p72
      %s621 = smul.u32 2, %s33
      %p622 = scmp.lt.s32.totalorder %s621, 5
      %s623 = scalar_select %p622, %s621, 5
      %s624 = scalar_lea.vmem %s2, %s623
      %p625 = pneg %p101
      %p626 = pneg %p98
      %s627 = smul.u32 2, %s33
      %p628 = scmp.lt.s32.totalorder %s627, 5
      %s629 = scalar_select %p628, %s627, 5
      %s630 = scalar_lea.vmem %s3, %s629
      %p631 = pneg %p127
      %p632 = pneg %p124
      %p633 = pneg %p148
      %p634 = pneg %p145
      %p635 = pneg %p169
      %p636 = pneg %p166
      %p637 = pneg %p190
      %p638 = pneg %p187
      %p639 = pneg %p211
      %p640 = pneg %p208
      %p641 = pneg %p232
      %p642 = pneg %p229
      %p643 = pneg %p253
      %p644 = pneg %p250
      %p645 = pneg %p274
      %p646 = pneg %p271
      %p647 = pneg %p295
      %p648 = pneg %p292
      %p649 = pneg %p316
      %p650 = pneg %p313
      %p651 = pneg %p337
      %p652 = pneg %p334
      %p653 = pneg %p358
      %p654 = pneg %p355
      %p655 = pneg %p379
      %p656 = pneg %p376
      %p657 = pneg %p400
      %p658 = pneg %p397
      %p659 = pneg %p421
      %p660 = pneg %p418
      %p661 = pneg %p442
      %p662 = pneg %p439
      %p663 = pneg %p463
      %p664 = pneg %p460
      %p665 = pneg %p484
      %p666 = pneg %p481
      %p667 = pneg %p510
      %p668 = pneg %p507
      %s669 = smul.u32 32, %s33
      %p670 = scmp.lt.s32.totalorder %s669, 95
      %s671 = scalar_select %p670, %s669, 95
      %s672 = smul.addr %s671, 8
      %s673 = scalar_lea.vmem %s21, %s672
      %s674 = smul.u32 32, %s33
      %p675 = scmp.lt.s32.totalorder %s674, 95
      %s676 = scalar_select %p675, %s674, 95
      %s677 = smul.addr %s676, 8
      %s678 = scalar_lea.vmem %s1, %s677
      %s679 = smul.u32 32, %s33
      %s680 = smul.u32 2, %s33
      %p681 = scmp.lt.s32.totalorder %s680, 5
      %s682 = scalar_select %p681, %s680, 5
      %s683 = scalar_lea.vmem %s2, %s682
      %s684 = smul.u32 2, %s33
      %s685 = smul.u32 2, %s33
      %p686 = scmp.lt.s32.totalorder %s685, 5
      %s687 = scalar_select %p686, %s685, 5
      %s688 = scalar_lea.vmem %s3, %s687
      %s689 = smul.u32 2, %s33
      %s690 = smul.u32 32, %s33
      %p691 = scmp.lt.s32.totalorder %s690, 95
      %s692 = scalar_select %p691, %s690, 95
      %s693 = smul.addr %s692, 8
      %s694 = scalar_lea.vmem %s21, %s693
      %s695 = smul.u32 32, %s33
      %p697 = scmp.eq.s32.totalorder %s33, 0
      // Predicated region
      $region101: #{_egcn_block.1} parent=99 // pred_check
        %p698 = pneg %p697
      $region102: #{_egcn_block.1} parent=99 // pred_check_branch
        %700 = sbr.rel (%p698) target = $region104
      $region103: #{_egcn_block.1} parent=99 // pred_region
        %701 = vst [vmem:[#allocation2] sm:$0xff] 0.0
        %702 = vst [vmem:[#allocation2 + $0x8] sm:$0xff] 0.0
        %703 = vst [vmem:[#allocation2 + $0x10] sm:$0xff] 0.0
        %704 = vst [vmem:[#allocation2 + $0x18] sm:$0xff] 0.0
        %705 = vst [vmem:[#allocation2 + $0x20] sm:$0xff] 0.0
        %706 = vst [vmem:[#allocation2 + $0x28] sm:$0xff] 0.0
        %707 = vst [vmem:[#allocation2 + $0x30] sm:$0xff] 0.0
        %708 = vst [vmem:[#allocation2 + $0x38] sm:$0xff] 0.0
        %709 = vst [vmem:[#allocation2 + $0x40] sm:$0xff] 0.0
        %710 = vst [vmem:[#allocation2 + $0x48] sm:$0xff] 0.0
        %711 = vst [vmem:[#allocation2 + $0x50] sm:$0xff] 0.0
        %712 = vst [vmem:[#allocation2 + $0x58] sm:$0xff] 0.0
        %713 = vst [vmem:[#allocation2 + $0x60] sm:$0xff] 0.0
        %714 = vst [vmem:[#allocation2 + $0x68] sm:$0xff] 0.0
        %715 = vst [vmem:[#allocation2 + $0x70] sm:$0xff] 0.0
        %716 = vst [vmem:[#allocation2 + $0x78] sm:$0xff] 0.0
        %v717 = vld [vmem:[%s0] sm:$0xff]
        %v718 = vld [vmem:[%s0 + $0x8] sm:$0xff]
        %v719 = vld [vmem:[%s0 + $0x10] sm:$0xff]
        %v720 = vld [vmem:[%s0 + $0x18] sm:$0xff]
        %v721 = vld [vmem:[%s0 + $0x20] sm:$0xff]
        %v722 = vld [vmem:[%s0 + $0x28] sm:$0xff]
        %v723 = vld [vmem:[%s0 + $0x30] sm:$0xff]
        %v724 = vld [vmem:[%s0 + $0x38] sm:$0xff]
        %v725 = vld [vmem:[%s0 + $0x40] sm:$0xff]
        %v726 = vld [vmem:[%s0 + $0x48] sm:$0xff]
        %v727 = vld [vmem:[%s0 + $0x50] sm:$0xff]
        %v728 = vld [vmem:[%s0 + $0x58] sm:$0xff]
        %v729 = vld [vmem:[%s0 + $0x60] sm:$0xff]
        %v730 = vld [vmem:[%s0 + $0x68] sm:$0xff]
        %v731 = vld [vmem:[%s0 + $0x70] sm:$0xff]
        %v732 = vld [vmem:[%s0 + $0x78] sm:$0xff]
        %v733 = vpack.c.bf16 %v718, %v717
        %v734 = vpack.c.bf16 %v720, %v719
        %v735 = vpack.c.bf16 %v722, %v721
        %v736 = vpack.c.bf16 %v724, %v723
        %v737 = vpack.c.bf16 %v726, %v725
        %v738 = vpack.c.bf16 %v728, %v727
        %v739 = vpack.c.bf16 %v730, %v729
        %v740 = vpack.c.bf16 %v732, %v731
        %v741 = vld [vmem:[%s4] sm:$0xf]
        %v742 = vld [vmem:[%s4 + $0x4] sm:$0xf]
        %v743 = vld [vmem:[%s4 + $0x8] sm:$0xf]
        %v744 = vld [vmem:[%s4 + $0xc] sm:$0xf]
        %v745 = vld [vmem:[%s4 + $0x10] sm:$0xf]
        %v746 = vld [vmem:[%s4 + $0x14] sm:$0xf]
        %v747 = vld [vmem:[%s4 + $0x18] sm:$0xf]
        %v748 = vld [vmem:[%s4 + $0x1c] sm:$0xf]
        %v749 = vld [vmem:[%s4 + $0x20] sm:$0xf]
        %v750 = vld [vmem:[%s4 + $0x24] sm:$0xf]
        %v751 = vld [vmem:[%s4 + $0x28] sm:$0xf]
        %v752 = vld [vmem:[%s4 + $0x2c] sm:$0xf]
        %v753 = vld [vmem:[%s4 + $0x30] sm:$0xf]
        %v754 = vld [vmem:[%s4 + $0x34] sm:$0xf]
        %v755 = vld [vmem:[%s4 + $0x38] sm:$0xf]
        %v756 = vld [vmem:[%s4 + $0x3c] sm:$0xf]
        %v773 = vunpack.c.l.b16 %v741
        %v774 = vunpack.c.l.b16 %v742
        %v775 = vunpack.c.l.b16 %v743
        %v776 = vunpack.c.l.b16 %v744
        %v777 = vunpack.c.l.b16 %v745
        %v778 = vunpack.c.l.b16 %v746
        %v779 = vunpack.c.l.b16 %v747
        %v780 = vunpack.c.l.b16 %v748
        %v781 = vunpack.c.l.b16 %v749
        %v782 = vunpack.c.l.b16 %v750
        %v783 = vunpack.c.l.b16 %v751
        %v784 = vunpack.c.l.b16 %v752
        %v785 = vunpack.c.l.b16 %v753
        %v786 = vunpack.c.l.b16 %v754
        %v787 = vunpack.c.l.b16 %v755
        %v788 = vunpack.c.l.b16 %v756
        %v789 = vpack.c.b16 %v774, %v773
        %v790 = vpack.c.b16 %v776, %v775
        %v791 = vpack.c.b16 %v778, %v777
        %v792 = vpack.c.b16 %v780, %v779
        %v793 = vpack.c.b16 %v782, %v781
        %v794 = vpack.c.b16 %v784, %v783
        %v795 = vpack.c.b16 %v786, %v785
        %v796 = vpack.c.b16 %v788, %v787
        %805 = vmatprep.subr.bf16.mxu0 0
        %806 = vmatpush1.bf16.msra.mxu0 %v796
        %807 = vmatprep.subr.bf16.mxu0 0
        %808 = vmatpush1.bf16.msra.mxu0 %v795
        %809 = vmatprep.subr.bf16.mxu0 0
        %810 = vmatpush1.bf16.msra.mxu0 %v794
        %811 = vmatprep.subr.bf16.mxu0 0
        %812 = vmatpush1.bf16.msra.mxu0 %v793
        %813 = vmatprep.subr.bf16.mxu0 0
        %814 = vmatpush1.bf16.msra.mxu0 %v792
        %815 = vmatprep.subr.bf16.mxu0 0
        %816 = vmatpush1.bf16.msra.mxu0 %v791
        %817 = vmatprep.subr.bf16.mxu0 0
        %818 = vmatpush1.bf16.msra.mxu0 %v790
        %819 = vmatprep.subr.bf16.mxu0 0
        %820 = vmatpush1.bf16.msra.mxu0 %v789
        %821 = vmatprep.subr.bf16.mxu0 0
        %822 = vmatpush2.bf16.msra.mxu0 0
        %823 = vmatprep.subr.bf16.mxu0 0
        %824 = vmatpush2.bf16.msra.mxu0 0
        %825 = vmatprep.subr.bf16.mxu0 0
        %826 = vmatpush2.bf16.msra.mxu0 0
        %827 = vmatprep.subr.bf16.mxu0 0
        %828 = vmatpush2.bf16.msra.mxu0 0
        %829 = vmatprep.subr.bf16.mxu0 0
        %830 = vmatpush2.bf16.msra.mxu0 0
        %831 = vmatprep.subr.bf16.mxu0 0
        %832 = vmatpush2.bf16.msra.mxu0 0
        %833 = vmatprep.subr.bf16.mxu0 0
        %834 = vmatpush2.bf16.msra.mxu0 0
        %835 = vmatprep.subr.bf16.mxu0 0
        %836 = vmatpush2.bf16.msra.mxu0 0
        %837 = vmatprep.mubr.bf16.mxu0 0
        %838 = vmatmul.mubr.bf16.gmra.mxu0 %v733
        %v839 = vpop.f32.mrf.mxu0
        %v840 = vadd.f32 0.0, %v839
        %v841 = vpop.f32.mrf.mxu0
        %v842 = vpop.f32.mrf.mxu0
        %v843 = vadd.f32 0.0, %v842
        %v844 = vpop.f32.mrf.mxu0
        %845 = vmatprep.mubr.bf16.mxu0 0
        %846 = vmatmul.mubr.bf16.gmra.mxu0 %v734
        %v847 = vpop.f32.mrf.mxu0
        %v848 = vadd.f32 0.0, %v847
        %v849 = vpop.f32.mrf.mxu0
        %v850 = vpop.f32.mrf.mxu0
        %v851 = vadd.f32 0.0, %v850
        %v852 = vpop.f32.mrf.mxu0
        %853 = vmatprep.mubr.bf16.mxu0 0
        %854 = vmatmul.mubr.bf16.gmra.mxu0 %v735
        %v855 = vpop.f32.mrf.mxu0
        %v856 = vadd.f32 0.0, %v855
        %v857 = vpop.f32.mrf.mxu0
        %v858 = vpop.f32.mrf.mxu0
        %v859 = vadd.f32 0.0, %v858
        %v860 = vpop.f32.mrf.mxu0
        %861 = vmatprep.mubr.bf16.mxu0 0
        %862 = vmatmul.mubr.bf16.gmra.mxu0 %v736
        %v863 = vpop.f32.mrf.mxu0
        %v864 = vadd.f32 0.0, %v863
        %v865 = vpop.f32.mrf.mxu0
        %v866 = vpop.f32.mrf.mxu0
        %v867 = vadd.f32 0.0, %v866
        %v868 = vpop.f32.mrf.mxu0
        %869 = vmatprep.mubr.bf16.mxu0 0
        %870 = vmatmul.mubr.bf16.gmra.mxu0 %v737
        %v871 = vpop.f32.mrf.mxu0
        %v872 = vadd.f32 0.0, %v871
        %v873 = vpop.f32.mrf.mxu0
        %v874 = vpop.f32.mrf.mxu0
        %v875 = vadd.f32 0.0, %v874
        %v876 = vpop.f32.mrf.mxu0
        %877 = vmatprep.mubr.bf16.mxu0 0
        %878 = vmatmul.mubr.bf16.gmra.mxu0 %v738
        %v879 = vpop.f32.mrf.mxu0
        %v880 = vadd.f32 0.0, %v879
        %v881 = vpop.f32.mrf.mxu0
        %v882 = vpop.f32.mrf.mxu0
        %v883 = vadd.f32 0.0, %v882
        %v884 = vpop.f32.mrf.mxu0
        %885 = vmatprep.mubr.bf16.mxu0 0
        %886 = vmatmul.mubr.bf16.gmra.mxu0 %v739
        %v887 = vpop.f32.mrf.mxu0
        %v888 = vadd.f32 0.0, %v887
        %v889 = vpop.f32.mrf.mxu0
        %v890 = vpop.f32.mrf.mxu0
        %v891 = vadd.f32 0.0, %v890
        %v892 = vpop.f32.mrf.mxu0
        %893 = vmatprep.mubr.bf16.mxu0 0
        %894 = vmatmul.mubr.bf16.gmra.mxu0 %v740
        %v895 = vpop.f32.mrf.mxu0
        %v896 = vadd.f32 0.0, %v895
        %v897 = vpop.f32.mrf.mxu0
        %v898 = vpop.f32.mrf.mxu0
        %v899 = vadd.f32 0.0, %v898
        %v900 = vpop.f32.mrf.mxu0
        %901 = vdwg.mxu0
        %v902 = vpack.c.bf16 %v843, %v840
        %v903 = vpack.c.bf16 %v851, %v848
        %v904 = vpack.c.bf16 %v859, %v856
        %v905 = vpack.c.bf16 %v867, %v864
        %v906 = vpack.c.bf16 %v875, %v872
        %v907 = vpack.c.bf16 %v883, %v880
        %v908 = vpack.c.bf16 %v891, %v888
        %v909 = vpack.c.bf16 %v899, %v896
        %v918 = vunpack.c.l.b16 %v902
        %v919 = vunpack.c.h.b16 %v902
        %v920 = vunpack.c.l.b16 %v903
        %v921 = vunpack.c.h.b16 %v903
        %v922 = vunpack.c.l.b16 %v904
        %v923 = vunpack.c.h.b16 %v904
        %v924 = vunpack.c.l.b16 %v905
        %v925 = vunpack.c.h.b16 %v905
        %v926 = vunpack.c.l.b16 %v906
        %v927 = vunpack.c.h.b16 %v906
        %v928 = vunpack.c.l.b16 %v907
        %v929 = vunpack.c.h.b16 %v907
        %v930 = vunpack.c.l.b16 %v908
        %v931 = vunpack.c.h.b16 %v908
        %v932 = vunpack.c.l.b16 %v909
        %v933 = vunpack.c.h.b16 %v909
        %v934 = vpack.c.b16 %v918, %v918
        %v935 = vpack.c.b16 %v919, %v919
        %v936 = vpack.c.b16 %v920, %v920
        %v937 = vpack.c.b16 %v921, %v921
        %v938 = vpack.c.b16 %v922, %v922
        %v939 = vpack.c.b16 %v923, %v923
        %v940 = vpack.c.b16 %v924, %v924
        %v941 = vpack.c.b16 %v925, %v925
        %v942 = vpack.c.b16 %v926, %v926
        %v943 = vpack.c.b16 %v927, %v927
        %v944 = vpack.c.b16 %v928, %v928
        %v945 = vpack.c.b16 %v929, %v929
        %v946 = vpack.c.b16 %v930, %v930
        %v947 = vpack.c.b16 %v931, %v931
        %v948 = vpack.c.b16 %v932, %v932
        %v949 = vpack.c.b16 %v933, %v933
        %966 = vst [vmem:[#allocation3] sm:$0xf] %v934
        %967 = vst [vmem:[#allocation3 + $0x4] sm:$0xf] %v935
        %968 = vst [vmem:[#allocation3 + $0x8] sm:$0xf] %v936
        %969 = vst [vmem:[#allocation3 + $0xc] sm:$0xf] %v937
        %970 = vst [vmem:[#allocation3 + $0x10] sm:$0xf] %v938
        %971 = vst [vmem:[#allocation3 + $0x14] sm:$0xf] %v939
        %972 = vst [vmem:[#allocation3 + $0x18] sm:$0xf] %v940
        %973 = vst [vmem:[#allocation3 + $0x1c] sm:$0xf] %v941
        %974 = vst [vmem:[#allocation3 + $0x20] sm:$0xf] %v942
        %975 = vst [vmem:[#allocation3 + $0x24] sm:$0xf] %v943
        %976 = vst [vmem:[#allocation3 + $0x28] sm:$0xf] %v944
        %977 = vst [vmem:[#allocation3 + $0x2c] sm:$0xf] %v945
        %978 = vst [vmem:[#allocation3 + $0x30] sm:$0xf] %v946
        %979 = vst [vmem:[#allocation3 + $0x34] sm:$0xf] %v947
        %980 = vst [vmem:[#allocation3 + $0x38] sm:$0xf] %v948
        %981 = vst [vmem:[#allocation3 + $0x3c] sm:$0xf] %v949
        %v982 = vld [vmem:[%s4 + $0x40] sm:$0xf]
        %v983 = vld [vmem:[%s4 + $0x44] sm:$0xf]
        %v984 = vld [vmem:[%s4 + $0x48] sm:$0xf]
        %v985 = vld [vmem:[%s4 + $0x4c] sm:$0xf]
        %v986 = vld [vmem:[%s4 + $0x50] sm:$0xf]
        %v987 = vld [vmem:[%s4 + $0x54] sm:$0xf]
        %v988 = vld [vmem:[%s4 + $0x58] sm:$0xf]
        %v989 = vld [vmem:[%s4 + $0x5c] sm:$0xf]
        %v990 = vld [vmem:[%s4 + $0x60] sm:$0xf]
        %v991 = vld [vmem:[%s4 + $0x64] sm:$0xf]
        %v992 = vld [vmem:[%s4 + $0x68] sm:$0xf]
        %v993 = vld [vmem:[%s4 + $0x6c] sm:$0xf]
        %v994 = vld [vmem:[%s4 + $0x70] sm:$0xf]
        %v995 = vld [vmem:[%s4 + $0x74] sm:$0xf]
        %v996 = vld [vmem:[%s4 + $0x78] sm:$0xf]
        %v997 = vld [vmem:[%s4 + $0x7c] sm:$0xf]
        %v1014 = vunpack.c.l.b16 %v982
        %v1015 = vunpack.c.l.b16 %v983
        %v1016 = vunpack.c.l.b16 %v984
        %v1017 = vunpack.c.l.b16 %v985
        %v1018 = vunpack.c.l.b16 %v986
        %v1019 = vunpack.c.l.b16 %v987
        %v1020 = vunpack.c.l.b16 %v988
        %v1021 = vunpack.c.l.b16 %v989
        %v1022 = vunpack.c.l.b16 %v990
        %v1023 = vunpack.c.l.b16 %v991
        %v1024 = vunpack.c.l.b16 %v992
        %v1025 = vunpack.c.l.b16 %v993
        %v1026 = vunpack.c.l.b16 %v994
        %v1027 = vunpack.c.l.b16 %v995
        %v1028 = vunpack.c.l.b16 %v996
        %v1029 = vunpack.c.l.b16 %v997
        %v1030 = vpack.c.b16 %v1015, %v1014
        %v1031 = vpack.c.b16 %v1017, %v1016
        %v1032 = vpack.c.b16 %v1019, %v1018
        %v1033 = vpack.c.b16 %v1021, %v1020
        %v1034 = vpack.c.b16 %v1023, %v1022
        %v1035 = vpack.c.b16 %v1025, %v1024
        %v1036 = vpack.c.b16 %v1027, %v1026
        %v1037 = vpack.c.b16 %v1029, %v1028
        %1046 = vmatprep.subr.bf16.mxu0 0
        %1047 = vmatpush1.bf16.msra.mxu0 %v1037
        %1048 = vmatprep.subr.bf16.mxu0 0
        %1049 = vmatpush1.bf16.msra.mxu0 %v1036
        %1050 = vmatprep.subr.bf16.mxu0 0
        %1051 = vmatpush1.bf16.msra.mxu0 %v1035
        %1052 = vmatprep.subr.bf16.mxu0 0
        %1053 = vmatpush1.bf16.msra.mxu0 %v1034
        %1054 = vmatprep.subr.bf16.mxu0 0
        %1055 = vmatpush1.bf16.msra.mxu0 %v1033
        %1056 = vmatprep.subr.bf16.mxu0 0
        %1057 = vmatpush1.bf16.msra.mxu0 %v1032
        %1058 = vmatprep.subr.bf16.mxu0 0
        %1059 = vmatpush1.bf16.msra.mxu0 %v1031
        %1060 = vmatprep.subr.bf16.mxu0 0
        %1061 = vmatpush1.bf16.msra.mxu0 %v1030
        %1062 = vmatprep.subr.bf16.mxu0 0
        %1063 = vmatpush2.bf16.msra.mxu0 0
        %1064 = vmatprep.subr.bf16.mxu0 0
        %1065 = vmatpush2.bf16.msra.mxu0 0
        %1066 = vmatprep.subr.bf16.mxu0 0
        %1067 = vmatpush2.bf16.msra.mxu0 0
        %1068 = vmatprep.subr.bf16.mxu0 0
        %1069 = vmatpush2.bf16.msra.mxu0 0
        %1070 = vmatprep.subr.bf16.mxu0 0
        %1071 = vmatpush2.bf16.msra.mxu0 0
        %1072 = vmatprep.subr.bf16.mxu0 0
        %1073 = vmatpush2.bf16.msra.mxu0 0
        %1074 = vmatprep.subr.bf16.mxu0 0
        %1075 = vmatpush2.bf16.msra.mxu0 0
        %1076 = vmatprep.subr.bf16.mxu0 0
        %1077 = vmatpush2.bf16.msra.mxu0 0
        %1078 = vmatprep.mubr.bf16.mxu0 0
        %1079 = vmatmul.mubr.bf16.gmra.mxu0 %v733
        %v1080 = vpop.f32.mrf.mxu0
        %v1081 = vadd.f32 0.0, %v1080
        %v1082 = vpop.f32.mrf.mxu0
        %v1083 = vpop.f32.mrf.mxu0
        %v1084 = vadd.f32 0.0, %v1083
        %v1085 = vpop.f32.mrf.mxu0
        %1086 = vmatprep.mubr.bf16.mxu0 0
        %1087 = vmatmul.mubr.bf16.gmra.mxu0 %v734
        %v1088 = vpop.f32.mrf.mxu0
        %v1089 = vadd.f32 0.0, %v1088
        %v1090 = vpop.f32.mrf.mxu0
        %v1091 = vpop.f32.mrf.mxu0
        %v1092 = vadd.f32 0.0, %v1091
        %v1093 = vpop.f32.mrf.mxu0
        %1094 = vmatprep.mubr.bf16.mxu0 0
        %1095 = vmatmul.mubr.bf16.gmra.mxu0 %v735
        %v1096 = vpop.f32.mrf.mxu0
        %v1097 = vadd.f32 0.0, %v1096
        %v1098 = vpop.f32.mrf.mxu0
        %v1099 = vpop.f32.mrf.mxu0
        %v1100 = vadd.f32 0.0, %v1099
        %v1101 = vpop.f32.mrf.mxu0
        %1102 = vmatprep.mubr.bf16.mxu0 0
        %1103 = vmatmul.mubr.bf16.gmra.mxu0 %v736
        %v1104 = vpop.f32.mrf.mxu0
        %v1105 = vadd.f32 0.0, %v1104
        %v1106 = vpop.f32.mrf.mxu0
        %v1107 = vpop.f32.mrf.mxu0
        %v1108 = vadd.f32 0.0, %v1107
        %v1109 = vpop.f32.mrf.mxu0
        %1110 = vmatprep.mubr.bf16.mxu0 0
        %1111 = vmatmul.mubr.bf16.gmra.mxu0 %v737
        %v1112 = vpop.f32.mrf.mxu0
        %v1113 = vadd.f32 0.0, %v1112
        %v1114 = vpop.f32.mrf.mxu0
        %v1115 = vpop.f32.mrf.mxu0
        %v1116 = vadd.f32 0.0, %v1115
        %v1117 = vpop.f32.mrf.mxu0
        %1118 = vmatprep.mubr.bf16.mxu0 0
        %1119 = vmatmul.mubr.bf16.gmra.mxu0 %v738
        %v1120 = vpop.f32.mrf.mxu0
        %v1121 = vadd.f32 0.0, %v1120
        %v1122 = vpop.f32.mrf.mxu0
        %v1123 = vpop.f32.mrf.mxu0
        %v1124 = vadd.f32 0.0, %v1123
        %v1125 = vpop.f32.mrf.mxu0
        %1126 = vmatprep.mubr.bf16.mxu0 0
        %1127 = vmatmul.mubr.bf16.gmra.mxu0 %v739
        %v1128 = vpop.f32.mrf.mxu0
        %v1129 = vadd.f32 0.0, %v1128
        %v1130 = vpop.f32.mrf.mxu0
        %v1131 = vpop.f32.mrf.mxu0
        %v1132 = vadd.f32 0.0, %v1131
        %v1133 = vpop.f32.mrf.mxu0
        %1134 = vmatprep.mubr.bf16.mxu0 0
        %1135 = vmatmul.mubr.bf16.gmra.mxu0 %v740
        %v1136 = vpop.f32.mrf.mxu0
        %v1137 = vadd.f32 0.0, %v1136
        %v1138 = vpop.f32.mrf.mxu0
        %v1139 = vpop.f32.mrf.mxu0
        %v1140 = vadd.f32 0.0, %v1139
        %v1141 = vpop.f32.mrf.mxu0
        %1142 = vdwg.mxu0
        %v1143 = vpack.c.bf16 %v1084, %v1081
        %v1144 = vpack.c.bf16 %v1092, %v1089
        %v1145 = vpack.c.bf16 %v1100, %v1097
        %v1146 = vpack.c.bf16 %v1108, %v1105
        %v1147 = vpack.c.bf16 %v1116, %v1113
        %v1148 = vpack.c.bf16 %v1124, %v1121
        %v1149 = vpack.c.bf16 %v1132, %v1129
        %v1150 = vpack.c.bf16 %v1140, %v1137
        %v1159 = vunpack.c.l.b16 %v1143
        %v1160 = vunpack.c.h.b16 %v1143
        %v1161 = vunpack.c.l.b16 %v1144
        %v1162 = vunpack.c.h.b16 %v1144
        %v1163 = vunpack.c.l.b16 %v1145
        %v1164 = vunpack.c.h.b16 %v1145
        %v1165 = vunpack.c.l.b16 %v1146
        %v1166 = vunpack.c.h.b16 %v1146
        %v1167 = vunpack.c.l.b16 %v1147
        %v1168 = vunpack.c.h.b16 %v1147
        %v1169 = vunpack.c.l.b16 %v1148
        %v1170 = vunpack.c.h.b16 %v1148
        %v1171 = vunpack.c.l.b16 %v1149
        %v1172 = vunpack.c.h.b16 %v1149
        %v1173 = vunpack.c.l.b16 %v1150
        %v1174 = vunpack.c.h.b16 %v1150
        %v1175 = vpack.c.b16 %v1159, %v1159
        %v1176 = vpack.c.b16 %v1160, %v1160
        %v1177 = vpack.c.b16 %v1161, %v1161
        %v1178 = vpack.c.b16 %v1162, %v1162
        %v1179 = vpack.c.b16 %v1163, %v1163
        %v1180 = vpack.c.b16 %v1164, %v1164
        %v1181 = vpack.c.b16 %v1165, %v1165
        %v1182 = vpack.c.b16 %v1166, %v1166
        %v1183 = vpack.c.b16 %v1167, %v1167
        %v1184 = vpack.c.b16 %v1168, %v1168
        %v1185 = vpack.c.b16 %v1169, %v1169
        %v1186 = vpack.c.b16 %v1170, %v1170
        %v1187 = vpack.c.b16 %v1171, %v1171
        %v1188 = vpack.c.b16 %v1172, %v1172
        %v1189 = vpack.c.b16 %v1173, %v1173
        %v1190 = vpack.c.b16 %v1174, %v1174
        %1207 = vst [vmem:[#allocation4] sm:$0xf] %v1175
        %1208 = vst [vmem:[#allocation4 + $0x4] sm:$0xf] %v1176
        %1209 = vst [vmem:[#allocation4 + $0x8] sm:$0xf] %v1177
        %1210 = vst [vmem:[#allocation4 + $0xc] sm:$0xf] %v1178
        %1211 = vst [vmem:[#allocation4 + $0x10] sm:$0xf] %v1179
        %1212 = vst [vmem:[#allocation4 + $0x14] sm:$0xf] %v1180
        %1213 = vst [vmem:[#allocation4 + $0x18] sm:$0xf] %v1181
        %1214 = vst [vmem:[#allocation4 + $0x1c] sm:$0xf] %v1182
        %1215 = vst [vmem:[#allocation4 + $0x20] sm:$0xf] %v1183
        %1216 = vst [vmem:[#allocation4 + $0x24] sm:$0xf] %v1184
        %1217 = vst [vmem:[#allocation4 + $0x28] sm:$0xf] %v1185
        %1218 = vst [vmem:[#allocation4 + $0x2c] sm:$0xf] %v1186
        %1219 = vst [vmem:[#allocation4 + $0x30] sm:$0xf] %v1187
        %1220 = vst [vmem:[#allocation4 + $0x34] sm:$0xf] %v1188
        %1221 = vst [vmem:[#allocation4 + $0x38] sm:$0xf] %v1189
        %1222 = vst [vmem:[#allocation4 + $0x3c] sm:$0xf] %v1190
      $region104: #{_egcn_block.1} parent=99 // pred_fallthru
        _
      %v1223 = vld [vmem:[%s678] sm:$0xff]
      %v1224 = vld [vmem:[%s678 + $0x8] sm:$0xff]
      %v1225 = vld [vmem:[%s678 + $0x10] sm:$0xff]
      %v1226 = vld [vmem:[%s678 + $0x18] sm:$0xff]
      %v1227 = vld [vmem:[%s678 + $0x20] sm:$0xff]
      %v1228 = vld [vmem:[%s678 + $0x28] sm:$0xff]
      %v1229 = vld [vmem:[%s678 + $0x30] sm:$0xff]
      %v1230 = vld [vmem:[%s678 + $0x38] sm:$0xff]
      %v1231 = vld [vmem:[%s678 + $0x40] sm:$0xff]
      %v1232 = vld [vmem:[%s678 + $0x48] sm:$0xff]
      %v1233 = vld [vmem:[%s678 + $0x50] sm:$0xff]
      %v1234 = vld [vmem:[%s678 + $0x58] sm:$0xff]
      %v1235 = vld [vmem:[%s678 + $0x60] sm:$0xff]
      %v1236 = vld [vmem:[%s678 + $0x68] sm:$0xff]
      %v1237 = vld [vmem:[%s678 + $0x70] sm:$0xff]
      %v1238 = vld [vmem:[%s678 + $0x78] sm:$0xff]
      %v1239 = vld [vmem:[%s678 + $0x80] sm:$0xff]
      %v1240 = vld [vmem:[%s678 + $0x88] sm:$0xff]
      %v1241 = vld [vmem:[%s678 + $0x90] sm:$0xff]
      %v1242 = vld [vmem:[%s678 + $0x98] sm:$0xff]
      %v1243 = vld [vmem:[%s678 + $0xa0] sm:$0xff]
      %v1244 = vld [vmem:[%s678 + $0xa8] sm:$0xff]
      %v1245 = vld [vmem:[%s678 + $0xb0] sm:$0xff]
      %v1246 = vld [vmem:[%s678 + $0xb8] sm:$0xff]
      %v1247 = vld [vmem:[%s678 + $0xc0] sm:$0xff]
      %v1248 = vld [vmem:[%s678 + $0xc8] sm:$0xff]
      %v1249 = vld [vmem:[%s678 + $0xd0] sm:$0xff]
      %v1250 = vld [vmem:[%s678 + $0xd8] sm:$0xff]
      %v1251 = vld [vmem:[%s678 + $0xe0] sm:$0xff]
      %v1252 = vld [vmem:[%s678 + $0xe8] sm:$0xff]
      %v1253 = vld [vmem:[%s678 + $0xf0] sm:$0xff]
      %v1254 = vld [vmem:[%s678 + $0xf8] sm:$0xff]
      %v1255 = vlaneseq
      %v1256 = vshrl.u32 %v1255, 7
      %v1257 = vadd.s32 %v1256, 8
      %v1258 = vadd.s32 %v1256, 16
      %v1259 = vadd.s32 %v1256, 24
      %v1260 = vadd.s32 %v1256, 32
      %v1261 = vadd.s32 %v1256, 40
      %v1262 = vadd.s32 %v1256, 48
      %v1263 = vadd.s32 %v1256, 56
      %v1264 = vadd.s32 %v1256, 64
      %v1265 = vadd.s32 %v1256, 72
      %v1266 = vadd.s32 %v1256, 80
      %v1267 = vadd.s32 %v1256, 88
      %v1268 = vadd.s32 %v1256, 96
      %v1269 = vadd.s32 %v1256, 104
      %v1270 = vadd.s32 %v1256, 112
      %v1271 = vadd.s32 %v1256, 120
      %v1272 = vld [vmem:[%s683] sm:$0x3]
      %v1273 = vlaneseq
      %v1274 = vshrl.u32 %v1273, 7
      %v1275 = vsub.s32 0, %v1274
      %v1276 = vrot.slane %v1272, %v1275
      %v1277 = vlaneseq
      %v1278 = vshrl.u32 %v1277, 7
      %v1279 = vsub.s32 1, %v1278
      %v1280 = vrot.slane %v1272, %v1279
      %vm1281 = vcmp.eq.s32.totalorder %v1256, %v1276
      %vm1282 = vcmp.eq.s32.totalorder %v1256, %v1280
      %vm1283 = vcmp.eq.s32.totalorder %v1257, %v1276
      %vm1284 = vcmp.eq.s32.totalorder %v1257, %v1280
      %vm1285 = vcmp.eq.s32.totalorder %v1258, %v1276
      %vm1286 = vcmp.eq.s32.totalorder %v1258, %v1280
      %vm1287 = vcmp.eq.s32.totalorder %v1259, %v1276
      %vm1288 = vcmp.eq.s32.totalorder %v1259, %v1280
      %vm1289 = vcmp.eq.s32.totalorder %v1260, %v1276
      %vm1290 = vcmp.eq.s32.totalorder %v1260, %v1280
      %vm1291 = vcmp.eq.s32.totalorder %v1261, %v1276
      %vm1292 = vcmp.eq.s32.totalorder %v1261, %v1280
      %vm1293 = vcmp.eq.s32.totalorder %v1262, %v1276
      %vm1294 = vcmp.eq.s32.totalorder %v1262, %v1280
      %vm1295 = vcmp.eq.s32.totalorder %v1263, %v1276
      %vm1296 = vcmp.eq.s32.totalorder %v1263, %v1280
      %vm1297 = vcmp.eq.s32.totalorder %v1264, %v1276
      %vm1298 = vcmp.eq.s32.totalorder %v1264, %v1280
      %vm1299 = vcmp.eq.s32.totalorder %v1265, %v1276
      %vm1300 = vcmp.eq.s32.totalorder %v1265, %v1280
      %vm1301 = vcmp.eq.s32.totalorder %v1266, %v1276
      %vm1302 = vcmp.eq.s32.totalorder %v1266, %v1280
      %vm1303 = vcmp.eq.s32.totalorder %v1267, %v1276
      %vm1304 = vcmp.eq.s32.totalorder %v1267, %v1280
      %vm1305 = vcmp.eq.s32.totalorder %v1268, %v1276
      %vm1306 = vcmp.eq.s32.totalorder %v1268, %v1280
      %vm1307 = vcmp.eq.s32.totalorder %v1269, %v1276
      %vm1308 = vcmp.eq.s32.totalorder %v1269, %v1280
      %vm1309 = vcmp.eq.s32.totalorder %v1270, %v1276
      %vm1310 = vcmp.eq.s32.totalorder %v1270, %v1280
      %vm1311 = vcmp.eq.s32.totalorder %v1271, %v1276
      %vm1312 = vcmp.eq.s32.totalorder %v1271, %v1280
      %v1313 = vsel %vm1281, 1, 0
      %v1314 = vsel %vm1282, 1, 0
      %v1315 = vsel %vm1283, 1, 0
      %v1316 = vsel %vm1284, 1, 0
      %v1317 = vsel %vm1285, 1, 0
      %v1318 = vsel %vm1286, 1, 0
      %v1319 = vsel %vm1287, 1, 0
      %v1320 = vsel %vm1288, 1, 0
      %v1321 = vsel %vm1289, 1, 0
      %v1322 = vsel %vm1290, 1, 0
      %v1323 = vsel %vm1291, 1, 0
      %v1324 = vsel %vm1292, 1, 0
      %v1325 = vsel %vm1293, 1, 0
      %v1326 = vsel %vm1294, 1, 0
      %v1327 = vsel %vm1295, 1, 0
      %v1328 = vsel %vm1296, 1, 0
      %v1329 = vsel %vm1297, 1, 0
      %v1330 = vsel %vm1298, 1, 0
      %v1331 = vsel %vm1299, 1, 0
      %v1332 = vsel %vm1300, 1, 0
      %v1333 = vsel %vm1301, 1, 0
      %v1334 = vsel %vm1302, 1, 0
      %v1335 = vsel %vm1303, 1, 0
      %v1336 = vsel %vm1304, 1, 0
      %v1337 = vsel %vm1305, 1, 0
      %v1338 = vsel %vm1306, 1, 0
      %v1339 = vsel %vm1307, 1, 0
      %v1340 = vsel %vm1308, 1, 0
      %v1341 = vsel %vm1309, 1, 0
      %v1342 = vsel %vm1310, 1, 0
      %v1343 = vsel %vm1311, 1, 0
      %v1344 = vsel %vm1312, 1, 0
      %v1345 = vcvt.s32.f32 %v1313
      %v1346 = vcvt.s32.f32 %v1314
      %v1347 = vcvt.s32.f32 %v1315
      %v1348 = vcvt.s32.f32 %v1316
      %v1349 = vcvt.s32.f32 %v1317
      %v1350 = vcvt.s32.f32 %v1318
      %v1351 = vcvt.s32.f32 %v1319
      %v1352 = vcvt.s32.f32 %v1320
      %v1353 = vcvt.s32.f32 %v1321
      %v1354 = vcvt.s32.f32 %v1322
      %v1355 = vcvt.s32.f32 %v1323
      %v1356 = vcvt.s32.f32 %v1324
      %v1357 = vcvt.s32.f32 %v1325
      %v1358 = vcvt.s32.f32 %v1326
      %v1359 = vcvt.s32.f32 %v1327
      %v1360 = vcvt.s32.f32 %v1328
      %v1361 = vcvt.s32.f32 %v1329
      %v1362 = vcvt.s32.f32 %v1330
      %v1363 = vcvt.s32.f32 %v1331
      %v1364 = vcvt.s32.f32 %v1332
      %v1365 = vcvt.s32.f32 %v1333
      %v1366 = vcvt.s32.f32 %v1334
      %v1367 = vcvt.s32.f32 %v1335
      %v1368 = vcvt.s32.f32 %v1336
      %v1369 = vcvt.s32.f32 %v1337
      %v1370 = vcvt.s32.f32 %v1338
      %v1371 = vcvt.s32.f32 %v1339
      %v1372 = vcvt.s32.f32 %v1340
      %v1373 = vcvt.s32.f32 %v1341
      %v1374 = vcvt.s32.f32 %v1342
      %v1375 = vcvt.s32.f32 %v1343
      %v1376 = vcvt.s32.f32 %v1344
      %v1377 = vpack.c.bf16 %v1347, %v1345
      %v1378 = vpack.c.bf16 %v1348, %v1346
      %v1379 = vpack.c.bf16 %v1351, %v1349
      %v1380 = vpack.c.bf16 %v1352, %v1350
      %v1381 = vpack.c.bf16 %v1355, %v1353
      %v1382 = vpack.c.bf16 %v1356, %v1354
      %v1383 = vpack.c.bf16 %v1359, %v1357
      %v1384 = vpack.c.bf16 %v1360, %v1358
      %v1385 = vpack.c.bf16 %v1363, %v1361
      %v1386 = vpack.c.bf16 %v1364, %v1362
      %v1387 = vpack.c.bf16 %v1367, %v1365
      %v1388 = vpack.c.bf16 %v1368, %v1366
      %v1389 = vpack.c.bf16 %v1371, %v1369
      %v1390 = vpack.c.bf16 %v1372, %v1370
      %v1391 = vpack.c.bf16 %v1375, %v1373
      %v1392 = vpack.c.bf16 %v1376, %v1374
      %v1393 = vld [vmem:[%s688] sm:$0x3]
      %v1394 = vlaneseq
      %v1395 = vshrl.u32 %v1394, 7
      %v1396 = vsub.s32 0, %v1395
      %v1397 = vrot.slane %v1393, %v1396
      %v1398 = vlaneseq
      %v1399 = vshrl.u32 %v1398, 7
      %v1400 = vsub.s32 1, %v1399
      %v1401 = vrot.slane %v1393, %v1400
      %vm1402 = vcmp.eq.s32.totalorder %v1256, %v1397
      %vm1403 = vcmp.eq.s32.totalorder %v1256, %v1401
      %vm1404 = vcmp.eq.s32.totalorder %v1257, %v1397
      %vm1405 = vcmp.eq.s32.totalorder %v1257, %v1401
      %vm1406 = vcmp.eq.s32.totalorder %v1258, %v1397
      %vm1407 = vcmp.eq.s32.totalorder %v1258, %v1401
      %vm1408 = vcmp.eq.s32.totalorder %v1259, %v1397
      %vm1409 = vcmp.eq.s32.totalorder %v1259, %v1401
      %vm1410 = vcmp.eq.s32.totalorder %v1260, %v1397
      %vm1411 = vcmp.eq.s32.totalorder %v1260, %v1401
      %vm1412 = vcmp.eq.s32.totalorder %v1261, %v1397
      %vm1413 = vcmp.eq.s32.totalorder %v1261, %v1401
      %vm1414 = vcmp.eq.s32.totalorder %v1262, %v1397
      %vm1415 = vcmp.eq.s32.totalorder %v1262, %v1401
      %vm1416 = vcmp.eq.s32.totalorder %v1263, %v1397
      %vm1417 = vcmp.eq.s32.totalorder %v1263, %v1401
      %vm1418 = vcmp.eq.s32.totalorder %v1264, %v1397
      %vm1419 = vcmp.eq.s32.totalorder %v1264, %v1401
      %vm1420 = vcmp.eq.s32.totalorder %v1265, %v1397
      %vm1421 = vcmp.eq.s32.totalorder %v1265, %v1401
      %vm1422 = vcmp.eq.s32.totalorder %v1266, %v1397
      %vm1423 = vcmp.eq.s32.totalorder %v1266, %v1401
      %vm1424 = vcmp.eq.s32.totalorder %v1267, %v1397
      %vm1425 = vcmp.eq.s32.totalorder %v1267, %v1401
      %vm1426 = vcmp.eq.s32.totalorder %v1268, %v1397
      %vm1427 = vcmp.eq.s32.totalorder %v1268, %v1401
      %vm1428 = vcmp.eq.s32.totalorder %v1269, %v1397
      %vm1429 = vcmp.eq.s32.totalorder %v1269, %v1401
      %vm1430 = vcmp.eq.s32.totalorder %v1270, %v1397
      %vm1431 = vcmp.eq.s32.totalorder %v1270, %v1401
      %vm1432 = vcmp.eq.s32.totalorder %v1271, %v1397
      %vm1433 = vcmp.eq.s32.totalorder %v1271, %v1401
      %v1434 = vsel %vm1402, 1, 0
      %v1435 = vsel %vm1403, 1, 0
      %v1436 = vsel %vm1404, 1, 0
      %v1437 = vsel %vm1405, 1, 0
      %v1438 = vsel %vm1406, 1, 0
      %v1439 = vsel %vm1407, 1, 0
      %v1440 = vsel %vm1408, 1, 0
      %v1441 = vsel %vm1409, 1, 0
      %v1442 = vsel %vm1410, 1, 0
      %v1443 = vsel %vm1411, 1, 0
      %v1444 = vsel %vm1412, 1, 0
      %v1445 = vsel %vm1413, 1, 0
      %v1446 = vsel %vm1414, 1, 0
      %v1447 = vsel %vm1415, 1, 0
      %v1448 = vsel %vm1416, 1, 0
      %v1449 = vsel %vm1417, 1, 0
      %v1450 = vsel %vm1418, 1, 0
      %v1451 = vsel %vm1419, 1, 0
      %v1452 = vsel %vm1420, 1, 0
      %v1453 = vsel %vm1421, 1, 0
      %v1454 = vsel %vm1422, 1, 0
      %v1455 = vsel %vm1423, 1, 0
      %v1456 = vsel %vm1424, 1, 0
      %v1457 = vsel %vm1425, 1, 0
      %v1458 = vsel %vm1426, 1, 0
      %v1459 = vsel %vm1427, 1, 0
      %v1460 = vsel %vm1428, 1, 0
      %v1461 = vsel %vm1429, 1, 0
      %v1462 = vsel %vm1430, 1, 0
      %v1463 = vsel %vm1431, 1, 0
      %v1464 = vsel %vm1432, 1, 0
      %v1465 = vsel %vm1433, 1, 0
      %v1466 = vcvt.s32.f32 %v1434
      %v1467 = vcvt.s32.f32 %v1435
      %v1468 = vcvt.s32.f32 %v1436
      %v1469 = vcvt.s32.f32 %v1437
      %v1470 = vcvt.s32.f32 %v1438
      %v1471 = vcvt.s32.f32 %v1439
      %v1472 = vcvt.s32.f32 %v1440
      %v1473 = vcvt.s32.f32 %v1441
      %v1474 = vcvt.s32.f32 %v1442
      %v1475 = vcvt.s32.f32 %v1443
      %v1476 = vcvt.s32.f32 %v1444
      %v1477 = vcvt.s32.f32 %v1445
      %v1478 = vcvt.s32.f32 %v1446
      %v1479 = vcvt.s32.f32 %v1447
      %v1480 = vcvt.s32.f32 %v1448
      %v1481 = vcvt.s32.f32 %v1449
      %v1482 = vcvt.s32.f32 %v1450
      %v1483 = vcvt.s32.f32 %v1451
      %v1484 = vcvt.s32.f32 %v1452
      %v1485 = vcvt.s32.f32 %v1453
      %v1486 = vcvt.s32.f32 %v1454
      %v1487 = vcvt.s32.f32 %v1455
      %v1488 = vcvt.s32.f32 %v1456
      %v1489 = vcvt.s32.f32 %v1457
      %v1490 = vcvt.s32.f32 %v1458
      %v1491 = vcvt.s32.f32 %v1459
      %v1492 = vcvt.s32.f32 %v1460
      %v1493 = vcvt.s32.f32 %v1461
      %v1494 = vcvt.s32.f32 %v1462
      %v1495 = vcvt.s32.f32 %v1463
      %v1496 = vcvt.s32.f32 %v1464
      %v1497 = vcvt.s32.f32 %v1465
      %v1498 = vpack.c.bf16 %v1468, %v1466
      %v1499 = vpack.c.bf16 %v1469, %v1467
      %v1500 = vpack.c.bf16 %v1472, %v1470
      %v1501 = vpack.c.bf16 %v1473, %v1471
      %v1502 = vpack.c.bf16 %v1476, %v1474
      %v1503 = vpack.c.bf16 %v1477, %v1475
      %v1504 = vpack.c.bf16 %v1480, %v1478
      %v1505 = vpack.c.bf16 %v1481, %v1479
      %v1506 = vpack.c.bf16 %v1484, %v1482
      %v1507 = vpack.c.bf16 %v1485, %v1483
      %v1508 = vpack.c.bf16 %v1488, %v1486
      %v1509 = vpack.c.bf16 %v1489, %v1487
      %v1510 = vpack.c.bf16 %v1492, %v1490
      %v1511 = vpack.c.bf16 %v1493, %v1491
      %v1512 = vpack.c.bf16 %v1496, %v1494
      %v1513 = vpack.c.bf16 %v1497, %v1495
      %v1514 = vld [vmem:[#allocation3] sm:$0xf]
      %v1515 = vld [vmem:[#allocation3 + $0x4] sm:$0xf]
      %v1516 = vld [vmem:[#allocation3 + $0x8] sm:$0xf]
      %v1517 = vld [vmem:[#allocation3 + $0xc] sm:$0xf]
      %v1518 = vld [vmem:[#allocation3 + $0x10] sm:$0xf]
      %v1519 = vld [vmem:[#allocation3 + $0x14] sm:$0xf]
      %v1520 = vld [vmem:[#allocation3 + $0x18] sm:$0xf]
      %v1521 = vld [vmem:[#allocation3 + $0x1c] sm:$0xf]
      %v1522 = vld [vmem:[#allocation3 + $0x20] sm:$0xf]
      %v1523 = vld [vmem:[#allocation3 + $0x24] sm:$0xf]
      %v1524 = vld [vmem:[#allocation3 + $0x28] sm:$0xf]
      %v1525 = vld [vmem:[#allocation3 + $0x2c] sm:$0xf]
      %v1526 = vld [vmem:[#allocation3 + $0x30] sm:$0xf]
      %v1527 = vld [vmem:[#allocation3 + $0x34] sm:$0xf]
      %v1528 = vld [vmem:[#allocation3 + $0x38] sm:$0xf]
      %v1529 = vld [vmem:[#allocation3 + $0x3c] sm:$0xf]
      %v1530 = vld [vmem:[#allocation4] sm:$0xf]
      %v1531 = vld [vmem:[#allocation4 + $0x4] sm:$0xf]
      %v1532 = vld [vmem:[#allocation4 + $0x8] sm:$0xf]
      %v1533 = vld [vmem:[#allocation4 + $0xc] sm:$0xf]
      %v1534 = vld [vmem:[#allocation4 + $0x10] sm:$0xf]
      %v1535 = vld [vmem:[#allocation4 + $0x14] sm:$0xf]
      %v1536 = vld [vmem:[#allocation4 + $0x18] sm:$0xf]
      %v1537 = vld [vmem:[#allocation4 + $0x1c] sm:$0xf]
      %v1538 = vld [vmem:[#allocation4 + $0x20] sm:$0xf]
      %v1539 = vld [vmem:[#allocation4 + $0x24] sm:$0xf]
      %v1540 = vld [vmem:[#allocation4 + $0x28] sm:$0xf]
      %v1541 = vld [vmem:[#allocation4 + $0x2c] sm:$0xf]
      %v1542 = vld [vmem:[#allocation4 + $0x30] sm:$0xf]
      %v1543 = vld [vmem:[#allocation4 + $0x34] sm:$0xf]
      %v1544 = vld [vmem:[#allocation4 + $0x38] sm:$0xf]
      %v1545 = vld [vmem:[#allocation4 + $0x3c] sm:$0xf]
      %1546 = vxpose.xlu0.c.b16.start [1/8] %v1498, 128
      %1547 = vxpose.xlu0.c.b16.cont [2/8] %v1500, 128
      %1548 = vxpose.xlu0.c.b16.cont [3/8] %v1502, 128
      %1549 = vxpose.xlu0.c.b16.cont [4/8] %v1504, 128
      %1550 = vxpose.xlu0.c.b16.cont [5/8] %v1506, 128
      %1551 = vxpose.xlu0.c.b16.cont [6/8] %v1508, 128
      %1552 = vxpose.xlu0.c.b16.cont [7/8] %v1510, 128
      %1553 = vxpose.xlu0.c.b16.end [8/8] %v1512, 128
      %v1554 = vpop.trf.xlu0
      %v1555 = vpop.trf.xlu0
      %v1556 = vpop.trf.xlu0
      %v1557 = vpop.trf.xlu0
      %v1558 = vpop.trf.xlu0
      %v1559 = vpop.trf.xlu0
      %v1560 = vpop.trf.xlu0
      %v1561 = vpop.trf.xlu0
      %1562 = vxpose.xlu0.c.b16.start [1/8] %v1499, 128
      %1563 = vxpose.xlu0.c.b16.cont [2/8] %v1501, 128
      %1564 = vxpose.xlu0.c.b16.cont [3/8] %v1503, 128
      %1565 = vxpose.xlu0.c.b16.cont [4/8] %v1505, 128
      %1566 = vxpose.xlu0.c.b16.cont [5/8] %v1507, 128
      %1567 = vxpose.xlu0.c.b16.cont [6/8] %v1509, 128
      %1568 = vxpose.xlu0.c.b16.cont [7/8] %v1511, 128
      %1569 = vxpose.xlu0.c.b16.end [8/8] %v1513, 128
      %v1570 = vpop.trf.xlu0
      %v1571 = vpop.trf.xlu0
      %v1572 = vpop.trf.xlu0
      %v1573 = vpop.trf.xlu0
      %v1574 = vpop.trf.xlu0
      %v1575 = vpop.trf.xlu0
      %v1576 = vpop.trf.xlu0
      %v1577 = vpop.trf.xlu0
      %v1594 = vunpack.c.l.b16 %v1530
      %v1595 = vunpack.c.l.b16 %v1531
      %v1596 = vunpack.c.l.b16 %v1532
      %v1597 = vunpack.c.l.b16 %v1533
      %v1598 = vunpack.c.l.b16 %v1534
      %v1599 = vunpack.c.l.b16 %v1535
      %v1600 = vunpack.c.l.b16 %v1536
      %v1601 = vunpack.c.l.b16 %v1537
      %v1602 = vunpack.c.l.b16 %v1538
      %v1603 = vunpack.c.l.b16 %v1539
      %v1604 = vunpack.c.l.b16 %v1540
      %v1605 = vunpack.c.l.b16 %v1541
      %v1606 = vunpack.c.l.b16 %v1542
      %v1607 = vunpack.c.l.b16 %v1543
      %v1608 = vunpack.c.l.b16 %v1544
      %v1609 = vunpack.c.l.b16 %v1545
      %v1610 = vpack.c.b16 %v1595, %v1594
      %v1611 = vpack.c.b16 %v1597, %v1596
      %v1612 = vpack.c.b16 %v1599, %v1598
      %v1613 = vpack.c.b16 %v1601, %v1600
      %v1614 = vpack.c.b16 %v1603, %v1602
      %v1615 = vpack.c.b16 %v1605, %v1604
      %v1616 = vpack.c.b16 %v1607, %v1606
      %v1617 = vpack.c.b16 %v1609, %v1608
      %1626 = vmatprep.subr.bf16.mxu0 0
      %1627 = vmatpush1.bf16.msra.mxu0 %v1617
      %1628 = vmatprep.subr.bf16.mxu0 0
      %1629 = vmatpush1.bf16.msra.mxu0 %v1616
      %1630 = vmatprep.subr.bf16.mxu0 0
      %1631 = vmatpush1.bf16.msra.mxu0 %v1615
      %1632 = vmatprep.subr.bf16.mxu0 0
      %1633 = vmatpush1.bf16.msra.mxu0 %v1614
      %1634 = vmatprep.subr.bf16.mxu0 0
      %1635 = vmatpush1.bf16.msra.mxu0 %v1613
      %1636 = vmatprep.subr.bf16.mxu0 0
      %1637 = vmatpush1.bf16.msra.mxu0 %v1612
      %1638 = vmatprep.subr.bf16.mxu0 0
      %1639 = vmatpush1.bf16.msra.mxu0 %v1611
      %1640 = vmatprep.subr.bf16.mxu0 0
      %1641 = vmatpush1.bf16.msra.mxu0 %v1610
      %1642 = vmatprep.subr.bf16.mxu0 0
      %1643 = vmatpush2.bf16.msra.mxu0 0
      %1644 = vmatprep.subr.bf16.mxu0 0
      %1645 = vmatpush2.bf16.msra.mxu0 0
      %1646 = vmatprep.subr.bf16.mxu0 0
      %1647 = vmatpush2.bf16.msra.mxu0 0
      %1648 = vmatprep.subr.bf16.mxu0 0
      %1649 = vmatpush2.bf16.msra.mxu0 0
      %1650 = vmatprep.subr.bf16.mxu0 0
      %1651 = vmatpush2.bf16.msra.mxu0 0
      %1652 = vmatprep.subr.bf16.mxu0 0
      %1653 = vmatpush2.bf16.msra.mxu0 0
      %1654 = vmatprep.subr.bf16.mxu0 0
      %1655 = vmatpush2.bf16.msra.mxu0 0
      %1656 = vmatprep.subr.bf16.mxu0 0
      %1657 = vmatpush2.bf16.msra.mxu0 0
      %1658 = vmatprep.mubr.bf16.mxu0 0
      %1659 = vmatmul.mubr.bf16.gmra.mxu0 %v1554
      %v1660 = vpop.f32.mrf.mxu0
      %v1661 = vadd.f32 0.0, %v1660
      %v1662 = vpop.f32.mrf.mxu0
      %v1663 = vpop.f32.mrf.mxu0
      %v1664 = vadd.f32 0.0, %v1663
      %v1665 = vpop.f32.mrf.mxu0
      %1666 = vmatprep.mubr.bf16.mxu0 0
      %1667 = vmatmul.mubr.bf16.gmra.mxu0 %v1555
      %v1668 = vpop.f32.mrf.mxu0
      %v1669 = vadd.f32 0.0, %v1668
      %v1670 = vpop.f32.mrf.mxu0
      %v1671 = vpop.f32.mrf.mxu0
      %v1672 = vadd.f32 0.0, %v1671
      %v1673 = vpop.f32.mrf.mxu0
      %1674 = vmatprep.mubr.bf16.mxu0 0
      %1675 = vmatmul.mubr.bf16.gmra.mxu0 %v1556
      %v1676 = vpop.f32.mrf.mxu0
      %v1677 = vadd.f32 0.0, %v1676
      %v1678 = vpop.f32.mrf.mxu0
      %v1679 = vpop.f32.mrf.mxu0
      %v1680 = vadd.f32 0.0, %v1679
      %v1681 = vpop.f32.mrf.mxu0
      %1682 = vmatprep.mubr.bf16.mxu0 0
      %1683 = vmatmul.mubr.bf16.gmra.mxu0 %v1557
      %v1684 = vpop.f32.mrf.mxu0
      %v1685 = vadd.f32 0.0, %v1684
      %v1686 = vpop.f32.mrf.mxu0
      %v1687 = vpop.f32.mrf.mxu0
      %v1688 = vadd.f32 0.0, %v1687
      %v1689 = vpop.f32.mrf.mxu0
      %1690 = vmatprep.mubr.bf16.mxu0 0
      %1691 = vmatmul.mubr.bf16.gmra.mxu0 %v1558
      %v1692 = vpop.f32.mrf.mxu0
      %v1693 = vadd.f32 0.0, %v1692
      %v1694 = vpop.f32.mrf.mxu0
      %v1695 = vpop.f32.mrf.mxu0
      %v1696 = vadd.f32 0.0, %v1695
      %v1697 = vpop.f32.mrf.mxu0
      %1698 = vmatprep.mubr.bf16.mxu0 0
      %1699 = vmatmul.mubr.bf16.gmra.mxu0 %v1559
      %v1700 = vpop.f32.mrf.mxu0
      %v1701 = vadd.f32 0.0, %v1700
      %v1702 = vpop.f32.mrf.mxu0
      %v1703 = vpop.f32.mrf.mxu0
      %v1704 = vadd.f32 0.0, %v1703
      %v1705 = vpop.f32.mrf.mxu0
      %1706 = vmatprep.mubr.bf16.mxu0 0
      %1707 = vmatmul.mubr.bf16.gmra.mxu0 %v1560
      %v1708 = vpop.f32.mrf.mxu0
      %v1709 = vadd.f32 0.0, %v1708
      %v1710 = vpop.f32.mrf.mxu0
      %v1711 = vpop.f32.mrf.mxu0
      %v1712 = vadd.f32 0.0, %v1711
      %v1713 = vpop.f32.mrf.mxu0
      %1714 = vmatprep.mubr.bf16.mxu0 0
      %1715 = vmatmul.mubr.bf16.gmra.mxu0 %v1561
      %v1716 = vpop.f32.mrf.mxu0
      %v1717 = vadd.f32 0.0, %v1716
      %v1718 = vpop.f32.mrf.mxu0
      %v1719 = vpop.f32.mrf.mxu0
      %v1720 = vadd.f32 0.0, %v1719
      %v1721 = vpop.f32.mrf.mxu0
      %1722 = vmatprep.mubr.bf16.mxu0 0
      %1723 = vmatmul.mubr.bf16.gmra.mxu0 %v1570
      %v1724 = vpop.f32.mrf.mxu0
      %v1725 = vadd.f32 0.0, %v1724
      %v1726 = vpop.f32.mrf.mxu0
      %v1727 = vpop.f32.mrf.mxu0
      %v1728 = vadd.f32 0.0, %v1727
      %v1729 = vpop.f32.mrf.mxu0
      %1730 = vmatprep.mubr.bf16.mxu0 0
      %1731 = vmatmul.mubr.bf16.gmra.mxu0 %v1571
      %v1732 = vpop.f32.mrf.mxu0
      %v1733 = vadd.f32 0.0, %v1732
      %v1734 = vpop.f32.mrf.mxu0
      %v1735 = vpop.f32.mrf.mxu0
      %v1736 = vadd.f32 0.0, %v1735
      %v1737 = vpop.f32.mrf.mxu0
      %1738 = vmatprep.mubr.bf16.mxu0 0
      %1739 = vmatmul.mubr.bf16.gmra.mxu0 %v1572
      %v1740 = vpop.f32.mrf.mxu0
      %v1741 = vadd.f32 0.0, %v1740
      %v1742 = vpop.f32.mrf.mxu0
      %v1743 = vpop.f32.mrf.mxu0
      %v1744 = vadd.f32 0.0, %v1743
      %v1745 = vpop.f32.mrf.mxu0
      %1746 = vmatprep.mubr.bf16.mxu0 0
      %1747 = vmatmul.mubr.bf16.gmra.mxu0 %v1573
      %v1748 = vpop.f32.mrf.mxu0
      %v1749 = vadd.f32 0.0, %v1748
      %v1750 = vpop.f32.mrf.mxu0
      %v1751 = vpop.f32.mrf.mxu0
      %v1752 = vadd.f32 0.0, %v1751
      %v1753 = vpop.f32.mrf.mxu0
      %1754 = vmatprep.mubr.bf16.mxu0 0
      %1755 = vmatmul.mubr.bf16.gmra.mxu0 %v1574
      %v1756 = vpop.f32.mrf.mxu0
      %v1757 = vadd.f32 0.0, %v1756
      %v1758 = vpop.f32.mrf.mxu0
      %v1759 = vpop.f32.mrf.mxu0
      %v1760 = vadd.f32 0.0, %v1759
      %v1761 = vpop.f32.mrf.mxu0
      %1762 = vmatprep.mubr.bf16.mxu0 0
      %1763 = vmatmul.mubr.bf16.gmra.mxu0 %v1575
      %v1764 = vpop.f32.mrf.mxu0
      %v1765 = vadd.f32 0.0, %v1764
      %v1766 = vpop.f32.mrf.mxu0
      %v1767 = vpop.f32.mrf.mxu0
      %v1768 = vadd.f32 0.0, %v1767
      %v1769 = vpop.f32.mrf.mxu0
      %1770 = vmatprep.mubr.bf16.mxu0 0
      %1771 = vmatmul.mubr.bf16.gmra.mxu0 %v1576
      %v1772 = vpop.f32.mrf.mxu0
      %v1773 = vadd.f32 0.0, %v1772
      %v1774 = vpop.f32.mrf.mxu0
      %v1775 = vpop.f32.mrf.mxu0
      %v1776 = vadd.f32 0.0, %v1775
      %v1777 = vpop.f32.mrf.mxu0
      %1778 = vmatprep.mubr.bf16.mxu0 0
      %1779 = vmatmul.mubr.bf16.gmra.mxu0 %v1577
      %v1780 = vpop.f32.mrf.mxu0
      %v1781 = vadd.f32 0.0, %v1780
      %v1782 = vpop.f32.mrf.mxu0
      %v1783 = vpop.f32.mrf.mxu0
      %v1784 = vadd.f32 0.0, %v1783
      %v1785 = vpop.f32.mrf.mxu0
      %1786 = vdwg.mxu0
      %1787 = vxpose.xlu0.c.b16.start [1/8] %v1377, 128
      %1788 = vxpose.xlu0.c.b16.cont [2/8] %v1379, 128
      %1789 = vxpose.xlu0.c.b16.cont [3/8] %v1381, 128
      %1790 = vxpose.xlu0.c.b16.cont [4/8] %v1383, 128
      %1791 = vxpose.xlu0.c.b16.cont [5/8] %v1385, 128
      %1792 = vxpose.xlu0.c.b16.cont [6/8] %v1387, 128
      %1793 = vxpose.xlu0.c.b16.cont [7/8] %v1389, 128
      %1794 = vxpose.xlu0.c.b16.end [8/8] %v1391, 128
      %v1795 = vpop.trf.xlu0
      %v1796 = vpop.trf.xlu0
      %v1797 = vpop.trf.xlu0
      %v1798 = vpop.trf.xlu0
      %v1799 = vpop.trf.xlu0
      %v1800 = vpop.trf.xlu0
      %v1801 = vpop.trf.xlu0
      %v1802 = vpop.trf.xlu0
      %1803 = vxpose.xlu0.c.b16.start [1/8] %v1378, 128
      %1804 = vxpose.xlu0.c.b16.cont [2/8] %v1380, 128
      %1805 = vxpose.xlu0.c.b16.cont [3/8] %v1382, 128
      %1806 = vxpose.xlu0.c.b16.cont [4/8] %v1384, 128
      %1807 = vxpose.xlu0.c.b16.cont [5/8] %v1386, 128
      %1808 = vxpose.xlu0.c.b16.cont [6/8] %v1388, 128
      %1809 = vxpose.xlu0.c.b16.cont [7/8] %v1390, 128
      %1810 = vxpose.xlu0.c.b16.end [8/8] %v1392, 128
      %v1811 = vpop.trf.xlu0
      %v1812 = vpop.trf.xlu0
      %v1813 = vpop.trf.xlu0
      %v1814 = vpop.trf.xlu0
      %v1815 = vpop.trf.xlu0
      %v1816 = vpop.trf.xlu0
      %v1817 = vpop.trf.xlu0
      %v1818 = vpop.trf.xlu0
      %v1835 = vunpack.c.l.b16 %v1514
      %v1836 = vunpack.c.l.b16 %v1515
      %v1837 = vunpack.c.l.b16 %v1516
      %v1838 = vunpack.c.l.b16 %v1517
      %v1839 = vunpack.c.l.b16 %v1518
      %v1840 = vunpack.c.l.b16 %v1519
      %v1841 = vunpack.c.l.b16 %v1520
      %v1842 = vunpack.c.l.b16 %v1521
      %v1843 = vunpack.c.l.b16 %v1522
      %v1844 = vunpack.c.l.b16 %v1523
      %v1845 = vunpack.c.l.b16 %v1524
      %v1846 = vunpack.c.l.b16 %v1525
      %v1847 = vunpack.c.l.b16 %v1526
      %v1848 = vunpack.c.l.b16 %v1527
      %v1849 = vunpack.c.l.b16 %v1528
      %v1850 = vunpack.c.l.b16 %v1529
      %v1851 = vpack.c.b16 %v1836, %v1835
      %v1852 = vpack.c.b16 %v1838, %v1837
      %v1853 = vpack.c.b16 %v1840, %v1839
      %v1854 = vpack.c.b16 %v1842, %v1841
      %v1855 = vpack.c.b16 %v1844, %v1843
      %v1856 = vpack.c.b16 %v1846, %v1845
      %v1857 = vpack.c.b16 %v1848, %v1847
      %v1858 = vpack.c.b16 %v1850, %v1849
      %1867 = vmatprep.subr.bf16.mxu0 0
      %1868 = vmatpush1.bf16.msra.mxu0 %v1858
      %1869 = vmatprep.subr.bf16.mxu0 0
      %1870 = vmatpush1.bf16.msra.mxu0 %v1857
      %1871 = vmatprep.subr.bf16.mxu0 0
      %1872 = vmatpush1.bf16.msra.mxu0 %v1856
      %1873 = vmatprep.subr.bf16.mxu0 0
      %1874 = vmatpush1.bf16.msra.mxu0 %v1855
      %1875 = vmatprep.subr.bf16.mxu0 0
      %1876 = vmatpush1.bf16.msra.mxu0 %v1854
      %1877 = vmatprep.subr.bf16.mxu0 0
      %1878 = vmatpush1.bf16.msra.mxu0 %v1853
      %1879 = vmatprep.subr.bf16.mxu0 0
      %1880 = vmatpush1.bf16.msra.mxu0 %v1852
      %1881 = vmatprep.subr.bf16.mxu0 0
      %1882 = vmatpush1.bf16.msra.mxu0 %v1851
      %1883 = vmatprep.subr.bf16.mxu0 0
      %1884 = vmatpush2.bf16.msra.mxu0 0
      %1885 = vmatprep.subr.bf16.mxu0 0
      %1886 = vmatpush2.bf16.msra.mxu0 0
      %1887 = vmatprep.subr.bf16.mxu0 0
      %1888 = vmatpush2.bf16.msra.mxu0 0
      %1889 = vmatprep.subr.bf16.mxu0 0
      %1890 = vmatpush2.bf16.msra.mxu0 0
      %1891 = vmatprep.subr.bf16.mxu0 0
      %1892 = vmatpush2.bf16.msra.mxu0 0
      %1893 = vmatprep.subr.bf16.mxu0 0
      %1894 = vmatpush2.bf16.msra.mxu0 0
      %1895 = vmatprep.subr.bf16.mxu0 0
      %1896 = vmatpush2.bf16.msra.mxu0 0
      %1897 = vmatprep.subr.bf16.mxu0 0
      %1898 = vmatpush2.bf16.msra.mxu0 0
      %1899 = vmatprep.mubr.bf16.mxu0 0
      %1900 = vmatmul.mubr.bf16.gmra.mxu0 %v1795
      %v1901 = vpop.f32.mrf.mxu0
      %v1902 = vadd.f32 %v1661, %v1901
      %v1903 = vpop.f32.mrf.mxu0
      %v1904 = vpop.f32.mrf.mxu0
      %v1905 = vadd.f32 %v1664, %v1904
      %v1906 = vpop.f32.mrf.mxu0
      %1907 = vmatprep.mubr.bf16.mxu0 0
      %1908 = vmatmul.mubr.bf16.gmra.mxu0 %v1796
      %v1909 = vpop.f32.mrf.mxu0
      %v1910 = vadd.f32 %v1669, %v1909
      %v1911 = vpop.f32.mrf.mxu0
      %v1912 = vpop.f32.mrf.mxu0
      %v1913 = vadd.f32 %v1672, %v1912
      %v1914 = vpop.f32.mrf.mxu0
      %1915 = vmatprep.mubr.bf16.mxu0 0
      %1916 = vmatmul.mubr.bf16.gmra.mxu0 %v1797
      %v1917 = vpop.f32.mrf.mxu0
      %v1918 = vadd.f32 %v1677, %v1917
      %v1919 = vpop.f32.mrf.mxu0
      %v1920 = vpop.f32.mrf.mxu0
      %v1921 = vadd.f32 %v1680, %v1920
      %v1922 = vpop.f32.mrf.mxu0
      %1923 = vmatprep.mubr.bf16.mxu0 0
      %1924 = vmatmul.mubr.bf16.gmra.mxu0 %v1798
      %v1925 = vpop.f32.mrf.mxu0
      %v1926 = vadd.f32 %v1685, %v1925
      %v1927 = vpop.f32.mrf.mxu0
      %v1928 = vpop.f32.mrf.mxu0
      %v1929 = vadd.f32 %v1688, %v1928
      %v1930 = vpop.f32.mrf.mxu0
      %1931 = vmatprep.mubr.bf16.mxu0 0
      %1932 = vmatmul.mubr.bf16.gmra.mxu0 %v1799
      %v1933 = vpop.f32.mrf.mxu0
      %v1934 = vadd.f32 %v1693, %v1933
      %v1935 = vpop.f32.mrf.mxu0
      %v1936 = vpop.f32.mrf.mxu0
      %v1937 = vadd.f32 %v1696, %v1936
      %v1938 = vpop.f32.mrf.mxu0
      %1939 = vmatprep.mubr.bf16.mxu0 0
      %1940 = vmatmul.mubr.bf16.gmra.mxu0 %v1800
      %v1941 = vpop.f32.mrf.mxu0
      %v1942 = vadd.f32 %v1701, %v1941
      %v1943 = vpop.f32.mrf.mxu0
      %v1944 = vpop.f32.mrf.mxu0
      %v1945 = vadd.f32 %v1704, %v1944
      %v1946 = vpop.f32.mrf.mxu0
      %1947 = vmatprep.mubr.bf16.mxu0 0
      %1948 = vmatmul.mubr.bf16.gmra.mxu0 %v1801
      %v1949 = vpop.f32.mrf.mxu0
      %v1950 = vadd.f32 %v1709, %v1949
      %v1951 = vpop.f32.mrf.mxu0
      %v1952 = vpop.f32.mrf.mxu0
      %v1953 = vadd.f32 %v1712, %v1952
      %v1954 = vpop.f32.mrf.mxu0
      %1955 = vmatprep.mubr.bf16.mxu0 0
      %1956 = vmatmul.mubr.bf16.gmra.mxu0 %v1802
      %v1957 = vpop.f32.mrf.mxu0
      %v1958 = vadd.f32 %v1717, %v1957
      %v1959 = vpop.f32.mrf.mxu0
      %v1960 = vpop.f32.mrf.mxu0
      %v1961 = vadd.f32 %v1720, %v1960
      %v1962 = vpop.f32.mrf.mxu0
      %1963 = vmatprep.mubr.bf16.mxu0 0
      %1964 = vmatmul.mubr.bf16.gmra.mxu0 %v1811
      %v1965 = vpop.f32.mrf.mxu0
      %v1966 = vadd.f32 %v1725, %v1965
      %v1967 = vpop.f32.mrf.mxu0
      %v1968 = vpop.f32.mrf.mxu0
      %v1969 = vadd.f32 %v1728, %v1968
      %v1970 = vpop.f32.mrf.mxu0
      %1971 = vmatprep.mubr.bf16.mxu0 0
      %1972 = vmatmul.mubr.bf16.gmra.mxu0 %v1812
      %v1973 = vpop.f32.mrf.mxu0
      %v1974 = vadd.f32 %v1733, %v1973
      %v1975 = vpop.f32.mrf.mxu0
      %v1976 = vpop.f32.mrf.mxu0
      %v1977 = vadd.f32 %v1736, %v1976
      %v1978 = vpop.f32.mrf.mxu0
      %1979 = vmatprep.mubr.bf16.mxu0 0
      %1980 = vmatmul.mubr.bf16.gmra.mxu0 %v1813
      %v1981 = vpop.f32.mrf.mxu0
      %v1982 = vadd.f32 %v1741, %v1981
      %v1983 = vpop.f32.mrf.mxu0
      %v1984 = vpop.f32.mrf.mxu0
      %v1985 = vadd.f32 %v1744, %v1984
      %v1986 = vpop.f32.mrf.mxu0
      %1987 = vmatprep.mubr.bf16.mxu0 0
      %1988 = vmatmul.mubr.bf16.gmra.mxu0 %v1814
      %v1989 = vpop.f32.mrf.mxu0
      %v1990 = vadd.f32 %v1749, %v1989
      %v1991 = vpop.f32.mrf.mxu0
      %v1992 = vpop.f32.mrf.mxu0
      %v1993 = vadd.f32 %v1752, %v1992
      %v1994 = vpop.f32.mrf.mxu0
      %1995 = vmatprep.mubr.bf16.mxu0 0
      %1996 = vmatmul.mubr.bf16.gmra.mxu0 %v1815
      %v1997 = vpop.f32.mrf.mxu0
      %v1998 = vadd.f32 %v1757, %v1997
      %v1999 = vpop.f32.mrf.mxu0
      %v2000 = vpop.f32.mrf.mxu0
      %v2001 = vadd.f32 %v1760, %v2000
      %v2002 = vpop.f32.mrf.mxu0
      %2003 = vmatprep.mubr.bf16.mxu0 0
      %2004 = vmatmul.mubr.bf16.gmra.mxu0 %v1816
      %v2005 = vpop.f32.mrf.mxu0
      %v2006 = vadd.f32 %v1765, %v2005
      %v2007 = vpop.f32.mrf.mxu0
      %v2008 = vpop.f32.mrf.mxu0
      %v2009 = vadd.f32 %v1768, %v2008
      %v2010 = vpop.f32.mrf.mxu0
      %2011 = vmatprep.mubr.bf16.mxu0 0
      %2012 = vmatmul.mubr.bf16.gmra.mxu0 %v1817
      %v2013 = vpop.f32.mrf.mxu0
      %v2014 = vadd.f32 %v1773, %v2013
      %v2015 = vpop.f32.mrf.mxu0
      %v2016 = vpop.f32.mrf.mxu0
      %v2017 = vadd.f32 %v1776, %v2016
      %v2018 = vpop.f32.mrf.mxu0
      %2019 = vmatprep.mubr.bf16.mxu0 0
      %2020 = vmatmul.mubr.bf16.gmra.mxu0 %v1818
      %v2021 = vpop.f32.mrf.mxu0
      %v2022 = vadd.f32 %v1781, %v2021
      %v2023 = vpop.f32.mrf.mxu0
      %v2024 = vpop.f32.mrf.mxu0
      %v2025 = vadd.f32 %v1784, %v2024
      %v2026 = vpop.f32.mrf.mxu0
      %2027 = vdwg.mxu0
      %v2028 = vld [vmem:[%s5] sm:$0x1]
      %v2030 = vlaneseq
      %v2031 = vshrl.u32 %v2030, 7
      %v2032 = vsub.s32 0, %v2031
      %v2033 = vrot.slane %v2028, %v2032
      %v2035 = vadd.f32 %v1902, %v2033
      %v2036 = vadd.f32 %v1905, %v2033
      %v2037 = vadd.f32 %v1910, %v2033
      %v2038 = vadd.f32 %v1913, %v2033
      %v2039 = vadd.f32 %v1918, %v2033
      %v2040 = vadd.f32 %v1921, %v2033
      %v2041 = vadd.f32 %v1926, %v2033
      %v2042 = vadd.f32 %v1929, %v2033
      %v2043 = vadd.f32 %v1934, %v2033
      %v2044 = vadd.f32 %v1937, %v2033
      %v2045 = vadd.f32 %v1942, %v2033
      %v2046 = vadd.f32 %v1945, %v2033
      %v2047 = vadd.f32 %v1950, %v2033
      %v2048 = vadd.f32 %v1953, %v2033
      %v2049 = vadd.f32 %v1958, %v2033
      %v2050 = vadd.f32 %v1961, %v2033
      %v2051 = vadd.f32 %v1966, %v2033
      %v2052 = vadd.f32 %v1969, %v2033
      %v2053 = vadd.f32 %v1974, %v2033
      %v2054 = vadd.f32 %v1977, %v2033
      %v2055 = vadd.f32 %v1982, %v2033
      %v2056 = vadd.f32 %v1985, %v2033
      %v2057 = vadd.f32 %v1990, %v2033
      %v2058 = vadd.f32 %v1993, %v2033
      %v2059 = vadd.f32 %v1998, %v2033
      %v2060 = vadd.f32 %v2001, %v2033
      %v2061 = vadd.f32 %v2006, %v2033
      %v2062 = vadd.f32 %v2009, %v2033
      %v2063 = vadd.f32 %v2014, %v2033
      %v2064 = vadd.f32 %v2017, %v2033
      %v2065 = vadd.f32 %v2022, %v2033
      %v2066 = vadd.f32 %v2025, %v2033
      %v2067 = vpack.c.bf16 %v1224, %v1223
      %v2068 = vpack.c.bf16 %v1226, %v1225
      %v2069 = vpack.c.bf16 %v1228, %v1227
      %v2070 = vpack.c.bf16 %v1230, %v1229
      %v2071 = vpack.c.bf16 %v1232, %v1231
      %v2072 = vpack.c.bf16 %v1234, %v1233
      %v2073 = vpack.c.bf16 %v1236, %v1235
      %v2074 = vpack.c.bf16 %v1238, %v1237
      %v2075 = vpack.c.bf16 %v1240, %v1239
      %v2076 = vpack.c.bf16 %v1242, %v1241
      %v2077 = vpack.c.bf16 %v1244, %v1243
      %v2078 = vpack.c.bf16 %v1246, %v1245
      %v2079 = vpack.c.bf16 %v1248, %v1247
      %v2080 = vpack.c.bf16 %v1250, %v1249
      %v2081 = vpack.c.bf16 %v1252, %v1251
      %v2082 = vpack.c.bf16 %v1254, %v1253
      %v2083 = vld [vmem:[%s4 + $0x80] sm:$0xf]
      %v2084 = vld [vmem:[%s4 + $0x84] sm:$0xf]
      %v2085 = vld [vmem:[%s4 + $0x88] sm:$0xf]
      %v2086 = vld [vmem:[%s4 + $0x8c] sm:$0xf]
      %v2087 = vld [vmem:[%s4 + $0x90] sm:$0xf]
      %v2088 = vld [vmem:[%s4 + $0x94] sm:$0xf]
      %v2089 = vld [vmem:[%s4 + $0x98] sm:$0xf]
      %v2090 = vld [vmem:[%s4 + $0x9c] sm:$0xf]
      %v2091 = vld [vmem:[%s4 + $0xa0] sm:$0xf]
      %v2092 = vld [vmem:[%s4 + $0xa4] sm:$0xf]
      %v2093 = vld [vmem:[%s4 + $0xa8] sm:$0xf]
      %v2094 = vld [vmem:[%s4 + $0xac] sm:$0xf]
      %v2095 = vld [vmem:[%s4 + $0xb0] sm:$0xf]
      %v2096 = vld [vmem:[%s4 + $0xb4] sm:$0xf]
      %v2097 = vld [vmem:[%s4 + $0xb8] sm:$0xf]
      %v2098 = vld [vmem:[%s4 + $0xbc] sm:$0xf]
      %v2115 = vunpack.c.l.b16 %v2083
      %v2116 = vunpack.c.l.b16 %v2084
      %v2117 = vunpack.c.l.b16 %v2085
      %v2118 = vunpack.c.l.b16 %v2086
      %v2119 = vunpack.c.l.b16 %v2087
      %v2120 = vunpack.c.l.b16 %v2088
      %v2121 = vunpack.c.l.b16 %v2089
      %v2122 = vunpack.c.l.b16 %v2090
      %v2123 = vunpack.c.l.b16 %v2091
      %v2124 = vunpack.c.l.b16 %v2092
      %v2125 = vunpack.c.l.b16 %v2093
      %v2126 = vunpack.c.l.b16 %v2094
      %v2127 = vunpack.c.l.b16 %v2095
      %v2128 = vunpack.c.l.b16 %v2096
      %v2129 = vunpack.c.l.b16 %v2097
      %v2130 = vunpack.c.l.b16 %v2098
      %v2131 = vpack.c.b16 %v2116, %v2115
      %v2132 = vpack.c.b16 %v2118, %v2117
      %v2133 = vpack.c.b16 %v2120, %v2119
      %v2134 = vpack.c.b16 %v2122, %v2121
      %v2135 = vpack.c.b16 %v2124, %v2123
      %v2136 = vpack.c.b16 %v2126, %v2125
      %v2137 = vpack.c.b16 %v2128, %v2127
      %v2138 = vpack.c.b16 %v2130, %v2129
      %2147 = vmatprep.subr.bf16.mxu0 0
      %2148 = vmatpush1.bf16.msra.mxu0 %v2138
      %2149 = vmatprep.subr.bf16.mxu0 0
      %2150 = vmatpush1.bf16.msra.mxu0 %v2137
      %2151 = vmatprep.subr.bf16.mxu0 0
      %2152 = vmatpush1.bf16.msra.mxu0 %v2136
      %2153 = vmatprep.subr.bf16.mxu0 0
      %2154 = vmatpush1.bf16.msra.mxu0 %v2135
      %2155 = vmatprep.subr.bf16.mxu0 0
      %2156 = vmatpush1.bf16.msra.mxu0 %v2134
      %2157 = vmatprep.subr.bf16.mxu0 0
      %2158 = vmatpush1.bf16.msra.mxu0 %v2133
      %2159 = vmatprep.subr.bf16.mxu0 0
      %2160 = vmatpush1.bf16.msra.mxu0 %v2132
      %2161 = vmatprep.subr.bf16.mxu0 0
      %2162 = vmatpush1.bf16.msra.mxu0 %v2131
      %2163 = vmatprep.subr.bf16.mxu0 0
      %2164 = vmatpush2.bf16.msra.mxu0 0
      %2165 = vmatprep.subr.bf16.mxu0 0
      %2166 = vmatpush2.bf16.msra.mxu0 0
      %2167 = vmatprep.subr.bf16.mxu0 0
      %2168 = vmatpush2.bf16.msra.mxu0 0
      %2169 = vmatprep.subr.bf16.mxu0 0
      %2170 = vmatpush2.bf16.msra.mxu0 0
      %2171 = vmatprep.subr.bf16.mxu0 0
      %2172 = vmatpush2.bf16.msra.mxu0 0
      %2173 = vmatprep.subr.bf16.mxu0 0
      %2174 = vmatpush2.bf16.msra.mxu0 0
      %2175 = vmatprep.subr.bf16.mxu0 0
      %2176 = vmatpush2.bf16.msra.mxu0 0
      %2177 = vmatprep.subr.bf16.mxu0 0
      %2178 = vmatpush2.bf16.msra.mxu0 0
      %2179 = vmatprep.mubr.bf16.mxu0 0
      %2180 = vmatmul.mubr.bf16.gmra.mxu0 %v2067
      %v2181 = vpop.f32.mrf.mxu0
      %v2182 = vadd.f32 0.0, %v2181
      %v2183 = vpop.f32.mrf.mxu0
      %v2184 = vpop.f32.mrf.mxu0
      %v2185 = vadd.f32 0.0, %v2184
      %v2186 = vpop.f32.mrf.mxu0
      %2187 = vmatprep.mubr.bf16.mxu0 0
      %2188 = vmatmul.mubr.bf16.gmra.mxu0 %v2068
      %v2189 = vpop.f32.mrf.mxu0
      %v2190 = vadd.f32 0.0, %v2189
      %v2191 = vpop.f32.mrf.mxu0
      %v2192 = vpop.f32.mrf.mxu0
      %v2193 = vadd.f32 0.0, %v2192
      %v2194 = vpop.f32.mrf.mxu0
      %2195 = vmatprep.mubr.bf16.mxu0 0
      %2196 = vmatmul.mubr.bf16.gmra.mxu0 %v2069
      %v2197 = vpop.f32.mrf.mxu0
      %v2198 = vadd.f32 0.0, %v2197
      %v2199 = vpop.f32.mrf.mxu0
      %v2200 = vpop.f32.mrf.mxu0
      %v2201 = vadd.f32 0.0, %v2200
      %v2202 = vpop.f32.mrf.mxu0
      %2203 = vmatprep.mubr.bf16.mxu0 0
      %2204 = vmatmul.mubr.bf16.gmra.mxu0 %v2070
      %v2205 = vpop.f32.mrf.mxu0
      %v2206 = vadd.f32 0.0, %v2205
      %v2207 = vpop.f32.mrf.mxu0
      %v2208 = vpop.f32.mrf.mxu0
      %v2209 = vadd.f32 0.0, %v2208
      %v2210 = vpop.f32.mrf.mxu0
      %2211 = vmatprep.mubr.bf16.mxu0 0
      %2212 = vmatmul.mubr.bf16.gmra.mxu0 %v2071
      %v2213 = vpop.f32.mrf.mxu0
      %v2214 = vadd.f32 0.0, %v2213
      %v2215 = vpop.f32.mrf.mxu0
      %v2216 = vpop.f32.mrf.mxu0
      %v2217 = vadd.f32 0.0, %v2216
      %v2218 = vpop.f32.mrf.mxu0
      %2219 = vmatprep.mubr.bf16.mxu0 0
      %2220 = vmatmul.mubr.bf16.gmra.mxu0 %v2072
      %v2221 = vpop.f32.mrf.mxu0
      %v2222 = vadd.f32 0.0, %v2221
      %v2223 = vpop.f32.mrf.mxu0
      %v2224 = vpop.f32.mrf.mxu0
      %v2225 = vadd.f32 0.0, %v2224
      %v2226 = vpop.f32.mrf.mxu0
      %2227 = vmatprep.mubr.bf16.mxu0 0
      %2228 = vmatmul.mubr.bf16.gmra.mxu0 %v2073
      %v2229 = vpop.f32.mrf.mxu0
      %v2230 = vadd.f32 0.0, %v2229
      %v2231 = vpop.f32.mrf.mxu0
      %v2232 = vpop.f32.mrf.mxu0
      %v2233 = vadd.f32 0.0, %v2232
      %v2234 = vpop.f32.mrf.mxu0
      %2235 = vmatprep.mubr.bf16.mxu0 0
      %2236 = vmatmul.mubr.bf16.gmra.mxu0 %v2074
      %v2237 = vpop.f32.mrf.mxu0
      %v2238 = vadd.f32 0.0, %v2237
      %v2239 = vpop.f32.mrf.mxu0
      %v2240 = vpop.f32.mrf.mxu0
      %v2241 = vadd.f32 0.0, %v2240
      %v2242 = vpop.f32.mrf.mxu0
      %2243 = vmatprep.mubr.bf16.mxu0 0
      %2244 = vmatmul.mubr.bf16.gmra.mxu0 %v2075
      %v2245 = vpop.f32.mrf.mxu0
      %v2246 = vadd.f32 0.0, %v2245
      %v2247 = vpop.f32.mrf.mxu0
      %v2248 = vpop.f32.mrf.mxu0
      %v2249 = vadd.f32 0.0, %v2248
      %v2250 = vpop.f32.mrf.mxu0
      %2251 = vmatprep.mubr.bf16.mxu0 0
      %2252 = vmatmul.mubr.bf16.gmra.mxu0 %v2076
      %v2253 = vpop.f32.mrf.mxu0
      %v2254 = vadd.f32 0.0, %v2253
      %v2255 = vpop.f32.mrf.mxu0
      %v2256 = vpop.f32.mrf.mxu0
      %v2257 = vadd.f32 0.0, %v2256
      %v2258 = vpop.f32.mrf.mxu0
      %2259 = vmatprep.mubr.bf16.mxu0 0
      %2260 = vmatmul.mubr.bf16.gmra.mxu0 %v2077
      %v2261 = vpop.f32.mrf.mxu0
      %v2262 = vadd.f32 0.0, %v2261
      %v2263 = vpop.f32.mrf.mxu0
      %v2264 = vpop.f32.mrf.mxu0
      %v2265 = vadd.f32 0.0, %v2264
      %v2266 = vpop.f32.mrf.mxu0
      %2267 = vmatprep.mubr.bf16.mxu0 0
      %2268 = vmatmul.mubr.bf16.gmra.mxu0 %v2078
      %v2269 = vpop.f32.mrf.mxu0
      %v2270 = vadd.f32 0.0, %v2269
      %v2271 = vpop.f32.mrf.mxu0
      %v2272 = vpop.f32.mrf.mxu0
      %v2273 = vadd.f32 0.0, %v2272
      %v2274 = vpop.f32.mrf.mxu0
      %2275 = vmatprep.mubr.bf16.mxu0 0
      %2276 = vmatmul.mubr.bf16.gmra.mxu0 %v2079
      %v2277 = vpop.f32.mrf.mxu0
      %v2278 = vadd.f32 0.0, %v2277
      %v2279 = vpop.f32.mrf.mxu0
      %v2280 = vpop.f32.mrf.mxu0
      %v2281 = vadd.f32 0.0, %v2280
      %v2282 = vpop.f32.mrf.mxu0
      %2283 = vmatprep.mubr.bf16.mxu0 0
      %2284 = vmatmul.mubr.bf16.gmra.mxu0 %v2080
      %v2285 = vpop.f32.mrf.mxu0
      %v2286 = vadd.f32 0.0, %v2285
      %v2287 = vpop.f32.mrf.mxu0
      %v2288 = vpop.f32.mrf.mxu0
      %v2289 = vadd.f32 0.0, %v2288
      %v2290 = vpop.f32.mrf.mxu0
      %2291 = vmatprep.mubr.bf16.mxu0 0
      %2292 = vmatmul.mubr.bf16.gmra.mxu0 %v2081
      %v2293 = vpop.f32.mrf.mxu0
      %v2294 = vadd.f32 0.0, %v2293
      %v2295 = vpop.f32.mrf.mxu0
      %v2296 = vpop.f32.mrf.mxu0
      %v2297 = vadd.f32 0.0, %v2296
      %v2298 = vpop.f32.mrf.mxu0
      %2299 = vmatprep.mubr.bf16.mxu0 0
      %2300 = vmatmul.mubr.bf16.gmra.mxu0 %v2082
      %v2301 = vpop.f32.mrf.mxu0
      %v2302 = vadd.f32 0.0, %v2301
      %v2303 = vpop.f32.mrf.mxu0
      %v2304 = vpop.f32.mrf.mxu0
      %v2305 = vadd.f32 0.0, %v2304
      %v2306 = vpop.f32.mrf.mxu0
      %2307 = vdwg.mxu0
      %v2308 = vadd.f32 %v2035, %v2182
      %v2309 = vadd.f32 %v2036, %v2185
      %v2310 = vadd.f32 %v2037, %v2190
      %v2311 = vadd.f32 %v2038, %v2193
      %v2312 = vadd.f32 %v2039, %v2198
      %v2313 = vadd.f32 %v2040, %v2201
      %v2314 = vadd.f32 %v2041, %v2206
      %v2315 = vadd.f32 %v2042, %v2209
      %v2316 = vadd.f32 %v2043, %v2214
      %v2317 = vadd.f32 %v2044, %v2217
      %v2318 = vadd.f32 %v2045, %v2222
      %v2319 = vadd.f32 %v2046, %v2225
      %v2320 = vadd.f32 %v2047, %v2230
      %v2321 = vadd.f32 %v2048, %v2233
      %v2322 = vadd.f32 %v2049, %v2238
      %v2323 = vadd.f32 %v2050, %v2241
      %v2324 = vadd.f32 %v2051, %v2246
      %v2325 = vadd.f32 %v2052, %v2249
      %v2326 = vadd.f32 %v2053, %v2254
      %v2327 = vadd.f32 %v2054, %v2257
      %v2328 = vadd.f32 %v2055, %v2262
      %v2329 = vadd.f32 %v2056, %v2265
      %v2330 = vadd.f32 %v2057, %v2270
      %v2331 = vadd.f32 %v2058, %v2273
      %v2332 = vadd.f32 %v2059, %v2278
      %v2333 = vadd.f32 %v2060, %v2281
      %v2334 = vadd.f32 %v2061, %v2286
      %v2335 = vadd.f32 %v2062, %v2289
      %v2336 = vadd.f32 %v2063, %v2294
      %v2337 = vadd.f32 %v2064, %v2297
      %v2338 = vadd.f32 %v2065, %v2302
      %v2339 = vadd.f32 %v2066, %v2305
      %v2340 = vmax.f32 %v2308, 0.0
      %v2341 = vmax.f32 %v2309, 0.0
      %v2342 = vmax.f32 %v2310, 0.0
      %v2343 = vmax.f32 %v2311, 0.0
      %v2344 = vmax.f32 %v2312, 0.0
      %v2345 = vmax.f32 %v2313, 0.0
      %v2346 = vmax.f32 %v2314, 0.0
      %v2347 = vmax.f32 %v2315, 0.0
      %v2348 = vmax.f32 %v2316, 0.0
      %v2349 = vmax.f32 %v2317, 0.0
      %v2350 = vmax.f32 %v2318, 0.0
      %v2351 = vmax.f32 %v2319, 0.0
      %v2352 = vmax.f32 %v2320, 0.0
      %v2353 = vmax.f32 %v2321, 0.0
      %v2354 = vmax.f32 %v2322, 0.0
      %v2355 = vmax.f32 %v2323, 0.0
      %v2356 = vmax.f32 %v2324, 0.0
      %v2357 = vmax.f32 %v2325, 0.0
      %v2358 = vmax.f32 %v2326, 0.0
      %v2359 = vmax.f32 %v2327, 0.0
      %v2360 = vmax.f32 %v2328, 0.0
      %v2361 = vmax.f32 %v2329, 0.0
      %v2362 = vmax.f32 %v2330, 0.0
      %v2363 = vmax.f32 %v2331, 0.0
      %v2364 = vmax.f32 %v2332, 0.0
      %v2365 = vmax.f32 %v2333, 0.0
      %v2366 = vmax.f32 %v2334, 0.0
      %v2367 = vmax.f32 %v2335, 0.0
      %v2368 = vmax.f32 %v2336, 0.0
      %v2369 = vmax.f32 %v2337, 0.0
      %v2370 = vmax.f32 %v2338, 0.0
      %v2371 = vmax.f32 %v2339, 0.0
      %v2372 = vpack.c.bf16 %v2341, %v2340
      %v2373 = vpack.c.bf16 %v2343, %v2342
      %v2374 = vpack.c.bf16 %v2345, %v2344
      %v2375 = vpack.c.bf16 %v2347, %v2346
      %v2376 = vpack.c.bf16 %v2349, %v2348
      %v2377 = vpack.c.bf16 %v2351, %v2350
      %v2378 = vpack.c.bf16 %v2353, %v2352
      %v2379 = vpack.c.bf16 %v2355, %v2354
      %v2380 = vpack.c.bf16 %v2357, %v2356
      %v2381 = vpack.c.bf16 %v2359, %v2358
      %v2382 = vpack.c.bf16 %v2361, %v2360
      %v2383 = vpack.c.bf16 %v2363, %v2362
      %v2384 = vpack.c.bf16 %v2365, %v2364
      %v2385 = vpack.c.bf16 %v2367, %v2366
      %v2386 = vpack.c.bf16 %v2369, %v2368
      %v2387 = vpack.c.bf16 %v2371, %v2370
      %v2388 = vld [vmem:[%s6] sm:$0xf]
      %v2389 = vld [vmem:[%s6 + $0x4] sm:$0xf]
      %v2390 = vld [vmem:[%s6 + $0x8] sm:$0xf]
      %v2391 = vld [vmem:[%s6 + $0xc] sm:$0xf]
      %v2392 = vld [vmem:[%s6 + $0x10] sm:$0xf]
      %v2393 = vld [vmem:[%s6 + $0x14] sm:$0xf]
      %v2394 = vld [vmem:[%s6 + $0x18] sm:$0xf]
      %v2395 = vld [vmem:[%s6 + $0x1c] sm:$0xf]
      %v2396 = vld [vmem:[%s6 + $0x20] sm:$0xf]
      %v2397 = vld [vmem:[%s6 + $0x24] sm:$0xf]
      %v2398 = vld [vmem:[%s6 + $0x28] sm:$0xf]
      %v2399 = vld [vmem:[%s6 + $0x2c] sm:$0xf]
      %v2400 = vld [vmem:[%s6 + $0x30] sm:$0xf]
      %v2401 = vld [vmem:[%s6 + $0x34] sm:$0xf]
      %v2402 = vld [vmem:[%s6 + $0x38] sm:$0xf]
      %v2403 = vld [vmem:[%s6 + $0x3c] sm:$0xf]
      %v2404 = vld [vmem:[%s7] sm:$0x1]
      %v2406 = vlaneseq
      %v2407 = vshrl.u32 %v2406, 7
      %v2408 = vsub.s32 0, %v2407
      %v2409 = vrot.slane %v2404, %v2408
      %v2427 = vunpack.c.l.b16 %v2388
      %v2428 = vunpack.c.l.b16 %v2389
      %v2429 = vunpack.c.l.b16 %v2390
      %v2430 = vunpack.c.l.b16 %v2391
      %v2431 = vunpack.c.l.b16 %v2392
      %v2432 = vunpack.c.l.b16 %v2393
      %v2433 = vunpack.c.l.b16 %v2394
      %v2434 = vunpack.c.l.b16 %v2395
      %v2435 = vunpack.c.l.b16 %v2396
      %v2436 = vunpack.c.l.b16 %v2397
      %v2437 = vunpack.c.l.b16 %v2398
      %v2438 = vunpack.c.l.b16 %v2399
      %v2439 = vunpack.c.l.b16 %v2400
      %v2440 = vunpack.c.l.b16 %v2401
      %v2441 = vunpack.c.l.b16 %v2402
      %v2442 = vunpack.c.l.b16 %v2403
      %v2443 = vpack.c.b16 %v2428, %v2427
      %v2444 = vpack.c.b16 %v2430, %v2429
      %v2445 = vpack.c.b16 %v2432, %v2431
      %v2446 = vpack.c.b16 %v2434, %v2433
      %v2447 = vpack.c.b16 %v2436, %v2435
      %v2448 = vpack.c.b16 %v2438, %v2437
      %v2449 = vpack.c.b16 %v2440, %v2439
      %v2450 = vpack.c.b16 %v2442, %v2441
      %2459 = vmatprep.subr.bf16.mxu0 0
      %2460 = vmatpush1.bf16.msra.mxu0 %v2450
      %2461 = vmatprep.subr.bf16.mxu0 0
      %2462 = vmatpush1.bf16.msra.mxu0 %v2449
      %2463 = vmatprep.subr.bf16.mxu0 0
      %2464 = vmatpush1.bf16.msra.mxu0 %v2448
      %2465 = vmatprep.subr.bf16.mxu0 0
      %2466 = vmatpush1.bf16.msra.mxu0 %v2447
      %2467 = vmatprep.subr.bf16.mxu0 0
      %2468 = vmatpush1.bf16.msra.mxu0 %v2446
      %2469 = vmatprep.subr.bf16.mxu0 0
      %2470 = vmatpush1.bf16.msra.mxu0 %v2445
      %2471 = vmatprep.subr.bf16.mxu0 0
      %2472 = vmatpush1.bf16.msra.mxu0 %v2444
      %2473 = vmatprep.subr.bf16.mxu0 0
      %2474 = vmatpush1.bf16.msra.mxu0 %v2443
      %2475 = vmatprep.subr.bf16.mxu0 0
      %2476 = vmatpush2.bf16.msra.mxu0 0
      %2477 = vmatprep.subr.bf16.mxu0 0
      %2478 = vmatpush2.bf16.msra.mxu0 0
      %2479 = vmatprep.subr.bf16.mxu0 0
      %2480 = vmatpush2.bf16.msra.mxu0 0
      %2481 = vmatprep.subr.bf16.mxu0 0
      %2482 = vmatpush2.bf16.msra.mxu0 0
      %2483 = vmatprep.subr.bf16.mxu0 0
      %2484 = vmatpush2.bf16.msra.mxu0 0
      %2485 = vmatprep.subr.bf16.mxu0 0
      %2486 = vmatpush2.bf16.msra.mxu0 0
      %2487 = vmatprep.subr.bf16.mxu0 0
      %2488 = vmatpush2.bf16.msra.mxu0 0
      %2489 = vmatprep.subr.bf16.mxu0 0
      %2490 = vmatpush2.bf16.msra.mxu0 0
      %2491 = vmatprep.mubr.bf16.mxu0 0
      %2492 = vmatmul.mubr.bf16.gmra.mxu0 %v2372
      %v2493 = vpop.f32.mrf.mxu0
      %v2494 = vadd.f32 %v2409, %v2493
      %v2495 = vpop.f32.mrf.mxu0
      %v2496 = vpop.f32.mrf.mxu0
      %v2497 = vadd.f32 %v2409, %v2496
      %v2498 = vpop.f32.mrf.mxu0
      %2499 = vmatprep.mubr.bf16.mxu0 0
      %2500 = vmatmul.mubr.bf16.gmra.mxu0 %v2373
      %v2501 = vpop.f32.mrf.mxu0
      %v2502 = vadd.f32 %v2409, %v2501
      %v2503 = vpop.f32.mrf.mxu0
      %v2504 = vpop.f32.mrf.mxu0
      %v2505 = vadd.f32 %v2409, %v2504
      %v2506 = vpop.f32.mrf.mxu0
      %2507 = vmatprep.mubr.bf16.mxu0 0
      %2508 = vmatmul.mubr.bf16.gmra.mxu0 %v2374
      %v2509 = vpop.f32.mrf.mxu0
      %v2510 = vadd.f32 %v2409, %v2509
      %v2511 = vpop.f32.mrf.mxu0
      %v2512 = vpop.f32.mrf.mxu0
      %v2513 = vadd.f32 %v2409, %v2512
      %v2514 = vpop.f32.mrf.mxu0
      %2515 = vmatprep.mubr.bf16.mxu0 0
      %2516 = vmatmul.mubr.bf16.gmra.mxu0 %v2375
      %v2517 = vpop.f32.mrf.mxu0
      %v2518 = vadd.f32 %v2409, %v2517
      %v2519 = vpop.f32.mrf.mxu0
      %v2520 = vpop.f32.mrf.mxu0
      %v2521 = vadd.f32 %v2409, %v2520
      %v2522 = vpop.f32.mrf.mxu0
      %2523 = vmatprep.mubr.bf16.mxu0 0
      %2524 = vmatmul.mubr.bf16.gmra.mxu0 %v2376
      %v2525 = vpop.f32.mrf.mxu0
      %v2526 = vadd.f32 %v2409, %v2525
      %v2527 = vpop.f32.mrf.mxu0
      %v2528 = vpop.f32.mrf.mxu0
      %v2529 = vadd.f32 %v2409, %v2528
      %v2530 = vpop.f32.mrf.mxu0
      %2531 = vmatprep.mubr.bf16.mxu0 0
      %2532 = vmatmul.mubr.bf16.gmra.mxu0 %v2377
      %v2533 = vpop.f32.mrf.mxu0
      %v2534 = vadd.f32 %v2409, %v2533
      %v2535 = vpop.f32.mrf.mxu0
      %v2536 = vpop.f32.mrf.mxu0
      %v2537 = vadd.f32 %v2409, %v2536
      %v2538 = vpop.f32.mrf.mxu0
      %2539 = vmatprep.mubr.bf16.mxu0 0
      %2540 = vmatmul.mubr.bf16.gmra.mxu0 %v2378
      %v2541 = vpop.f32.mrf.mxu0
      %v2542 = vadd.f32 %v2409, %v2541
      %v2543 = vpop.f32.mrf.mxu0
      %v2544 = vpop.f32.mrf.mxu0
      %v2545 = vadd.f32 %v2409, %v2544
      %v2546 = vpop.f32.mrf.mxu0
      %2547 = vmatprep.mubr.bf16.mxu0 0
      %2548 = vmatmul.mubr.bf16.gmra.mxu0 %v2379
      %v2549 = vpop.f32.mrf.mxu0
      %v2550 = vadd.f32 %v2409, %v2549
      %v2551 = vpop.f32.mrf.mxu0
      %v2552 = vpop.f32.mrf.mxu0
      %v2553 = vadd.f32 %v2409, %v2552
      %v2554 = vpop.f32.mrf.mxu0
      %2555 = vmatprep.mubr.bf16.mxu0 0
      %2556 = vmatmul.mubr.bf16.gmra.mxu0 %v2380
      %v2557 = vpop.f32.mrf.mxu0
      %v2558 = vadd.f32 %v2409, %v2557
      %v2559 = vpop.f32.mrf.mxu0
      %v2560 = vpop.f32.mrf.mxu0
      %v2561 = vadd.f32 %v2409, %v2560
      %v2562 = vpop.f32.mrf.mxu0
      %2563 = vmatprep.mubr.bf16.mxu0 0
      %2564 = vmatmul.mubr.bf16.gmra.mxu0 %v2381
      %v2565 = vpop.f32.mrf.mxu0
      %v2566 = vadd.f32 %v2409, %v2565
      %v2567 = vpop.f32.mrf.mxu0
      %v2568 = vpop.f32.mrf.mxu0
      %v2569 = vadd.f32 %v2409, %v2568
      %v2570 = vpop.f32.mrf.mxu0
      %2571 = vmatprep.mubr.bf16.mxu0 0
      %2572 = vmatmul.mubr.bf16.gmra.mxu0 %v2382
      %v2573 = vpop.f32.mrf.mxu0
      %v2574 = vadd.f32 %v2409, %v2573
      %v2575 = vpop.f32.mrf.mxu0
      %v2576 = vpop.f32.mrf.mxu0
      %v2577 = vadd.f32 %v2409, %v2576
      %v2578 = vpop.f32.mrf.mxu0
      %2579 = vmatprep.mubr.bf16.mxu0 0
      %2580 = vmatmul.mubr.bf16.gmra.mxu0 %v2383
      %v2581 = vpop.f32.mrf.mxu0
      %v2582 = vadd.f32 %v2409, %v2581
      %v2583 = vpop.f32.mrf.mxu0
      %v2584 = vpop.f32.mrf.mxu0
      %v2585 = vadd.f32 %v2409, %v2584
      %v2586 = vpop.f32.mrf.mxu0
      %2587 = vmatprep.mubr.bf16.mxu0 0
      %2588 = vmatmul.mubr.bf16.gmra.mxu0 %v2384
      %v2589 = vpop.f32.mrf.mxu0
      %v2590 = vadd.f32 %v2409, %v2589
      %v2591 = vpop.f32.mrf.mxu0
      %v2592 = vpop.f32.mrf.mxu0
      %v2593 = vadd.f32 %v2409, %v2592
      %v2594 = vpop.f32.mrf.mxu0
      %2595 = vmatprep.mubr.bf16.mxu0 0
      %2596 = vmatmul.mubr.bf16.gmra.mxu0 %v2385
      %v2597 = vpop.f32.mrf.mxu0
      %v2598 = vadd.f32 %v2409, %v2597
      %v2599 = vpop.f32.mrf.mxu0
      %v2600 = vpop.f32.mrf.mxu0
      %v2601 = vadd.f32 %v2409, %v2600
      %v2602 = vpop.f32.mrf.mxu0
      %2603 = vmatprep.mubr.bf16.mxu0 0
      %2604 = vmatmul.mubr.bf16.gmra.mxu0 %v2386
      %v2605 = vpop.f32.mrf.mxu0
      %v2606 = vadd.f32 %v2409, %v2605
      %v2607 = vpop.f32.mrf.mxu0
      %v2608 = vpop.f32.mrf.mxu0
      %v2609 = vadd.f32 %v2409, %v2608
      %v2610 = vpop.f32.mrf.mxu0
      %2611 = vmatprep.mubr.bf16.mxu0 0
      %2612 = vmatmul.mubr.bf16.gmra.mxu0 %v2387
      %v2613 = vpop.f32.mrf.mxu0
      %v2614 = vadd.f32 %v2409, %v2613
      %v2615 = vpop.f32.mrf.mxu0
      %v2616 = vpop.f32.mrf.mxu0
      %v2617 = vadd.f32 %v2409, %v2616
      %v2618 = vpop.f32.mrf.mxu0
      %2619 = vdwg.mxu0
      %v2620 = vmax.f32 %v2494, 0.0
      %v2621 = vmax.f32 %v2497, 0.0
      %v2622 = vmax.f32 %v2502, 0.0
      %v2623 = vmax.f32 %v2505, 0.0
      %v2624 = vmax.f32 %v2510, 0.0
      %v2625 = vmax.f32 %v2513, 0.0
      %v2626 = vmax.f32 %v2518, 0.0
      %v2627 = vmax.f32 %v2521, 0.0
      %v2628 = vmax.f32 %v2526, 0.0
      %v2629 = vmax.f32 %v2529, 0.0
      %v2630 = vmax.f32 %v2534, 0.0
      %v2631 = vmax.f32 %v2537, 0.0
      %v2632 = vmax.f32 %v2542, 0.0
      %v2633 = vmax.f32 %v2545, 0.0
      %v2634 = vmax.f32 %v2550, 0.0
      %v2635 = vmax.f32 %v2553, 0.0
      %v2636 = vmax.f32 %v2558, 0.0
      %v2637 = vmax.f32 %v2561, 0.0
      %v2638 = vmax.f32 %v2566, 0.0
      %v2639 = vmax.f32 %v2569, 0.0
      %v2640 = vmax.f32 %v2574, 0.0
      %v2641 = vmax.f32 %v2577, 0.0
      %v2642 = vmax.f32 %v2582, 0.0
      %v2643 = vmax.f32 %v2585, 0.0
      %v2644 = vmax.f32 %v2590, 0.0
      %v2645 = vmax.f32 %v2593, 0.0
      %v2646 = vmax.f32 %v2598, 0.0
      %v2647 = vmax.f32 %v2601, 0.0
      %v2648 = vmax.f32 %v2606, 0.0
      %v2649 = vmax.f32 %v2609, 0.0
      %v2650 = vmax.f32 %v2614, 0.0
      %v2651 = vmax.f32 %v2617, 0.0
      %v2652 = vpack.c.bf16 %v2621, %v2620
      %v2653 = vpack.c.bf16 %v2623, %v2622
      %v2654 = vpack.c.bf16 %v2625, %v2624
      %v2655 = vpack.c.bf16 %v2627, %v2626
      %v2656 = vpack.c.bf16 %v2629, %v2628
      %v2657 = vpack.c.bf16 %v2631, %v2630
      %v2658 = vpack.c.bf16 %v2633, %v2632
      %v2659 = vpack.c.bf16 %v2635, %v2634
      %v2660 = vpack.c.bf16 %v2637, %v2636
      %v2661 = vpack.c.bf16 %v2639, %v2638
      %v2662 = vpack.c.bf16 %v2641, %v2640
      %v2663 = vpack.c.bf16 %v2643, %v2642
      %v2664 = vpack.c.bf16 %v2645, %v2644
      %v2665 = vpack.c.bf16 %v2647, %v2646
      %v2666 = vpack.c.bf16 %v2649, %v2648
      %v2667 = vpack.c.bf16 %v2651, %v2650
      %v2668 = vld [vmem:[%s8] sm:$0xf]
      %v2669 = vld [vmem:[%s8 + $0x4] sm:$0xf]
      %v2670 = vld [vmem:[%s8 + $0x8] sm:$0xf]
      %v2671 = vld [vmem:[%s8 + $0xc] sm:$0xf]
      %v2672 = vld [vmem:[%s8 + $0x10] sm:$0xf]
      %v2673 = vld [vmem:[%s8 + $0x14] sm:$0xf]
      %v2674 = vld [vmem:[%s8 + $0x18] sm:$0xf]
      %v2675 = vld [vmem:[%s8 + $0x1c] sm:$0xf]
      %v2676 = vld [vmem:[%s8 + $0x20] sm:$0xf]
      %v2677 = vld [vmem:[%s8 + $0x24] sm:$0xf]
      %v2678 = vld [vmem:[%s8 + $0x28] sm:$0xf]
      %v2679 = vld [vmem:[%s8 + $0x2c] sm:$0xf]
      %v2680 = vld [vmem:[%s8 + $0x30] sm:$0xf]
      %v2681 = vld [vmem:[%s8 + $0x34] sm:$0xf]
      %v2682 = vld [vmem:[%s8 + $0x38] sm:$0xf]
      %v2683 = vld [vmem:[%s8 + $0x3c] sm:$0xf]
      %v2684 = vld [vmem:[%s9] sm:$0x1]
      %v2686 = vlaneseq
      %v2687 = vshrl.u32 %v2686, 7
      %v2688 = vsub.s32 0, %v2687
      %v2689 = vrot.slane %v2684, %v2688
      %v2707 = vunpack.c.l.b16 %v2668
      %v2708 = vunpack.c.l.b16 %v2669
      %v2709 = vunpack.c.l.b16 %v2670
      %v2710 = vunpack.c.l.b16 %v2671
      %v2711 = vunpack.c.l.b16 %v2672
      %v2712 = vunpack.c.l.b16 %v2673
      %v2713 = vunpack.c.l.b16 %v2674
      %v2714 = vunpack.c.l.b16 %v2675
      %v2715 = vunpack.c.l.b16 %v2676
      %v2716 = vunpack.c.l.b16 %v2677
      %v2717 = vunpack.c.l.b16 %v2678
      %v2718 = vunpack.c.l.b16 %v2679
      %v2719 = vunpack.c.l.b16 %v2680
      %v2720 = vunpack.c.l.b16 %v2681
      %v2721 = vunpack.c.l.b16 %v2682
      %v2722 = vunpack.c.l.b16 %v2683
      %v2723 = vpack.c.b16 %v2708, %v2707
      %v2724 = vpack.c.b16 %v2710, %v2709
      %v2725 = vpack.c.b16 %v2712, %v2711
      %v2726 = vpack.c.b16 %v2714, %v2713
      %v2727 = vpack.c.b16 %v2716, %v2715
      %v2728 = vpack.c.b16 %v2718, %v2717
      %v2729 = vpack.c.b16 %v2720, %v2719
      %v2730 = vpack.c.b16 %v2722, %v2721
      %2739 = vmatprep.subr.bf16.mxu0 0
      %2740 = vmatpush1.bf16.msra.mxu0 %v2730
      %2741 = vmatprep.subr.bf16.mxu0 0
      %2742 = vmatpush1.bf16.msra.mxu0 %v2729
      %2743 = vmatprep.subr.bf16.mxu0 0
      %2744 = vmatpush1.bf16.msra.mxu0 %v2728
      %2745 = vmatprep.subr.bf16.mxu0 0
      %2746 = vmatpush1.bf16.msra.mxu0 %v2727
      %2747 = vmatprep.subr.bf16.mxu0 0
      %2748 = vmatpush1.bf16.msra.mxu0 %v2726
      %2749 = vmatprep.subr.bf16.mxu0 0
      %2750 = vmatpush1.bf16.msra.mxu0 %v2725
      %2751 = vmatprep.subr.bf16.mxu0 0
      %2752 = vmatpush1.bf16.msra.mxu0 %v2724
      %2753 = vmatprep.subr.bf16.mxu0 0
      %2754 = vmatpush1.bf16.msra.mxu0 %v2723
      %2755 = vmatprep.subr.bf16.mxu0 0
      %2756 = vmatpush2.bf16.msra.mxu0 0
      %2757 = vmatprep.subr.bf16.mxu0 0
      %2758 = vmatpush2.bf16.msra.mxu0 0
      %2759 = vmatprep.subr.bf16.mxu0 0
      %2760 = vmatpush2.bf16.msra.mxu0 0
      %2761 = vmatprep.subr.bf16.mxu0 0
      %2762 = vmatpush2.bf16.msra.mxu0 0
      %2763 = vmatprep.subr.bf16.mxu0 0
      %2764 = vmatpush2.bf16.msra.mxu0 0
      %2765 = vmatprep.subr.bf16.mxu0 0
      %2766 = vmatpush2.bf16.msra.mxu0 0
      %2767 = vmatprep.subr.bf16.mxu0 0
      %2768 = vmatpush2.bf16.msra.mxu0 0
      %2769 = vmatprep.subr.bf16.mxu0 0
      %2770 = vmatpush2.bf16.msra.mxu0 0
      %2771 = vmatprep.mubr.bf16.mxu0 0
      %2772 = vmatmul.mubr.bf16.gmra.mxu0 %v2652
      %v2773 = vpop.f32.mrf.mxu0
      %v2774 = vadd.f32 %v2689, %v2773
      %v2775 = vpop.f32.mrf.mxu0
      %v2776 = vpop.f32.mrf.mxu0
      %v2777 = vadd.f32 %v2689, %v2776
      %v2778 = vpop.f32.mrf.mxu0
      %2779 = vmatprep.mubr.bf16.mxu0 0
      %2780 = vmatmul.mubr.bf16.gmra.mxu0 %v2653
      %v2781 = vpop.f32.mrf.mxu0
      %v2782 = vadd.f32 %v2689, %v2781
      %v2783 = vpop.f32.mrf.mxu0
      %v2784 = vpop.f32.mrf.mxu0
      %v2785 = vadd.f32 %v2689, %v2784
      %v2786 = vpop.f32.mrf.mxu0
      %2787 = vmatprep.mubr.bf16.mxu0 0
      %2788 = vmatmul.mubr.bf16.gmra.mxu0 %v2654
      %v2789 = vpop.f32.mrf.mxu0
      %v2790 = vadd.f32 %v2689, %v2789
      %v2791 = vpop.f32.mrf.mxu0
      %v2792 = vpop.f32.mrf.mxu0
      %v2793 = vadd.f32 %v2689, %v2792
      %v2794 = vpop.f32.mrf.mxu0
      %2795 = vmatprep.mubr.bf16.mxu0 0
      %2796 = vmatmul.mubr.bf16.gmra.mxu0 %v2655
      %v2797 = vpop.f32.mrf.mxu0
      %v2798 = vadd.f32 %v2689, %v2797
      %v2799 = vpop.f32.mrf.mxu0
      %v2800 = vpop.f32.mrf.mxu0
      %v2801 = vadd.f32 %v2689, %v2800
      %v2802 = vpop.f32.mrf.mxu0
      %2803 = vmatprep.mubr.bf16.mxu0 0
      %2804 = vmatmul.mubr.bf16.gmra.mxu0 %v2656
      %v2805 = vpop.f32.mrf.mxu0
      %v2806 = vadd.f32 %v2689, %v2805
      %v2807 = vpop.f32.mrf.mxu0
      %v2808 = vpop.f32.mrf.mxu0
      %v2809 = vadd.f32 %v2689, %v2808
      %v2810 = vpop.f32.mrf.mxu0
      %2811 = vmatprep.mubr.bf16.mxu0 0
      %2812 = vmatmul.mubr.bf16.gmra.mxu0 %v2657
      %v2813 = vpop.f32.mrf.mxu0
      %v2814 = vadd.f32 %v2689, %v2813
      %v2815 = vpop.f32.mrf.mxu0
      %v2816 = vpop.f32.mrf.mxu0
      %v2817 = vadd.f32 %v2689, %v2816
      %v2818 = vpop.f32.mrf.mxu0
      %2819 = vmatprep.mubr.bf16.mxu0 0
      %2820 = vmatmul.mubr.bf16.gmra.mxu0 %v2658
      %v2821 = vpop.f32.mrf.mxu0
      %v2822 = vadd.f32 %v2689, %v2821
      %v2823 = vpop.f32.mrf.mxu0
      %v2824 = vpop.f32.mrf.mxu0
      %v2825 = vadd.f32 %v2689, %v2824
      %v2826 = vpop.f32.mrf.mxu0
      %2827 = vmatprep.mubr.bf16.mxu0 0
      %2828 = vmatmul.mubr.bf16.gmra.mxu0 %v2659
      %v2829 = vpop.f32.mrf.mxu0
      %v2830 = vadd.f32 %v2689, %v2829
      %v2831 = vpop.f32.mrf.mxu0
      %v2832 = vpop.f32.mrf.mxu0
      %v2833 = vadd.f32 %v2689, %v2832
      %v2834 = vpop.f32.mrf.mxu0
      %2835 = vmatprep.mubr.bf16.mxu0 0
      %2836 = vmatmul.mubr.bf16.gmra.mxu0 %v2660
      %v2837 = vpop.f32.mrf.mxu0
      %v2838 = vadd.f32 %v2689, %v2837
      %v2839 = vpop.f32.mrf.mxu0
      %v2840 = vpop.f32.mrf.mxu0
      %v2841 = vadd.f32 %v2689, %v2840
      %v2842 = vpop.f32.mrf.mxu0
      %2843 = vmatprep.mubr.bf16.mxu0 0
      %2844 = vmatmul.mubr.bf16.gmra.mxu0 %v2661
      %v2845 = vpop.f32.mrf.mxu0
      %v2846 = vadd.f32 %v2689, %v2845
      %v2847 = vpop.f32.mrf.mxu0
      %v2848 = vpop.f32.mrf.mxu0
      %v2849 = vadd.f32 %v2689, %v2848
      %v2850 = vpop.f32.mrf.mxu0
      %2851 = vmatprep.mubr.bf16.mxu0 0
      %2852 = vmatmul.mubr.bf16.gmra.mxu0 %v2662
      %v2853 = vpop.f32.mrf.mxu0
      %v2854 = vadd.f32 %v2689, %v2853
      %v2855 = vpop.f32.mrf.mxu0
      %v2856 = vpop.f32.mrf.mxu0
      %v2857 = vadd.f32 %v2689, %v2856
      %v2858 = vpop.f32.mrf.mxu0
      %2859 = vmatprep.mubr.bf16.mxu0 0
      %2860 = vmatmul.mubr.bf16.gmra.mxu0 %v2663
      %v2861 = vpop.f32.mrf.mxu0
      %v2862 = vadd.f32 %v2689, %v2861
      %v2863 = vpop.f32.mrf.mxu0
      %v2864 = vpop.f32.mrf.mxu0
      %v2865 = vadd.f32 %v2689, %v2864
      %v2866 = vpop.f32.mrf.mxu0
      %2867 = vmatprep.mubr.bf16.mxu0 0
      %2868 = vmatmul.mubr.bf16.gmra.mxu0 %v2664
      %v2869 = vpop.f32.mrf.mxu0
      %v2870 = vadd.f32 %v2689, %v2869
      %v2871 = vpop.f32.mrf.mxu0
      %v2872 = vpop.f32.mrf.mxu0
      %v2873 = vadd.f32 %v2689, %v2872
      %v2874 = vpop.f32.mrf.mxu0
      %2875 = vmatprep.mubr.bf16.mxu0 0
      %2876 = vmatmul.mubr.bf16.gmra.mxu0 %v2665
      %v2877 = vpop.f32.mrf.mxu0
      %v2878 = vadd.f32 %v2689, %v2877
      %v2879 = vpop.f32.mrf.mxu0
      %v2880 = vpop.f32.mrf.mxu0
      %v2881 = vadd.f32 %v2689, %v2880
      %v2882 = vpop.f32.mrf.mxu0
      %2883 = vmatprep.mubr.bf16.mxu0 0
      %2884 = vmatmul.mubr.bf16.gmra.mxu0 %v2666
      %v2885 = vpop.f32.mrf.mxu0
      %v2886 = vadd.f32 %v2689, %v2885
      %v2887 = vpop.f32.mrf.mxu0
      %v2888 = vpop.f32.mrf.mxu0
      %v2889 = vadd.f32 %v2689, %v2888
      %v2890 = vpop.f32.mrf.mxu0
      %2891 = vmatprep.mubr.bf16.mxu0 0
      %2892 = vmatmul.mubr.bf16.gmra.mxu0 %v2667
      %v2893 = vpop.f32.mrf.mxu0
      %v2894 = vadd.f32 %v2689, %v2893
      %v2895 = vpop.f32.mrf.mxu0
      %v2896 = vpop.f32.mrf.mxu0
      %v2897 = vadd.f32 %v2689, %v2896
      %v2898 = vpop.f32.mrf.mxu0
      %2899 = vdwg.mxu0
      %v2900 = vmax.f32 %v2774, 0.0
      %v2901 = vmax.f32 %v2777, 0.0
      %v2902 = vmax.f32 %v2782, 0.0
      %v2903 = vmax.f32 %v2785, 0.0
      %v2904 = vmax.f32 %v2790, 0.0
      %v2905 = vmax.f32 %v2793, 0.0
      %v2906 = vmax.f32 %v2798, 0.0
      %v2907 = vmax.f32 %v2801, 0.0
      %v2908 = vmax.f32 %v2806, 0.0
      %v2909 = vmax.f32 %v2809, 0.0
      %v2910 = vmax.f32 %v2814, 0.0
      %v2911 = vmax.f32 %v2817, 0.0
      %v2912 = vmax.f32 %v2822, 0.0
      %v2913 = vmax.f32 %v2825, 0.0
      %v2914 = vmax.f32 %v2830, 0.0
      %v2915 = vmax.f32 %v2833, 0.0
      %v2916 = vmax.f32 %v2838, 0.0
      %v2917 = vmax.f32 %v2841, 0.0
      %v2918 = vmax.f32 %v2846, 0.0
      %v2919 = vmax.f32 %v2849, 0.0
      %v2920 = vmax.f32 %v2854, 0.0
      %v2921 = vmax.f32 %v2857, 0.0
      %v2922 = vmax.f32 %v2862, 0.0
      %v2923 = vmax.f32 %v2865, 0.0
      %v2924 = vmax.f32 %v2870, 0.0
      %v2925 = vmax.f32 %v2873, 0.0
      %v2926 = vmax.f32 %v2878, 0.0
      %v2927 = vmax.f32 %v2881, 0.0
      %v2928 = vmax.f32 %v2886, 0.0
      %v2929 = vmax.f32 %v2889, 0.0
      %v2930 = vmax.f32 %v2894, 0.0
      %v2931 = vmax.f32 %v2897, 0.0
      %v2932 = vpack.c.bf16 %v2901, %v2900
      %v2933 = vpack.c.bf16 %v2903, %v2902
      %v2934 = vpack.c.bf16 %v2905, %v2904
      %v2935 = vpack.c.bf16 %v2907, %v2906
      %v2936 = vpack.c.bf16 %v2909, %v2908
      %v2937 = vpack.c.bf16 %v2911, %v2910
      %v2938 = vpack.c.bf16 %v2913, %v2912
      %v2939 = vpack.c.bf16 %v2915, %v2914
      %v2940 = vpack.c.bf16 %v2917, %v2916
      %v2941 = vpack.c.bf16 %v2919, %v2918
      %v2942 = vpack.c.bf16 %v2921, %v2920
      %v2943 = vpack.c.bf16 %v2923, %v2922
      %v2944 = vpack.c.bf16 %v2925, %v2924
      %v2945 = vpack.c.bf16 %v2927, %v2926
      %v2946 = vpack.c.bf16 %v2929, %v2928
      %v2947 = vpack.c.bf16 %v2931, %v2930
      %v2948 = vld [vmem:[%s10] sm:$0xf]
      %v2949 = vld [vmem:[%s10 + $0x4] sm:$0xf]
      %v2950 = vld [vmem:[%s10 + $0x8] sm:$0xf]
      %v2951 = vld [vmem:[%s10 + $0xc] sm:$0xf]
      %v2952 = vld [vmem:[%s10 + $0x10] sm:$0xf]
      %v2953 = vld [vmem:[%s10 + $0x14] sm:$0xf]
      %v2954 = vld [vmem:[%s10 + $0x18] sm:$0xf]
      %v2955 = vld [vmem:[%s10 + $0x1c] sm:$0xf]
      %v2956 = vld [vmem:[%s10 + $0x20] sm:$0xf]
      %v2957 = vld [vmem:[%s10 + $0x24] sm:$0xf]
      %v2958 = vld [vmem:[%s10 + $0x28] sm:$0xf]
      %v2959 = vld [vmem:[%s10 + $0x2c] sm:$0xf]
      %v2960 = vld [vmem:[%s10 + $0x30] sm:$0xf]
      %v2961 = vld [vmem:[%s10 + $0x34] sm:$0xf]
      %v2962 = vld [vmem:[%s10 + $0x38] sm:$0xf]
      %v2963 = vld [vmem:[%s10 + $0x3c] sm:$0xf]
      %v2964 = vld [vmem:[%s11] sm:$0x1]
      %v2966 = vlaneseq
      %v2967 = vshrl.u32 %v2966, 7
      %v2968 = vsub.s32 0, %v2967
      %v2969 = vrot.slane %v2964, %v2968
      %v2987 = vunpack.c.l.b16 %v2948
      %v2988 = vunpack.c.l.b16 %v2949
      %v2989 = vunpack.c.l.b16 %v2950
      %v2990 = vunpack.c.l.b16 %v2951
      %v2991 = vunpack.c.l.b16 %v2952
      %v2992 = vunpack.c.l.b16 %v2953
      %v2993 = vunpack.c.l.b16 %v2954
      %v2994 = vunpack.c.l.b16 %v2955
      %v2995 = vunpack.c.l.b16 %v2956
      %v2996 = vunpack.c.l.b16 %v2957
      %v2997 = vunpack.c.l.b16 %v2958
      %v2998 = vunpack.c.l.b16 %v2959
      %v2999 = vunpack.c.l.b16 %v2960
      %v3000 = vunpack.c.l.b16 %v2961
      %v3001 = vunpack.c.l.b16 %v2962
      %v3002 = vunpack.c.l.b16 %v2963
      %v3003 = vpack.c.b16 %v2988, %v2987
      %v3004 = vpack.c.b16 %v2990, %v2989
      %v3005 = vpack.c.b16 %v2992, %v2991
      %v3006 = vpack.c.b16 %v2994, %v2993
      %v3007 = vpack.c.b16 %v2996, %v2995
      %v3008 = vpack.c.b16 %v2998, %v2997
      %v3009 = vpack.c.b16 %v3000, %v2999
      %v3010 = vpack.c.b16 %v3002, %v3001
      %3019 = vmatprep.subr.bf16.mxu0 0
      %3020 = vmatpush1.bf16.msra.mxu0 %v3010
      %3021 = vmatprep.subr.bf16.mxu0 0
      %3022 = vmatpush1.bf16.msra.mxu0 %v3009
      %3023 = vmatprep.subr.bf16.mxu0 0
      %3024 = vmatpush1.bf16.msra.mxu0 %v3008
      %3025 = vmatprep.subr.bf16.mxu0 0
      %3026 = vmatpush1.bf16.msra.mxu0 %v3007
      %3027 = vmatprep.subr.bf16.mxu0 0
      %3028 = vmatpush1.bf16.msra.mxu0 %v3006
      %3029 = vmatprep.subr.bf16.mxu0 0
      %3030 = vmatpush1.bf16.msra.mxu0 %v3005
      %3031 = vmatprep.subr.bf16.mxu0 0
      %3032 = vmatpush1.bf16.msra.mxu0 %v3004
      %3033 = vmatprep.subr.bf16.mxu0 0
      %3034 = vmatpush1.bf16.msra.mxu0 %v3003
      %3035 = vmatprep.subr.bf16.mxu0 0
      %3036 = vmatpush2.bf16.msra.mxu0 0
      %3037 = vmatprep.subr.bf16.mxu0 0
      %3038 = vmatpush2.bf16.msra.mxu0 0
      %3039 = vmatprep.subr.bf16.mxu0 0
      %3040 = vmatpush2.bf16.msra.mxu0 0
      %3041 = vmatprep.subr.bf16.mxu0 0
      %3042 = vmatpush2.bf16.msra.mxu0 0
      %3043 = vmatprep.subr.bf16.mxu0 0
      %3044 = vmatpush2.bf16.msra.mxu0 0
      %3045 = vmatprep.subr.bf16.mxu0 0
      %3046 = vmatpush2.bf16.msra.mxu0 0
      %3047 = vmatprep.subr.bf16.mxu0 0
      %3048 = vmatpush2.bf16.msra.mxu0 0
      %3049 = vmatprep.subr.bf16.mxu0 0
      %3050 = vmatpush2.bf16.msra.mxu0 0
      %3051 = vmatprep.mubr.bf16.mxu0 0
      %3052 = vmatmul.mubr.bf16.gmra.mxu0 %v2932
      %v3053 = vpop.f32.mrf.mxu0
      %v3054 = vadd.f32 %v2969, %v3053
      %v3055 = vpop.f32.mrf.mxu0
      %v3056 = vpop.f32.mrf.mxu0
      %v3057 = vadd.f32 %v2969, %v3056
      %v3058 = vpop.f32.mrf.mxu0
      %3059 = vmatprep.mubr.bf16.mxu0 0
      %3060 = vmatmul.mubr.bf16.gmra.mxu0 %v2933
      %v3061 = vpop.f32.mrf.mxu0
      %v3062 = vadd.f32 %v2969, %v3061
      %v3063 = vpop.f32.mrf.mxu0
      %v3064 = vpop.f32.mrf.mxu0
      %v3065 = vadd.f32 %v2969, %v3064
      %v3066 = vpop.f32.mrf.mxu0
      %3067 = vmatprep.mubr.bf16.mxu0 0
      %3068 = vmatmul.mubr.bf16.gmra.mxu0 %v2934
      %v3069 = vpop.f32.mrf.mxu0
      %v3070 = vadd.f32 %v2969, %v3069
      %v3071 = vpop.f32.mrf.mxu0
      %v3072 = vpop.f32.mrf.mxu0
      %v3073 = vadd.f32 %v2969, %v3072
      %v3074 = vpop.f32.mrf.mxu0
      %3075 = vmatprep.mubr.bf16.mxu0 0
      %3076 = vmatmul.mubr.bf16.gmra.mxu0 %v2935
      %v3077 = vpop.f32.mrf.mxu0
      %v3078 = vadd.f32 %v2969, %v3077
      %v3079 = vpop.f32.mrf.mxu0
      %v3080 = vpop.f32.mrf.mxu0
      %v3081 = vadd.f32 %v2969, %v3080
      %v3082 = vpop.f32.mrf.mxu0
      %3083 = vmatprep.mubr.bf16.mxu0 0
      %3084 = vmatmul.mubr.bf16.gmra.mxu0 %v2936
      %v3085 = vpop.f32.mrf.mxu0
      %v3086 = vadd.f32 %v2969, %v3085
      %v3087 = vpop.f32.mrf.mxu0
      %v3088 = vpop.f32.mrf.mxu0
      %v3089 = vadd.f32 %v2969, %v3088
      %v3090 = vpop.f32.mrf.mxu0
      %3091 = vmatprep.mubr.bf16.mxu0 0
      %3092 = vmatmul.mubr.bf16.gmra.mxu0 %v2937
      %v3093 = vpop.f32.mrf.mxu0
      %v3094 = vadd.f32 %v2969, %v3093
      %v3095 = vpop.f32.mrf.mxu0
      %v3096 = vpop.f32.mrf.mxu0
      %v3097 = vadd.f32 %v2969, %v3096
      %v3098 = vpop.f32.mrf.mxu0
      %3099 = vmatprep.mubr.bf16.mxu0 0
      %3100 = vmatmul.mubr.bf16.gmra.mxu0 %v2938
      %v3101 = vpop.f32.mrf.mxu0
      %v3102 = vadd.f32 %v2969, %v3101
      %v3103 = vpop.f32.mrf.mxu0
      %v3104 = vpop.f32.mrf.mxu0
      %v3105 = vadd.f32 %v2969, %v3104
      %v3106 = vpop.f32.mrf.mxu0
      %3107 = vmatprep.mubr.bf16.mxu0 0
      %3108 = vmatmul.mubr.bf16.gmra.mxu0 %v2939
      %v3109 = vpop.f32.mrf.mxu0
      %v3110 = vadd.f32 %v2969, %v3109
      %v3111 = vpop.f32.mrf.mxu0
      %v3112 = vpop.f32.mrf.mxu0
      %v3113 = vadd.f32 %v2969, %v3112
      %v3114 = vpop.f32.mrf.mxu0
      %3115 = vmatprep.mubr.bf16.mxu0 0
      %3116 = vmatmul.mubr.bf16.gmra.mxu0 %v2940
      %v3117 = vpop.f32.mrf.mxu0
      %v3118 = vadd.f32 %v2969, %v3117
      %v3119 = vpop.f32.mrf.mxu0
      %v3120 = vpop.f32.mrf.mxu0
      %v3121 = vadd.f32 %v2969, %v3120
      %v3122 = vpop.f32.mrf.mxu0
      %3123 = vmatprep.mubr.bf16.mxu0 0
      %3124 = vmatmul.mubr.bf16.gmra.mxu0 %v2941
      %v3125 = vpop.f32.mrf.mxu0
      %v3126 = vadd.f32 %v2969, %v3125
      %v3127 = vpop.f32.mrf.mxu0
      %v3128 = vpop.f32.mrf.mxu0
      %v3129 = vadd.f32 %v2969, %v3128
      %v3130 = vpop.f32.mrf.mxu0
      %3131 = vmatprep.mubr.bf16.mxu0 0
      %3132 = vmatmul.mubr.bf16.gmra.mxu0 %v2942
      %v3133 = vpop.f32.mrf.mxu0
      %v3134 = vadd.f32 %v2969, %v3133
      %v3135 = vpop.f32.mrf.mxu0
      %v3136 = vpop.f32.mrf.mxu0
      %v3137 = vadd.f32 %v2969, %v3136
      %v3138 = vpop.f32.mrf.mxu0
      %3139 = vmatprep.mubr.bf16.mxu0 0
      %3140 = vmatmul.mubr.bf16.gmra.mxu0 %v2943
      %v3141 = vpop.f32.mrf.mxu0
      %v3142 = vadd.f32 %v2969, %v3141
      %v3143 = vpop.f32.mrf.mxu0
      %v3144 = vpop.f32.mrf.mxu0
      %v3145 = vadd.f32 %v2969, %v3144
      %v3146 = vpop.f32.mrf.mxu0
      %3147 = vmatprep.mubr.bf16.mxu0 0
      %3148 = vmatmul.mubr.bf16.gmra.mxu0 %v2944
      %v3149 = vpop.f32.mrf.mxu0
      %v3150 = vadd.f32 %v2969, %v3149
      %v3151 = vpop.f32.mrf.mxu0
      %v3152 = vpop.f32.mrf.mxu0
      %v3153 = vadd.f32 %v2969, %v3152
      %v3154 = vpop.f32.mrf.mxu0
      %3155 = vmatprep.mubr.bf16.mxu0 0
      %3156 = vmatmul.mubr.bf16.gmra.mxu0 %v2945
      %v3157 = vpop.f32.mrf.mxu0
      %v3158 = vadd.f32 %v2969, %v3157
      %v3159 = vpop.f32.mrf.mxu0
      %v3160 = vpop.f32.mrf.mxu0
      %v3161 = vadd.f32 %v2969, %v3160
      %v3162 = vpop.f32.mrf.mxu0
      %3163 = vmatprep.mubr.bf16.mxu0 0
      %3164 = vmatmul.mubr.bf16.gmra.mxu0 %v2946
      %v3165 = vpop.f32.mrf.mxu0
      %v3166 = vadd.f32 %v2969, %v3165
      %v3167 = vpop.f32.mrf.mxu0
      %v3168 = vpop.f32.mrf.mxu0
      %v3169 = vadd.f32 %v2969, %v3168
      %v3170 = vpop.f32.mrf.mxu0
      %3171 = vmatprep.mubr.bf16.mxu0 0
      %3172 = vmatmul.mubr.bf16.gmra.mxu0 %v2947
      %v3173 = vpop.f32.mrf.mxu0
      %v3174 = vadd.f32 %v2969, %v3173
      %v3175 = vpop.f32.mrf.mxu0
      %v3176 = vpop.f32.mrf.mxu0
      %v3177 = vadd.f32 %v2969, %v3176
      %v3178 = vpop.f32.mrf.mxu0
      %3179 = vdwg.mxu0
      %v3180 = vadd.f32 %v1223, %v3054
      %v3181 = vadd.f32 %v1224, %v3057
      %v3182 = vadd.f32 %v1225, %v3062
      %v3183 = vadd.f32 %v1226, %v3065
      %v3184 = vadd.f32 %v1227, %v3070
      %v3185 = vadd.f32 %v1228, %v3073
      %v3186 = vadd.f32 %v1229, %v3078
      %v3187 = vadd.f32 %v1230, %v3081
      %v3188 = vadd.f32 %v1231, %v3086
      %v3189 = vadd.f32 %v1232, %v3089
      %v3190 = vadd.f32 %v1233, %v3094
      %v3191 = vadd.f32 %v1234, %v3097
      %v3192 = vadd.f32 %v1235, %v3102
      %v3193 = vadd.f32 %v1236, %v3105
      %v3194 = vadd.f32 %v1237, %v3110
      %v3195 = vadd.f32 %v1238, %v3113
      %v3196 = vadd.f32 %v1239, %v3118
      %v3197 = vadd.f32 %v1240, %v3121
      %v3198 = vadd.f32 %v1241, %v3126
      %v3199 = vadd.f32 %v1242, %v3129
      %v3200 = vadd.f32 %v1243, %v3134
      %v3201 = vadd.f32 %v1244, %v3137
      %v3202 = vadd.f32 %v1245, %v3142
      %v3203 = vadd.f32 %v1246, %v3145
      %v3204 = vadd.f32 %v1247, %v3150
      %v3205 = vadd.f32 %v1248, %v3153
      %v3206 = vadd.f32 %v1249, %v3158
      %v3207 = vadd.f32 %v1250, %v3161
      %v3208 = vadd.f32 %v1251, %v3166
      %v3209 = vadd.f32 %v1252, %v3169
      %v3210 = vadd.f32 %v1253, %v3174
      %v3211 = vadd.f32 %v1254, %v3177
      %3212 = vst [vmem:[%s694] sm:$0xff] %v3180
      %3213 = vst [vmem:[%s694 + $0x8] sm:$0xff] %v3181
      %3214 = vst [vmem:[%s694 + $0x10] sm:$0xff] %v3182
      %3215 = vst [vmem:[%s694 + $0x18] sm:$0xff] %v3183
      %3216 = vst [vmem:[%s694 + $0x20] sm:$0xff] %v3184
      %3217 = vst [vmem:[%s694 + $0x28] sm:$0xff] %v3185
      %3218 = vst [vmem:[%s694 + $0x30] sm:$0xff] %v3186
      %3219 = vst [vmem:[%s694 + $0x38] sm:$0xff] %v3187
      %3220 = vst [vmem:[%s694 + $0x40] sm:$0xff] %v3188
      %3221 = vst [vmem:[%s694 + $0x48] sm:$0xff] %v3189
      %3222 = vst [vmem:[%s694 + $0x50] sm:$0xff] %v3190
      %3223 = vst [vmem:[%s694 + $0x58] sm:$0xff] %v3191
      %3224 = vst [vmem:[%s694 + $0x60] sm:$0xff] %v3192
      %3225 = vst [vmem:[%s694 + $0x68] sm:$0xff] %v3193
      %3226 = vst [vmem:[%s694 + $0x70] sm:$0xff] %v3194
      %3227 = vst [vmem:[%s694 + $0x78] sm:$0xff] %v3195
      %3228 = vst [vmem:[%s694 + $0x80] sm:$0xff] %v3196
      %3229 = vst [vmem:[%s694 + $0x88] sm:$0xff] %v3197
      %3230 = vst [vmem:[%s694 + $0x90] sm:$0xff] %v3198
      %3231 = vst [vmem:[%s694 + $0x98] sm:$0xff] %v3199
      %3232 = vst [vmem:[%s694 + $0xa0] sm:$0xff] %v3200
      %3233 = vst [vmem:[%s694 + $0xa8] sm:$0xff] %v3201
      %3234 = vst [vmem:[%s694 + $0xb0] sm:$0xff] %v3202
      %3235 = vst [vmem:[%s694 + $0xb8] sm:$0xff] %v3203
      %3236 = vst [vmem:[%s694 + $0xc0] sm:$0xff] %v3204
      %3237 = vst [vmem:[%s694 + $0xc8] sm:$0xff] %v3205
      %3238 = vst [vmem:[%s694 + $0xd0] sm:$0xff] %v3206
      %3239 = vst [vmem:[%s694 + $0xd8] sm:$0xff] %v3207
      %3240 = vst [vmem:[%s694 + $0xe0] sm:$0xff] %v3208
      %3241 = vst [vmem:[%s694 + $0xe8] sm:$0xff] %v3209
      %3242 = vst [vmem:[%s694 + $0xf0] sm:$0xff] %v3210
      %3243 = vst [vmem:[%s694 + $0xf8] sm:$0xff] %v3211
      %v3244 = vld [vmem:[#allocation2] sm:$0xff]
      %v3245 = vld [vmem:[#allocation2 + $0x8] sm:$0xff]
      %v3246 = vld [vmem:[#allocation2 + $0x10] sm:$0xff]
      %v3247 = vld [vmem:[#allocation2 + $0x18] sm:$0xff]
      %v3248 = vld [vmem:[#allocation2 + $0x20] sm:$0xff]
      %v3249 = vld [vmem:[#allocation2 + $0x28] sm:$0xff]
      %v3250 = vld [vmem:[#allocation2 + $0x30] sm:$0xff]
      %v3251 = vld [vmem:[#allocation2 + $0x38] sm:$0xff]
      %v3252 = vld [vmem:[#allocation2 + $0x40] sm:$0xff]
      %v3253 = vld [vmem:[#allocation2 + $0x48] sm:$0xff]
      %v3254 = vld [vmem:[#allocation2 + $0x50] sm:$0xff]
      %v3255 = vld [vmem:[#allocation2 + $0x58] sm:$0xff]
      %v3256 = vld [vmem:[#allocation2 + $0x60] sm:$0xff]
      %v3257 = vld [vmem:[#allocation2 + $0x68] sm:$0xff]
      %v3258 = vld [vmem:[#allocation2 + $0x70] sm:$0xff]
      %v3259 = vld [vmem:[#allocation2 + $0x78] sm:$0xff]
      %v3260 = vpack.c.bf16 %v3057, %v3054
      %v3261 = vpack.c.bf16 %v3065, %v3062
      %v3262 = vpack.c.bf16 %v3073, %v3070
      %v3263 = vpack.c.bf16 %v3081, %v3078
      %v3264 = vpack.c.bf16 %v3089, %v3086
      %v3265 = vpack.c.bf16 %v3097, %v3094
      %v3266 = vpack.c.bf16 %v3105, %v3102
      %v3267 = vpack.c.bf16 %v3113, %v3110
      %v3268 = vpack.c.bf16 %v3121, %v3118
      %v3269 = vpack.c.bf16 %v3129, %v3126
      %v3270 = vpack.c.bf16 %v3137, %v3134
      %v3271 = vpack.c.bf16 %v3145, %v3142
      %v3272 = vpack.c.bf16 %v3153, %v3150
      %v3273 = vpack.c.bf16 %v3161, %v3158
      %v3274 = vpack.c.bf16 %v3169, %v3166
      %v3275 = vpack.c.bf16 %v3177, %v3174
      %3276 = vmatprep.subr.bf16.mxu0 0
      %3277 = vmatpush1.bf16.msra.mxu0 %v3267
      %3278 = vmatprep.subr.bf16.mxu0 0
      %3279 = vmatpush1.bf16.msra.mxu0 %v3266
      %3280 = vmatprep.subr.bf16.mxu0 0
      %3281 = vmatpush1.bf16.msra.mxu0 %v3265
      %3282 = vmatprep.subr.bf16.mxu0 0
      %3283 = vmatpush1.bf16.msra.mxu0 %v3264
      %3284 = vmatprep.subr.bf16.mxu0 0
      %3285 = vmatpush1.bf16.msra.mxu0 %v3263
      %3286 = vmatprep.subr.bf16.mxu0 0
      %3287 = vmatpush1.bf16.msra.mxu0 %v3262
      %3288 = vmatprep.subr.bf16.mxu0 0
      %3289 = vmatpush1.bf16.msra.mxu0 %v3261
      %3290 = vmatprep.subr.bf16.mxu0 0
      %3291 = vmatpush1.bf16.msra.mxu0 %v3260
      %3292 = vmatprep.subr.bf16.mxu0 0
      %3293 = vmatpush2.bf16.msra.mxu0 %v3275
      %3294 = vmatprep.subr.bf16.mxu0 0
      %3295 = vmatpush2.bf16.msra.mxu0 %v3274
      %3296 = vmatprep.subr.bf16.mxu0 0
      %3297 = vmatpush2.bf16.msra.mxu0 %v3273
      %3298 = vmatprep.subr.bf16.mxu0 0
      %3299 = vmatpush2.bf16.msra.mxu0 %v3272
      %3300 = vmatprep.subr.bf16.mxu0 0
      %3301 = vmatpush2.bf16.msra.mxu0 %v3271
      %3302 = vmatprep.subr.bf16.mxu0 0
      %3303 = vmatpush2.bf16.msra.mxu0 %v3270
      %3304 = vmatprep.subr.bf16.mxu0 0
      %3305 = vmatpush2.bf16.msra.mxu0 %v3269
      %3306 = vmatprep.subr.bf16.mxu0 0
      %3307 = vmatpush2.bf16.msra.mxu0 %v3268
      %3308 = vmatprep.mubr.bf16.mxu0 %v1499
      %3309 = vmatmul.mubr.bf16.gmra.mxu0 %v1498
      %v3310 = vpop.f32.mrf.mxu0
      %v3311 = vadd.f32 0.0, %v3310
      %v3312 = vpop.f32.mrf.mxu0
      %v3313 = vpop.f32.mrf.mxu0
      %v3314 = vadd.f32 0.0, %v3313
      %v3315 = vpop.f32.mrf.mxu0
      %3316 = vmatprep.mubr.bf16.mxu0 %v1501
      %3317 = vmatmul.mubr.bf16.gmra.mxu0 %v1500
      %v3318 = vpop.f32.mrf.mxu0
      %v3319 = vadd.f32 0.0, %v3318
      %v3320 = vpop.f32.mrf.mxu0
      %v3321 = vpop.f32.mrf.mxu0
      %v3322 = vadd.f32 0.0, %v3321
      %v3323 = vpop.f32.mrf.mxu0
      %3324 = vmatprep.mubr.bf16.mxu0 %v1503
      %3325 = vmatmul.mubr.bf16.gmra.mxu0 %v1502
      %v3326 = vpop.f32.mrf.mxu0
      %v3327 = vadd.f32 0.0, %v3326
      %v3328 = vpop.f32.mrf.mxu0
      %v3329 = vpop.f32.mrf.mxu0
      %v3330 = vadd.f32 0.0, %v3329
      %v3331 = vpop.f32.mrf.mxu0
      %3332 = vmatprep.mubr.bf16.mxu0 %v1505
      %3333 = vmatmul.mubr.bf16.gmra.mxu0 %v1504
      %v3334 = vpop.f32.mrf.mxu0
      %v3335 = vadd.f32 0.0, %v3334
      %v3336 = vpop.f32.mrf.mxu0
      %v3337 = vpop.f32.mrf.mxu0
      %v3338 = vadd.f32 0.0, %v3337
      %v3339 = vpop.f32.mrf.mxu0
      %3340 = vmatprep.mubr.bf16.mxu0 %v1507
      %3341 = vmatmul.mubr.bf16.gmra.mxu0 %v1506
      %v3342 = vpop.f32.mrf.mxu0
      %v3343 = vadd.f32 0.0, %v3342
      %v3344 = vpop.f32.mrf.mxu0
      %v3345 = vpop.f32.mrf.mxu0
      %v3346 = vadd.f32 0.0, %v3345
      %v3347 = vpop.f32.mrf.mxu0
      %3348 = vmatprep.mubr.bf16.mxu0 %v1509
      %3349 = vmatmul.mubr.bf16.gmra.mxu0 %v1508
      %v3350 = vpop.f32.mrf.mxu0
      %v3351 = vadd.f32 0.0, %v3350
      %v3352 = vpop.f32.mrf.mxu0
      %v3353 = vpop.f32.mrf.mxu0
      %v3354 = vadd.f32 0.0, %v3353
      %v3355 = vpop.f32.mrf.mxu0
      %3356 = vmatprep.mubr.bf16.mxu0 %v1511
      %3357 = vmatmul.mubr.bf16.gmra.mxu0 %v1510
      %v3358 = vpop.f32.mrf.mxu0
      %v3359 = vadd.f32 0.0, %v3358
      %v3360 = vpop.f32.mrf.mxu0
      %v3361 = vpop.f32.mrf.mxu0
      %v3362 = vadd.f32 0.0, %v3361
      %v3363 = vpop.f32.mrf.mxu0
      %3364 = vmatprep.mubr.bf16.mxu0 %v1513
      %3365 = vmatmul.mubr.bf16.gmra.mxu0 %v1512
      %v3366 = vpop.f32.mrf.mxu0
      %v3367 = vadd.f32 0.0, %v3366
      %v3368 = vpop.f32.mrf.mxu0
      %v3369 = vpop.f32.mrf.mxu0
      %v3370 = vadd.f32 0.0, %v3369
      %v3371 = vpop.f32.mrf.mxu0
      %3372 = vdwg.mxu0
      %v3373 = vadd.f32 %v3244, %v3311
      %v3374 = vadd.f32 %v3245, %v3314
      %v3375 = vadd.f32 %v3246, %v3319
      %v3376 = vadd.f32 %v3247, %v3322
      %v3377 = vadd.f32 %v3248, %v3327
      %v3378 = vadd.f32 %v3249, %v3330
      %v3379 = vadd.f32 %v3250, %v3335
      %v3380 = vadd.f32 %v3251, %v3338
      %v3381 = vadd.f32 %v3252, %v3343
      %v3382 = vadd.f32 %v3253, %v3346
      %v3383 = vadd.f32 %v3254, %v3351
      %v3384 = vadd.f32 %v3255, %v3354
      %v3385 = vadd.f32 %v3256, %v3359
      %v3386 = vadd.f32 %v3257, %v3362
      %v3387 = vadd.f32 %v3258, %v3367
      %v3388 = vadd.f32 %v3259, %v3370
      %3389 = vst [vmem:[#allocation2] sm:$0xff] %v3373
      %3390 = vst [vmem:[#allocation2 + $0x8] sm:$0xff] %v3374
      %3391 = vst [vmem:[#allocation2 + $0x10] sm:$0xff] %v3375
      %3392 = vst [vmem:[#allocation2 + $0x18] sm:$0xff] %v3376
      %3393 = vst [vmem:[#allocation2 + $0x20] sm:$0xff] %v3377
      %3394 = vst [vmem:[#allocation2 + $0x28] sm:$0xff] %v3378
      %3395 = vst [vmem:[#allocation2 + $0x30] sm:$0xff] %v3379
      %3396 = vst [vmem:[#allocation2 + $0x38] sm:$0xff] %v3380
      %3397 = vst [vmem:[#allocation2 + $0x40] sm:$0xff] %v3381
      %3398 = vst [vmem:[#allocation2 + $0x48] sm:$0xff] %v3382
      %3399 = vst [vmem:[#allocation2 + $0x50] sm:$0xff] %v3383
      %3400 = vst [vmem:[#allocation2 + $0x58] sm:$0xff] %v3384
      %3401 = vst [vmem:[#allocation2 + $0x60] sm:$0xff] %v3385
      %3402 = vst [vmem:[#allocation2 + $0x68] sm:$0xff] %v3386
      %3403 = vst [vmem:[#allocation2 + $0x70] sm:$0xff] %v3387
      %3404 = vst [vmem:[#allocation2 + $0x78] sm:$0xff] %v3388
      %p3405 = scmp.eq.s32.totalorder %s33, 2
      // Predicated region
      $region105: #{_egcn_block.1} parent=99 // pred_check
        %p3406 = pneg %p3405
      $region106: #{_egcn_block.1} parent=99 // pred_check_branch
        %3408 = sbr.rel (%p3406) target = $region108
      $region107: #{_egcn_block.1} parent=99 // pred_region
        %v3409 = vld [vmem:[%s0] sm:$0xff]
        %v3410 = vld [vmem:[%s0 + $0x8] sm:$0xff]
        %v3411 = vld [vmem:[%s0 + $0x10] sm:$0xff]
        %v3412 = vld [vmem:[%s0 + $0x18] sm:$0xff]
        %v3413 = vld [vmem:[%s0 + $0x20] sm:$0xff]
        %v3414 = vld [vmem:[%s0 + $0x28] sm:$0xff]
        %v3415 = vld [vmem:[%s0 + $0x30] sm:$0xff]
        %v3416 = vld [vmem:[%s0 + $0x38] sm:$0xff]
        %v3417 = vld [vmem:[%s0 + $0x40] sm:$0xff]
        %v3418 = vld [vmem:[%s0 + $0x48] sm:$0xff]
        %v3419 = vld [vmem:[%s0 + $0x50] sm:$0xff]
        %v3420 = vld [vmem:[%s0 + $0x58] sm:$0xff]
        %v3421 = vld [vmem:[%s0 + $0x60] sm:$0xff]
        %v3422 = vld [vmem:[%s0 + $0x68] sm:$0xff]
        %v3423 = vld [vmem:[%s0 + $0x70] sm:$0xff]
        %v3424 = vld [vmem:[%s0 + $0x78] sm:$0xff]
        %v3425 = vpack.c.bf16 %v3410, %v3409
        %v3426 = vpack.c.bf16 %v3412, %v3411
        %v3427 = vpack.c.bf16 %v3414, %v3413
        %v3428 = vpack.c.bf16 %v3416, %v3415
        %v3429 = vpack.c.bf16 %v3418, %v3417
        %v3430 = vpack.c.bf16 %v3420, %v3419
        %v3431 = vpack.c.bf16 %v3422, %v3421
        %v3432 = vpack.c.bf16 %v3424, %v3423
        %v3433 = vld [vmem:[#allocation2] sm:$0xff]
        %v3434 = vld [vmem:[#allocation2 + $0x8] sm:$0xff]
        %v3435 = vld [vmem:[#allocation2 + $0x10] sm:$0xff]
        %v3436 = vld [vmem:[#allocation2 + $0x18] sm:$0xff]
        %v3437 = vld [vmem:[#allocation2 + $0x20] sm:$0xff]
        %v3438 = vld [vmem:[#allocation2 + $0x28] sm:$0xff]
        %v3439 = vld [vmem:[#allocation2 + $0x30] sm:$0xff]
        %v3440 = vld [vmem:[#allocation2 + $0x38] sm:$0xff]
        %v3441 = vld [vmem:[#allocation2 + $0x40] sm:$0xff]
        %v3442 = vld [vmem:[#allocation2 + $0x48] sm:$0xff]
        %v3443 = vld [vmem:[#allocation2 + $0x50] sm:$0xff]
        %v3444 = vld [vmem:[#allocation2 + $0x58] sm:$0xff]
        %v3445 = vld [vmem:[#allocation2 + $0x60] sm:$0xff]
        %v3446 = vld [vmem:[#allocation2 + $0x68] sm:$0xff]
        %v3447 = vld [vmem:[#allocation2 + $0x70] sm:$0xff]
        %v3448 = vld [vmem:[#allocation2 + $0x78] sm:$0xff]
        %v3449 = vpack.c.bf16 %v3434, %v3433
        %v3450 = vpack.c.bf16 %v3436, %v3435
        %v3451 = vpack.c.bf16 %v3438, %v3437
        %v3452 = vpack.c.bf16 %v3440, %v3439
        %v3453 = vpack.c.bf16 %v3442, %v3441
        %v3454 = vpack.c.bf16 %v3444, %v3443
        %v3455 = vpack.c.bf16 %v3446, %v3445
        %v3456 = vpack.c.bf16 %v3448, %v3447
        %v3457 = vld [vmem:[%s12] sm:$0xf]
        %v3458 = vld [vmem:[%s12 + $0x4] sm:$0xf]
        %v3459 = vld [vmem:[%s12 + $0x8] sm:$0xf]
        %v3460 = vld [vmem:[%s12 + $0xc] sm:$0xf]
        %v3461 = vld [vmem:[%s12 + $0x10] sm:$0xf]
        %v3462 = vld [vmem:[%s12 + $0x14] sm:$0xf]
        %v3463 = vld [vmem:[%s12 + $0x18] sm:$0xf]
        %v3464 = vld [vmem:[%s12 + $0x1c] sm:$0xf]
        %v3465 = vld [vmem:[%s12 + $0x20] sm:$0xf]
        %v3466 = vld [vmem:[%s12 + $0x24] sm:$0xf]
        %v3467 = vld [vmem:[%s12 + $0x28] sm:$0xf]
        %v3468 = vld [vmem:[%s12 + $0x2c] sm:$0xf]
        %v3469 = vld [vmem:[%s12 + $0x30] sm:$0xf]
        %v3470 = vld [vmem:[%s12 + $0x34] sm:$0xf]
        %v3471 = vld [vmem:[%s12 + $0x38] sm:$0xf]
        %v3472 = vld [vmem:[%s12 + $0x3c] sm:$0xf]
        %v3473 = vld [vmem:[%s12 + $0x40] sm:$0xf]
        %v3474 = vld [vmem:[%s12 + $0x44] sm:$0xf]
        %v3475 = vld [vmem:[%s12 + $0x48] sm:$0xf]
        %v3476 = vld [vmem:[%s12 + $0x4c] sm:$0xf]
        %v3477 = vld [vmem:[%s12 + $0x50] sm:$0xf]
        %v3478 = vld [vmem:[%s12 + $0x54] sm:$0xf]
        %v3479 = vld [vmem:[%s12 + $0x58] sm:$0xf]
        %v3480 = vld [vmem:[%s12 + $0x5c] sm:$0xf]
        %v3481 = vld [vmem:[%s12 + $0x60] sm:$0xf]
        %v3482 = vld [vmem:[%s12 + $0x64] sm:$0xf]
        %v3483 = vld [vmem:[%s12 + $0x68] sm:$0xf]
        %v3484 = vld [vmem:[%s12 + $0x6c] sm:$0xf]
        %v3485 = vld [vmem:[%s12 + $0x70] sm:$0xf]
        %v3486 = vld [vmem:[%s12 + $0x74] sm:$0xf]
        %v3487 = vld [vmem:[%s12 + $0x78] sm:$0xf]
        %v3488 = vld [vmem:[%s12 + $0x7c] sm:$0xf]
        %v3505 = vunpack.c.l.b16 %v3473
        %v3506 = vunpack.c.l.b16 %v3474
        %v3507 = vunpack.c.l.b16 %v3475
        %v3508 = vunpack.c.l.b16 %v3476
        %v3509 = vunpack.c.l.b16 %v3477
        %v3510 = vunpack.c.l.b16 %v3478
        %v3511 = vunpack.c.l.b16 %v3479
        %v3512 = vunpack.c.l.b16 %v3480
        %v3513 = vunpack.c.l.b16 %v3481
        %v3514 = vunpack.c.l.b16 %v3482
        %v3515 = vunpack.c.l.b16 %v3483
        %v3516 = vunpack.c.l.b16 %v3484
        %v3517 = vunpack.c.l.b16 %v3485
        %v3518 = vunpack.c.l.b16 %v3486
        %v3519 = vunpack.c.l.b16 %v3487
        %v3520 = vunpack.c.l.b16 %v3488
        %v3521 = vpack.c.b16 %v3506, %v3505
        %v3522 = vpack.c.b16 %v3508, %v3507
        %v3523 = vpack.c.b16 %v3510, %v3509
        %v3524 = vpack.c.b16 %v3512, %v3511
        %v3525 = vpack.c.b16 %v3514, %v3513
        %v3526 = vpack.c.b16 %v3516, %v3515
        %v3527 = vpack.c.b16 %v3518, %v3517
        %v3528 = vpack.c.b16 %v3520, %v3519
        %3537 = vmatprep.subr.bf16.mxu0 0
        %3538 = vmatpush1.bf16.msra.mxu0 %v3528
        %3539 = vmatprep.subr.bf16.mxu0 0
        %3540 = vmatpush1.bf16.msra.mxu0 %v3527
        %3541 = vmatprep.subr.bf16.mxu0 0
        %3542 = vmatpush1.bf16.msra.mxu0 %v3526
        %3543 = vmatprep.subr.bf16.mxu0 0
        %3544 = vmatpush1.bf16.msra.mxu0 %v3525
        %3545 = vmatprep.subr.bf16.mxu0 0
        %3546 = vmatpush1.bf16.msra.mxu0 %v3524
        %3547 = vmatprep.subr.bf16.mxu0 0
        %3548 = vmatpush1.bf16.msra.mxu0 %v3523
        %3549 = vmatprep.subr.bf16.mxu0 0
        %3550 = vmatpush1.bf16.msra.mxu0 %v3522
        %3551 = vmatprep.subr.bf16.mxu0 0
        %3552 = vmatpush1.bf16.msra.mxu0 %v3521
        %3553 = vmatprep.subr.bf16.mxu0 0
        %3554 = vmatpush2.bf16.msra.mxu0 0
        %3555 = vmatprep.subr.bf16.mxu0 0
        %3556 = vmatpush2.bf16.msra.mxu0 0
        %3557 = vmatprep.subr.bf16.mxu0 0
        %3558 = vmatpush2.bf16.msra.mxu0 0
        %3559 = vmatprep.subr.bf16.mxu0 0
        %3560 = vmatpush2.bf16.msra.mxu0 0
        %3561 = vmatprep.subr.bf16.mxu0 0
        %3562 = vmatpush2.bf16.msra.mxu0 0
        %3563 = vmatprep.subr.bf16.mxu0 0
        %3564 = vmatpush2.bf16.msra.mxu0 0
        %3565 = vmatprep.subr.bf16.mxu0 0
        %3566 = vmatpush2.bf16.msra.mxu0 0
        %3567 = vmatprep.subr.bf16.mxu0 0
        %3568 = vmatpush2.bf16.msra.mxu0 0
        %3569 = vmatprep.mubr.bf16.mxu0 0
        %3570 = vmatmul.mubr.bf16.gmra.mxu0 %v3449
        %v3571 = vpop.f32.mrf.mxu0
        %v3572 = vadd.f32 0.0, %v3571
        %v3573 = vpop.f32.mrf.mxu0
        %v3574 = vpop.f32.mrf.mxu0
        %v3575 = vadd.f32 0.0, %v3574
        %v3576 = vpop.f32.mrf.mxu0
        %3577 = vmatprep.mubr.bf16.mxu0 0
        %3578 = vmatmul.mubr.bf16.gmra.mxu0 %v3450
        %v3579 = vpop.f32.mrf.mxu0
        %v3580 = vadd.f32 0.0, %v3579
        %v3581 = vpop.f32.mrf.mxu0
        %v3582 = vpop.f32.mrf.mxu0
        %v3583 = vadd.f32 0.0, %v3582
        %v3584 = vpop.f32.mrf.mxu0
        %3585 = vmatprep.mubr.bf16.mxu0 0
        %3586 = vmatmul.mubr.bf16.gmra.mxu0 %v3451
        %v3587 = vpop.f32.mrf.mxu0
        %v3588 = vadd.f32 0.0, %v3587
        %v3589 = vpop.f32.mrf.mxu0
        %v3590 = vpop.f32.mrf.mxu0
        %v3591 = vadd.f32 0.0, %v3590
        %v3592 = vpop.f32.mrf.mxu0
        %3593 = vmatprep.mubr.bf16.mxu0 0
        %3594 = vmatmul.mubr.bf16.gmra.mxu0 %v3452
        %v3595 = vpop.f32.mrf.mxu0
        %v3596 = vadd.f32 0.0, %v3595
        %v3597 = vpop.f32.mrf.mxu0
        %v3598 = vpop.f32.mrf.mxu0
        %v3599 = vadd.f32 0.0, %v3598
        %v3600 = vpop.f32.mrf.mxu0
        %3601 = vmatprep.mubr.bf16.mxu0 0
        %3602 = vmatmul.mubr.bf16.gmra.mxu0 %v3453
        %v3603 = vpop.f32.mrf.mxu0
        %v3604 = vadd.f32 0.0, %v3603
        %v3605 = vpop.f32.mrf.mxu0
        %v3606 = vpop.f32.mrf.mxu0
        %v3607 = vadd.f32 0.0, %v3606
        %v3608 = vpop.f32.mrf.mxu0
        %3609 = vmatprep.mubr.bf16.mxu0 0
        %3610 = vmatmul.mubr.bf16.gmra.mxu0 %v3454
        %v3611 = vpop.f32.mrf.mxu0
        %v3612 = vadd.f32 0.0, %v3611
        %v3613 = vpop.f32.mrf.mxu0
        %v3614 = vpop.f32.mrf.mxu0
        %v3615 = vadd.f32 0.0, %v3614
        %v3616 = vpop.f32.mrf.mxu0
        %3617 = vmatprep.mubr.bf16.mxu0 0
        %3618 = vmatmul.mubr.bf16.gmra.mxu0 %v3455
        %v3619 = vpop.f32.mrf.mxu0
        %v3620 = vadd.f32 0.0, %v3619
        %v3621 = vpop.f32.mrf.mxu0
        %v3622 = vpop.f32.mrf.mxu0
        %v3623 = vadd.f32 0.0, %v3622
        %v3624 = vpop.f32.mrf.mxu0
        %3625 = vmatprep.mubr.bf16.mxu0 0
        %3626 = vmatmul.mubr.bf16.gmra.mxu0 %v3456
        %v3627 = vpop.f32.mrf.mxu0
        %v3628 = vadd.f32 0.0, %v3627
        %v3629 = vpop.f32.mrf.mxu0
        %v3630 = vpop.f32.mrf.mxu0
        %v3631 = vadd.f32 0.0, %v3630
        %v3632 = vpop.f32.mrf.mxu0
        %3633 = vdwg.mxu0
        %v3650 = vunpack.c.l.b16 %v3457
        %v3651 = vunpack.c.l.b16 %v3458
        %v3652 = vunpack.c.l.b16 %v3459
        %v3653 = vunpack.c.l.b16 %v3460
        %v3654 = vunpack.c.l.b16 %v3461
        %v3655 = vunpack.c.l.b16 %v3462
        %v3656 = vunpack.c.l.b16 %v3463
        %v3657 = vunpack.c.l.b16 %v3464
        %v3658 = vunpack.c.l.b16 %v3465
        %v3659 = vunpack.c.l.b16 %v3466
        %v3660 = vunpack.c.l.b16 %v3467
        %v3661 = vunpack.c.l.b16 %v3468
        %v3662 = vunpack.c.l.b16 %v3469
        %v3663 = vunpack.c.l.b16 %v3470
        %v3664 = vunpack.c.l.b16 %v3471
        %v3665 = vunpack.c.l.b16 %v3472
        %v3666 = vpack.c.b16 %v3651, %v3650
        %v3667 = vpack.c.b16 %v3653, %v3652
        %v3668 = vpack.c.b16 %v3655, %v3654
        %v3669 = vpack.c.b16 %v3657, %v3656
        %v3670 = vpack.c.b16 %v3659, %v3658
        %v3671 = vpack.c.b16 %v3661, %v3660
        %v3672 = vpack.c.b16 %v3663, %v3662
        %v3673 = vpack.c.b16 %v3665, %v3664
        %3682 = vmatprep.subr.bf16.mxu0 0
        %3683 = vmatpush1.bf16.msra.mxu0 %v3673
        %3684 = vmatprep.subr.bf16.mxu0 0
        %3685 = vmatpush1.bf16.msra.mxu0 %v3672
        %3686 = vmatprep.subr.bf16.mxu0 0
        %3687 = vmatpush1.bf16.msra.mxu0 %v3671
        %3688 = vmatprep.subr.bf16.mxu0 0
        %3689 = vmatpush1.bf16.msra.mxu0 %v3670
        %3690 = vmatprep.subr.bf16.mxu0 0
        %3691 = vmatpush1.bf16.msra.mxu0 %v3669
        %3692 = vmatprep.subr.bf16.mxu0 0
        %3693 = vmatpush1.bf16.msra.mxu0 %v3668
        %3694 = vmatprep.subr.bf16.mxu0 0
        %3695 = vmatpush1.bf16.msra.mxu0 %v3667
        %3696 = vmatprep.subr.bf16.mxu0 0
        %3697 = vmatpush1.bf16.msra.mxu0 %v3666
        %3698 = vmatprep.subr.bf16.mxu0 0
        %3699 = vmatpush2.bf16.msra.mxu0 0
        %3700 = vmatprep.subr.bf16.mxu0 0
        %3701 = vmatpush2.bf16.msra.mxu0 0
        %3702 = vmatprep.subr.bf16.mxu0 0
        %3703 = vmatpush2.bf16.msra.mxu0 0
        %3704 = vmatprep.subr.bf16.mxu0 0
        %3705 = vmatpush2.bf16.msra.mxu0 0
        %3706 = vmatprep.subr.bf16.mxu0 0
        %3707 = vmatpush2.bf16.msra.mxu0 0
        %3708 = vmatprep.subr.bf16.mxu0 0
        %3709 = vmatpush2.bf16.msra.mxu0 0
        %3710 = vmatprep.subr.bf16.mxu0 0
        %3711 = vmatpush2.bf16.msra.mxu0 0
        %3712 = vmatprep.subr.bf16.mxu0 0
        %3713 = vmatpush2.bf16.msra.mxu0 0
        %3714 = vmatprep.mubr.bf16.mxu0 0
        %3715 = vmatmul.mubr.bf16.gmra.mxu0 %v3425
        %v3716 = vpop.f32.mrf.mxu0
        %v3717 = vadd.f32 %v3572, %v3716
        %v3718 = vpop.f32.mrf.mxu0
        %v3719 = vpop.f32.mrf.mxu0
        %v3720 = vadd.f32 %v3575, %v3719
        %v3721 = vpop.f32.mrf.mxu0
        %3722 = vmatprep.mubr.bf16.mxu0 0
        %3723 = vmatmul.mubr.bf16.gmra.mxu0 %v3426
        %v3724 = vpop.f32.mrf.mxu0
        %v3725 = vadd.f32 %v3580, %v3724
        %v3726 = vpop.f32.mrf.mxu0
        %v3727 = vpop.f32.mrf.mxu0
        %v3728 = vadd.f32 %v3583, %v3727
        %v3729 = vpop.f32.mrf.mxu0
        %3730 = vmatprep.mubr.bf16.mxu0 0
        %3731 = vmatmul.mubr.bf16.gmra.mxu0 %v3427
        %v3732 = vpop.f32.mrf.mxu0
        %v3733 = vadd.f32 %v3588, %v3732
        %v3734 = vpop.f32.mrf.mxu0
        %v3735 = vpop.f32.mrf.mxu0
        %v3736 = vadd.f32 %v3591, %v3735
        %v3737 = vpop.f32.mrf.mxu0
        %3738 = vmatprep.mubr.bf16.mxu0 0
        %3739 = vmatmul.mubr.bf16.gmra.mxu0 %v3428
        %v3740 = vpop.f32.mrf.mxu0
        %v3741 = vadd.f32 %v3596, %v3740
        %v3742 = vpop.f32.mrf.mxu0
        %v3743 = vpop.f32.mrf.mxu0
        %v3744 = vadd.f32 %v3599, %v3743
        %v3745 = vpop.f32.mrf.mxu0
        %3746 = vmatprep.mubr.bf16.mxu0 0
        %3747 = vmatmul.mubr.bf16.gmra.mxu0 %v3429
        %v3748 = vpop.f32.mrf.mxu0
        %v3749 = vadd.f32 %v3604, %v3748
        %v3750 = vpop.f32.mrf.mxu0
        %v3751 = vpop.f32.mrf.mxu0
        %v3752 = vadd.f32 %v3607, %v3751
        %v3753 = vpop.f32.mrf.mxu0
        %3754 = vmatprep.mubr.bf16.mxu0 0
        %3755 = vmatmul.mubr.bf16.gmra.mxu0 %v3430
        %v3756 = vpop.f32.mrf.mxu0
        %v3757 = vadd.f32 %v3612, %v3756
        %v3758 = vpop.f32.mrf.mxu0
        %v3759 = vpop.f32.mrf.mxu0
        %v3760 = vadd.f32 %v3615, %v3759
        %v3761 = vpop.f32.mrf.mxu0
        %3762 = vmatprep.mubr.bf16.mxu0 0
        %3763 = vmatmul.mubr.bf16.gmra.mxu0 %v3431
        %v3764 = vpop.f32.mrf.mxu0
        %v3765 = vadd.f32 %v3620, %v3764
        %v3766 = vpop.f32.mrf.mxu0
        %v3767 = vpop.f32.mrf.mxu0
        %v3768 = vadd.f32 %v3623, %v3767
        %v3769 = vpop.f32.mrf.mxu0
        %3770 = vmatprep.mubr.bf16.mxu0 0
        %3771 = vmatmul.mubr.bf16.gmra.mxu0 %v3432
        %v3772 = vpop.f32.mrf.mxu0
        %v3773 = vadd.f32 %v3628, %v3772
        %v3774 = vpop.f32.mrf.mxu0
        %v3775 = vpop.f32.mrf.mxu0
        %v3776 = vadd.f32 %v3631, %v3775
        %v3777 = vpop.f32.mrf.mxu0
        %3778 = vdwg.mxu0
        %v3779 = vld [vmem:[%s13] sm:$0x1]
        %v3781 = vlaneseq
        %v3782 = vshrl.u32 %v3781, 7
        %v3783 = vsub.s32 0, %v3782
        %v3784 = vrot.slane %v3779, %v3783
        %v3786 = vadd.f32 %v3717, %v3784
        %v3787 = vadd.f32 %v3720, %v3784
        %v3788 = vadd.f32 %v3725, %v3784
        %v3789 = vadd.f32 %v3728, %v3784
        %v3790 = vadd.f32 %v3733, %v3784
        %v3791 = vadd.f32 %v3736, %v3784
        %v3792 = vadd.f32 %v3741, %v3784
        %v3793 = vadd.f32 %v3744, %v3784
        %v3794 = vadd.f32 %v3749, %v3784
        %v3795 = vadd.f32 %v3752, %v3784
        %v3796 = vadd.f32 %v3757, %v3784
        %v3797 = vadd.f32 %v3760, %v3784
        %v3798 = vadd.f32 %v3765, %v3784
        %v3799 = vadd.f32 %v3768, %v3784
        %v3800 = vadd.f32 %v3773, %v3784
        %v3801 = vadd.f32 %v3776, %v3784
        %v3802 = vmax.f32 %v3786, 0.0
        %v3803 = vmax.f32 %v3787, 0.0
        %v3804 = vmax.f32 %v3788, 0.0
        %v3805 = vmax.f32 %v3789, 0.0
        %v3806 = vmax.f32 %v3790, 0.0
        %v3807 = vmax.f32 %v3791, 0.0
        %v3808 = vmax.f32 %v3792, 0.0
        %v3809 = vmax.f32 %v3793, 0.0
        %v3810 = vmax.f32 %v3794, 0.0
        %v3811 = vmax.f32 %v3795, 0.0
        %v3812 = vmax.f32 %v3796, 0.0
        %v3813 = vmax.f32 %v3797, 0.0
        %v3814 = vmax.f32 %v3798, 0.0
        %v3815 = vmax.f32 %v3799, 0.0
        %v3816 = vmax.f32 %v3800, 0.0
        %v3817 = vmax.f32 %v3801, 0.0
        %v3818 = vpack.c.bf16 %v3803, %v3802
        %v3819 = vpack.c.bf16 %v3805, %v3804
        %v3820 = vpack.c.bf16 %v3807, %v3806
        %v3821 = vpack.c.bf16 %v3809, %v3808
        %v3822 = vpack.c.bf16 %v3811, %v3810
        %v3823 = vpack.c.bf16 %v3813, %v3812
        %v3824 = vpack.c.bf16 %v3815, %v3814
        %v3825 = vpack.c.bf16 %v3817, %v3816
        %v3826 = vld [vmem:[%s14] sm:$0xf]
        %v3827 = vld [vmem:[%s14 + $0x4] sm:$0xf]
        %v3828 = vld [vmem:[%s14 + $0x8] sm:$0xf]
        %v3829 = vld [vmem:[%s14 + $0xc] sm:$0xf]
        %v3830 = vld [vmem:[%s14 + $0x10] sm:$0xf]
        %v3831 = vld [vmem:[%s14 + $0x14] sm:$0xf]
        %v3832 = vld [vmem:[%s14 + $0x18] sm:$0xf]
        %v3833 = vld [vmem:[%s14 + $0x1c] sm:$0xf]
        %v3834 = vld [vmem:[%s14 + $0x20] sm:$0xf]
        %v3835 = vld [vmem:[%s14 + $0x24] sm:$0xf]
        %v3836 = vld [vmem:[%s14 + $0x28] sm:$0xf]
        %v3837 = vld [vmem:[%s14 + $0x2c] sm:$0xf]
        %v3838 = vld [vmem:[%s14 + $0x30] sm:$0xf]
        %v3839 = vld [vmem:[%s14 + $0x34] sm:$0xf]
        %v3840 = vld [vmem:[%s14 + $0x38] sm:$0xf]
        %v3841 = vld [vmem:[%s14 + $0x3c] sm:$0xf]
        %v3842 = vld [vmem:[%s15] sm:$0x1]
        %v3844 = vlaneseq
        %v3845 = vshrl.u32 %v3844, 7
        %v3846 = vsub.s32 0, %v3845
        %v3847 = vrot.slane %v3842, %v3846
        %v3865 = vunpack.c.l.b16 %v3826
        %v3866 = vunpack.c.l.b16 %v3827
        %v3867 = vunpack.c.l.b16 %v3828
        %v3868 = vunpack.c.l.b16 %v3829
        %v3869 = vunpack.c.l.b16 %v3830
        %v3870 = vunpack.c.l.b16 %v3831
        %v3871 = vunpack.c.l.b16 %v3832
        %v3872 = vunpack.c.l.b16 %v3833
        %v3873 = vunpack.c.l.b16 %v3834
        %v3874 = vunpack.c.l.b16 %v3835
        %v3875 = vunpack.c.l.b16 %v3836
        %v3876 = vunpack.c.l.b16 %v3837
        %v3877 = vunpack.c.l.b16 %v3838
        %v3878 = vunpack.c.l.b16 %v3839
        %v3879 = vunpack.c.l.b16 %v3840
        %v3880 = vunpack.c.l.b16 %v3841
        %v3881 = vpack.c.b16 %v3866, %v3865
        %v3882 = vpack.c.b16 %v3868, %v3867
        %v3883 = vpack.c.b16 %v3870, %v3869
        %v3884 = vpack.c.b16 %v3872, %v3871
        %v3885 = vpack.c.b16 %v3874, %v3873
        %v3886 = vpack.c.b16 %v3876, %v3875
        %v3887 = vpack.c.b16 %v3878, %v3877
        %v3888 = vpack.c.b16 %v3880, %v3879
        %3897 = vmatprep.subr.bf16.mxu0 0
        %3898 = vmatpush1.bf16.msra.mxu0 %v3888
        %3899 = vmatprep.subr.bf16.mxu0 0
        %3900 = vmatpush1.bf16.msra.mxu0 %v3887
        %3901 = vmatprep.subr.bf16.mxu0 0
        %3902 = vmatpush1.bf16.msra.mxu0 %v3886
        %3903 = vmatprep.subr.bf16.mxu0 0
        %3904 = vmatpush1.bf16.msra.mxu0 %v3885
        %3905 = vmatprep.subr.bf16.mxu0 0
        %3906 = vmatpush1.bf16.msra.mxu0 %v3884
        %3907 = vmatprep.subr.bf16.mxu0 0
        %3908 = vmatpush1.bf16.msra.mxu0 %v3883
        %3909 = vmatprep.subr.bf16.mxu0 0
        %3910 = vmatpush1.bf16.msra.mxu0 %v3882
        %3911 = vmatprep.subr.bf16.mxu0 0
        %3912 = vmatpush1.bf16.msra.mxu0 %v3881
        %3913 = vmatprep.subr.bf16.mxu0 0
        %3914 = vmatpush2.bf16.msra.mxu0 0
        %3915 = vmatprep.subr.bf16.mxu0 0
        %3916 = vmatpush2.bf16.msra.mxu0 0
        %3917 = vmatprep.subr.bf16.mxu0 0
        %3918 = vmatpush2.bf16.msra.mxu0 0
        %3919 = vmatprep.subr.bf16.mxu0 0
        %3920 = vmatpush2.bf16.msra.mxu0 0
        %3921 = vmatprep.subr.bf16.mxu0 0
        %3922 = vmatpush2.bf16.msra.mxu0 0
        %3923 = vmatprep.subr.bf16.mxu0 0
        %3924 = vmatpush2.bf16.msra.mxu0 0
        %3925 = vmatprep.subr.bf16.mxu0 0
        %3926 = vmatpush2.bf16.msra.mxu0 0
        %3927 = vmatprep.subr.bf16.mxu0 0
        %3928 = vmatpush2.bf16.msra.mxu0 0
        %3929 = vmatprep.mubr.bf16.mxu0 0
        %3930 = vmatmul.mubr.bf16.gmra.mxu0 %v3818
        %v3931 = vpop.f32.mrf.mxu0
        %v3932 = vadd.f32 %v3847, %v3931
        %v3933 = vpop.f32.mrf.mxu0
        %v3934 = vpop.f32.mrf.mxu0
        %v3935 = vadd.f32 %v3847, %v3934
        %v3936 = vpop.f32.mrf.mxu0
        %3937 = vmatprep.mubr.bf16.mxu0 0
        %3938 = vmatmul.mubr.bf16.gmra.mxu0 %v3819
        %v3939 = vpop.f32.mrf.mxu0
        %v3940 = vadd.f32 %v3847, %v3939
        %v3941 = vpop.f32.mrf.mxu0
        %v3942 = vpop.f32.mrf.mxu0
        %v3943 = vadd.f32 %v3847, %v3942
        %v3944 = vpop.f32.mrf.mxu0
        %3945 = vmatprep.mubr.bf16.mxu0 0
        %3946 = vmatmul.mubr.bf16.gmra.mxu0 %v3820
        %v3947 = vpop.f32.mrf.mxu0
        %v3948 = vadd.f32 %v3847, %v3947
        %v3949 = vpop.f32.mrf.mxu0
        %v3950 = vpop.f32.mrf.mxu0
        %v3951 = vadd.f32 %v3847, %v3950
        %v3952 = vpop.f32.mrf.mxu0
        %3953 = vmatprep.mubr.bf16.mxu0 0
        %3954 = vmatmul.mubr.bf16.gmra.mxu0 %v3821
        %v3955 = vpop.f32.mrf.mxu0
        %v3956 = vadd.f32 %v3847, %v3955
        %v3957 = vpop.f32.mrf.mxu0
        %v3958 = vpop.f32.mrf.mxu0
        %v3959 = vadd.f32 %v3847, %v3958
        %v3960 = vpop.f32.mrf.mxu0
        %3961 = vmatprep.mubr.bf16.mxu0 0
        %3962 = vmatmul.mubr.bf16.gmra.mxu0 %v3822
        %v3963 = vpop.f32.mrf.mxu0
        %v3964 = vadd.f32 %v3847, %v3963
        %v3965 = vpop.f32.mrf.mxu0
        %v3966 = vpop.f32.mrf.mxu0
        %v3967 = vadd.f32 %v3847, %v3966
        %v3968 = vpop.f32.mrf.mxu0
        %3969 = vmatprep.mubr.bf16.mxu0 0
        %3970 = vmatmul.mubr.bf16.gmra.mxu0 %v3823
        %v3971 = vpop.f32.mrf.mxu0
        %v3972 = vadd.f32 %v3847, %v3971
        %v3973 = vpop.f32.mrf.mxu0
        %v3974 = vpop.f32.mrf.mxu0
        %v3975 = vadd.f32 %v3847, %v3974
        %v3976 = vpop.f32.mrf.mxu0
        %3977 = vmatprep.mubr.bf16.mxu0 0
        %3978 = vmatmul.mubr.bf16.gmra.mxu0 %v3824
        %v3979 = vpop.f32.mrf.mxu0
        %v3980 = vadd.f32 %v3847, %v3979
        %v3981 = vpop.f32.mrf.mxu0
        %v3982 = vpop.f32.mrf.mxu0
        %v3983 = vadd.f32 %v3847, %v3982
        %v3984 = vpop.f32.mrf.mxu0
        %3985 = vmatprep.mubr.bf16.mxu0 0
        %3986 = vmatmul.mubr.bf16.gmra.mxu0 %v3825
        %v3987 = vpop.f32.mrf.mxu0
        %v3988 = vadd.f32 %v3847, %v3987
        %v3989 = vpop.f32.mrf.mxu0
        %v3990 = vpop.f32.mrf.mxu0
        %v3991 = vadd.f32 %v3847, %v3990
        %v3992 = vpop.f32.mrf.mxu0
        %3993 = vdwg.mxu0
        %v3994 = vmax.f32 %v3932, 0.0
        %v3995 = vmax.f32 %v3935, 0.0
        %v3996 = vmax.f32 %v3940, 0.0
        %v3997 = vmax.f32 %v3943, 0.0
        %v3998 = vmax.f32 %v3948, 0.0
        %v3999 = vmax.f32 %v3951, 0.0
        %v4000 = vmax.f32 %v3956, 0.0
        %v4001 = vmax.f32 %v3959, 0.0
        %v4002 = vmax.f32 %v3964, 0.0
        %v4003 = vmax.f32 %v3967, 0.0
        %v4004 = vmax.f32 %v3972, 0.0
        %v4005 = vmax.f32 %v3975, 0.0
        %v4006 = vmax.f32 %v3980, 0.0
        %v4007 = vmax.f32 %v3983, 0.0
        %v4008 = vmax.f32 %v3988, 0.0
        %v4009 = vmax.f32 %v3991, 0.0
        %v4010 = vpack.c.bf16 %v3995, %v3994
        %v4011 = vpack.c.bf16 %v3997, %v3996
        %v4012 = vpack.c.bf16 %v3999, %v3998
        %v4013 = vpack.c.bf16 %v4001, %v4000
        %v4014 = vpack.c.bf16 %v4003, %v4002
        %v4015 = vpack.c.bf16 %v4005, %v4004
        %v4016 = vpack.c.bf16 %v4007, %v4006
        %v4017 = vpack.c.bf16 %v4009, %v4008
        %v4018 = vld [vmem:[%s16] sm:$0xf]
        %v4019 = vld [vmem:[%s16 + $0x4] sm:$0xf]
        %v4020 = vld [vmem:[%s16 + $0x8] sm:$0xf]
        %v4021 = vld [vmem:[%s16 + $0xc] sm:$0xf]
        %v4022 = vld [vmem:[%s16 + $0x10] sm:$0xf]
        %v4023 = vld [vmem:[%s16 + $0x14] sm:$0xf]
        %v4024 = vld [vmem:[%s16 + $0x18] sm:$0xf]
        %v4025 = vld [vmem:[%s16 + $0x1c] sm:$0xf]
        %v4026 = vld [vmem:[%s16 + $0x20] sm:$0xf]
        %v4027 = vld [vmem:[%s16 + $0x24] sm:$0xf]
        %v4028 = vld [vmem:[%s16 + $0x28] sm:$0xf]
        %v4029 = vld [vmem:[%s16 + $0x2c] sm:$0xf]
        %v4030 = vld [vmem:[%s16 + $0x30] sm:$0xf]
        %v4031 = vld [vmem:[%s16 + $0x34] sm:$0xf]
        %v4032 = vld [vmem:[%s16 + $0x38] sm:$0xf]
        %v4033 = vld [vmem:[%s16 + $0x3c] sm:$0xf]
        %v4034 = vld [vmem:[%s17] sm:$0x1]
        %v4036 = vlaneseq
        %v4037 = vshrl.u32 %v4036, 7
        %v4038 = vsub.s32 0, %v4037
        %v4039 = vrot.slane %v4034, %v4038
        %v4057 = vunpack.c.l.b16 %v4018
        %v4058 = vunpack.c.l.b16 %v4019
        %v4059 = vunpack.c.l.b16 %v4020
        %v4060 = vunpack.c.l.b16 %v4021
        %v4061 = vunpack.c.l.b16 %v4022
        %v4062 = vunpack.c.l.b16 %v4023
        %v4063 = vunpack.c.l.b16 %v4024
        %v4064 = vunpack.c.l.b16 %v4025
        %v4065 = vunpack.c.l.b16 %v4026
        %v4066 = vunpack.c.l.b16 %v4027
        %v4067 = vunpack.c.l.b16 %v4028
        %v4068 = vunpack.c.l.b16 %v4029
        %v4069 = vunpack.c.l.b16 %v4030
        %v4070 = vunpack.c.l.b16 %v4031
        %v4071 = vunpack.c.l.b16 %v4032
        %v4072 = vunpack.c.l.b16 %v4033
        %v4073 = vpack.c.b16 %v4058, %v4057
        %v4074 = vpack.c.b16 %v4060, %v4059
        %v4075 = vpack.c.b16 %v4062, %v4061
        %v4076 = vpack.c.b16 %v4064, %v4063
        %v4077 = vpack.c.b16 %v4066, %v4065
        %v4078 = vpack.c.b16 %v4068, %v4067
        %v4079 = vpack.c.b16 %v4070, %v4069
        %v4080 = vpack.c.b16 %v4072, %v4071
        %4089 = vmatprep.subr.bf16.mxu0 0
        %4090 = vmatpush1.bf16.msra.mxu0 %v4080
        %4091 = vmatprep.subr.bf16.mxu0 0
        %4092 = vmatpush1.bf16.msra.mxu0 %v4079
        %4093 = vmatprep.subr.bf16.mxu0 0
        %4094 = vmatpush1.bf16.msra.mxu0 %v4078
        %4095 = vmatprep.subr.bf16.mxu0 0
        %4096 = vmatpush1.bf16.msra.mxu0 %v4077
        %4097 = vmatprep.subr.bf16.mxu0 0
        %4098 = vmatpush1.bf16.msra.mxu0 %v4076
        %4099 = vmatprep.subr.bf16.mxu0 0
        %4100 = vmatpush1.bf16.msra.mxu0 %v4075
        %4101 = vmatprep.subr.bf16.mxu0 0
        %4102 = vmatpush1.bf16.msra.mxu0 %v4074
        %4103 = vmatprep.subr.bf16.mxu0 0
        %4104 = vmatpush1.bf16.msra.mxu0 %v4073
        %4105 = vmatprep.subr.bf16.mxu0 0
        %4106 = vmatpush2.bf16.msra.mxu0 0
        %4107 = vmatprep.subr.bf16.mxu0 0
        %4108 = vmatpush2.bf16.msra.mxu0 0
        %4109 = vmatprep.subr.bf16.mxu0 0
        %4110 = vmatpush2.bf16.msra.mxu0 0
        %4111 = vmatprep.subr.bf16.mxu0 0
        %4112 = vmatpush2.bf16.msra.mxu0 0
        %4113 = vmatprep.subr.bf16.mxu0 0
        %4114 = vmatpush2.bf16.msra.mxu0 0
        %4115 = vmatprep.subr.bf16.mxu0 0
        %4116 = vmatpush2.bf16.msra.mxu0 0
        %4117 = vmatprep.subr.bf16.mxu0 0
        %4118 = vmatpush2.bf16.msra.mxu0 0
        %4119 = vmatprep.subr.bf16.mxu0 0
        %4120 = vmatpush2.bf16.msra.mxu0 0
        %4121 = vmatprep.mubr.bf16.mxu0 0
        %4122 = vmatmul.mubr.bf16.gmra.mxu0 %v4010
        %v4123 = vpop.f32.mrf.mxu0
        %v4124 = vadd.f32 %v4039, %v4123
        %v4125 = vpop.f32.mrf.mxu0
        %v4126 = vpop.f32.mrf.mxu0
        %v4127 = vadd.f32 %v4039, %v4126
        %v4128 = vpop.f32.mrf.mxu0
        %4129 = vmatprep.mubr.bf16.mxu0 0
        %4130 = vmatmul.mubr.bf16.gmra.mxu0 %v4011
        %v4131 = vpop.f32.mrf.mxu0
        %v4132 = vadd.f32 %v4039, %v4131
        %v4133 = vpop.f32.mrf.mxu0
        %v4134 = vpop.f32.mrf.mxu0
        %v4135 = vadd.f32 %v4039, %v4134
        %v4136 = vpop.f32.mrf.mxu0
        %4137 = vmatprep.mubr.bf16.mxu0 0
        %4138 = vmatmul.mubr.bf16.gmra.mxu0 %v4012
        %v4139 = vpop.f32.mrf.mxu0
        %v4140 = vadd.f32 %v4039, %v4139
        %v4141 = vpop.f32.mrf.mxu0
        %v4142 = vpop.f32.mrf.mxu0
        %v4143 = vadd.f32 %v4039, %v4142
        %v4144 = vpop.f32.mrf.mxu0
        %4145 = vmatprep.mubr.bf16.mxu0 0
        %4146 = vmatmul.mubr.bf16.gmra.mxu0 %v4013
        %v4147 = vpop.f32.mrf.mxu0
        %v4148 = vadd.f32 %v4039, %v4147
        %v4149 = vpop.f32.mrf.mxu0
        %v4150 = vpop.f32.mrf.mxu0
        %v4151 = vadd.f32 %v4039, %v4150
        %v4152 = vpop.f32.mrf.mxu0
        %4153 = vmatprep.mubr.bf16.mxu0 0
        %4154 = vmatmul.mubr.bf16.gmra.mxu0 %v4014
        %v4155 = vpop.f32.mrf.mxu0
        %v4156 = vadd.f32 %v4039, %v4155
        %v4157 = vpop.f32.mrf.mxu0
        %v4158 = vpop.f32.mrf.mxu0
        %v4159 = vadd.f32 %v4039, %v4158
        %v4160 = vpop.f32.mrf.mxu0
        %4161 = vmatprep.mubr.bf16.mxu0 0
        %4162 = vmatmul.mubr.bf16.gmra.mxu0 %v4015
        %v4163 = vpop.f32.mrf.mxu0
        %v4164 = vadd.f32 %v4039, %v4163
        %v4165 = vpop.f32.mrf.mxu0
        %v4166 = vpop.f32.mrf.mxu0
        %v4167 = vadd.f32 %v4039, %v4166
        %v4168 = vpop.f32.mrf.mxu0
        %4169 = vmatprep.mubr.bf16.mxu0 0
        %4170 = vmatmul.mubr.bf16.gmra.mxu0 %v4016
        %v4171 = vpop.f32.mrf.mxu0
        %v4172 = vadd.f32 %v4039, %v4171
        %v4173 = vpop.f32.mrf.mxu0
        %v4174 = vpop.f32.mrf.mxu0
        %v4175 = vadd.f32 %v4039, %v4174
        %v4176 = vpop.f32.mrf.mxu0
        %4177 = vmatprep.mubr.bf16.mxu0 0
        %4178 = vmatmul.mubr.bf16.gmra.mxu0 %v4017
        %v4179 = vpop.f32.mrf.mxu0
        %v4180 = vadd.f32 %v4039, %v4179
        %v4181 = vpop.f32.mrf.mxu0
        %v4182 = vpop.f32.mrf.mxu0
        %v4183 = vadd.f32 %v4039, %v4182
        %v4184 = vpop.f32.mrf.mxu0
        %4185 = vdwg.mxu0
        %v4186 = vmax.f32 %v4124, 0.0
        %v4187 = vmax.f32 %v4127, 0.0
        %v4188 = vmax.f32 %v4132, 0.0
        %v4189 = vmax.f32 %v4135, 0.0
        %v4190 = vmax.f32 %v4140, 0.0
        %v4191 = vmax.f32 %v4143, 0.0
        %v4192 = vmax.f32 %v4148, 0.0
        %v4193 = vmax.f32 %v4151, 0.0
        %v4194 = vmax.f32 %v4156, 0.0
        %v4195 = vmax.f32 %v4159, 0.0
        %v4196 = vmax.f32 %v4164, 0.0
        %v4197 = vmax.f32 %v4167, 0.0
        %v4198 = vmax.f32 %v4172, 0.0
        %v4199 = vmax.f32 %v4175, 0.0
        %v4200 = vmax.f32 %v4180, 0.0
        %v4201 = vmax.f32 %v4183, 0.0
        %v4202 = vpack.c.bf16 %v4187, %v4186
        %v4203 = vpack.c.bf16 %v4189, %v4188
        %v4204 = vpack.c.bf16 %v4191, %v4190
        %v4205 = vpack.c.bf16 %v4193, %v4192
        %v4206 = vpack.c.bf16 %v4195, %v4194
        %v4207 = vpack.c.bf16 %v4197, %v4196
        %v4208 = vpack.c.bf16 %v4199, %v4198
        %v4209 = vpack.c.bf16 %v4201, %v4200
        %v4210 = vld [vmem:[%s18] sm:$0xf]
        %v4211 = vld [vmem:[%s18 + $0x4] sm:$0xf]
        %v4212 = vld [vmem:[%s18 + $0x8] sm:$0xf]
        %v4213 = vld [vmem:[%s18 + $0xc] sm:$0xf]
        %v4214 = vld [vmem:[%s18 + $0x10] sm:$0xf]
        %v4215 = vld [vmem:[%s18 + $0x14] sm:$0xf]
        %v4216 = vld [vmem:[%s18 + $0x18] sm:$0xf]
        %v4217 = vld [vmem:[%s18 + $0x1c] sm:$0xf]
        %v4218 = vld [vmem:[%s18 + $0x20] sm:$0xf]
        %v4219 = vld [vmem:[%s18 + $0x24] sm:$0xf]
        %v4220 = vld [vmem:[%s18 + $0x28] sm:$0xf]
        %v4221 = vld [vmem:[%s18 + $0x2c] sm:$0xf]
        %v4222 = vld [vmem:[%s18 + $0x30] sm:$0xf]
        %v4223 = vld [vmem:[%s18 + $0x34] sm:$0xf]
        %v4224 = vld [vmem:[%s18 + $0x38] sm:$0xf]
        %v4225 = vld [vmem:[%s18 + $0x3c] sm:$0xf]
        %v4226 = vld [vmem:[%s19] sm:$0x1]
        %v4228 = vlaneseq
        %v4229 = vshrl.u32 %v4228, 7
        %v4230 = vsub.s32 0, %v4229
        %v4231 = vrot.slane %v4226, %v4230
        %v4249 = vunpack.c.l.b16 %v4210
        %v4250 = vunpack.c.l.b16 %v4211
        %v4251 = vunpack.c.l.b16 %v4212
        %v4252 = vunpack.c.l.b16 %v4213
        %v4253 = vunpack.c.l.b16 %v4214
        %v4254 = vunpack.c.l.b16 %v4215
        %v4255 = vunpack.c.l.b16 %v4216
        %v4256 = vunpack.c.l.b16 %v4217
        %v4257 = vunpack.c.l.b16 %v4218
        %v4258 = vunpack.c.l.b16 %v4219
        %v4259 = vunpack.c.l.b16 %v4220
        %v4260 = vunpack.c.l.b16 %v4221
        %v4261 = vunpack.c.l.b16 %v4222
        %v4262 = vunpack.c.l.b16 %v4223
        %v4263 = vunpack.c.l.b16 %v4224
        %v4264 = vunpack.c.l.b16 %v4225
        %v4265 = vpack.c.b16 %v4250, %v4249
        %v4266 = vpack.c.b16 %v4252, %v4251
        %v4267 = vpack.c.b16 %v4254, %v4253
        %v4268 = vpack.c.b16 %v4256, %v4255
        %v4269 = vpack.c.b16 %v4258, %v4257
        %v4270 = vpack.c.b16 %v4260, %v4259
        %v4271 = vpack.c.b16 %v4262, %v4261
        %v4272 = vpack.c.b16 %v4264, %v4263
        %4281 = vmatprep.subr.bf16.mxu0 0
        %4282 = vmatpush1.bf16.msra.mxu0 %v4272
        %4283 = vmatprep.subr.bf16.mxu0 0
        %4284 = vmatpush1.bf16.msra.mxu0 %v4271
        %4285 = vmatprep.subr.bf16.mxu0 0
        %4286 = vmatpush1.bf16.msra.mxu0 %v4270
        %4287 = vmatprep.subr.bf16.mxu0 0
        %4288 = vmatpush1.bf16.msra.mxu0 %v4269
        %4289 = vmatprep.subr.bf16.mxu0 0
        %4290 = vmatpush1.bf16.msra.mxu0 %v4268
        %4291 = vmatprep.subr.bf16.mxu0 0
        %4292 = vmatpush1.bf16.msra.mxu0 %v4267
        %4293 = vmatprep.subr.bf16.mxu0 0
        %4294 = vmatpush1.bf16.msra.mxu0 %v4266
        %4295 = vmatprep.subr.bf16.mxu0 0
        %4296 = vmatpush1.bf16.msra.mxu0 %v4265
        %4297 = vmatprep.subr.bf16.mxu0 0
        %4298 = vmatpush2.bf16.msra.mxu0 0
        %4299 = vmatprep.subr.bf16.mxu0 0
        %4300 = vmatpush2.bf16.msra.mxu0 0
        %4301 = vmatprep.subr.bf16.mxu0 0
        %4302 = vmatpush2.bf16.msra.mxu0 0
        %4303 = vmatprep.subr.bf16.mxu0 0
        %4304 = vmatpush2.bf16.msra.mxu0 0
        %4305 = vmatprep.subr.bf16.mxu0 0
        %4306 = vmatpush2.bf16.msra.mxu0 0
        %4307 = vmatprep.subr.bf16.mxu0 0
        %4308 = vmatpush2.bf16.msra.mxu0 0
        %4309 = vmatprep.subr.bf16.mxu0 0
        %4310 = vmatpush2.bf16.msra.mxu0 0
        %4311 = vmatprep.subr.bf16.mxu0 0
        %4312 = vmatpush2.bf16.msra.mxu0 0
        %4313 = vmatprep.mubr.bf16.mxu0 0
        %4314 = vmatmul.mubr.bf16.gmra.mxu0 %v4202
        %v4315 = vpop.f32.mrf.mxu0
        %v4316 = vadd.f32 %v4231, %v4315
        %v4317 = vpop.f32.mrf.mxu0
        %v4318 = vpop.f32.mrf.mxu0
        %v4319 = vadd.f32 %v4231, %v4318
        %v4320 = vpop.f32.mrf.mxu0
        %4321 = vmatprep.mubr.bf16.mxu0 0
        %4322 = vmatmul.mubr.bf16.gmra.mxu0 %v4203
        %v4323 = vpop.f32.mrf.mxu0
        %v4324 = vadd.f32 %v4231, %v4323
        %v4325 = vpop.f32.mrf.mxu0
        %v4326 = vpop.f32.mrf.mxu0
        %v4327 = vadd.f32 %v4231, %v4326
        %v4328 = vpop.f32.mrf.mxu0
        %4329 = vmatprep.mubr.bf16.mxu0 0
        %4330 = vmatmul.mubr.bf16.gmra.mxu0 %v4204
        %v4331 = vpop.f32.mrf.mxu0
        %v4332 = vadd.f32 %v4231, %v4331
        %v4333 = vpop.f32.mrf.mxu0
        %v4334 = vpop.f32.mrf.mxu0
        %v4335 = vadd.f32 %v4231, %v4334
        %v4336 = vpop.f32.mrf.mxu0
        %4337 = vmatprep.mubr.bf16.mxu0 0
        %4338 = vmatmul.mubr.bf16.gmra.mxu0 %v4205
        %v4339 = vpop.f32.mrf.mxu0
        %v4340 = vadd.f32 %v4231, %v4339
        %v4341 = vpop.f32.mrf.mxu0
        %v4342 = vpop.f32.mrf.mxu0
        %v4343 = vadd.f32 %v4231, %v4342
        %v4344 = vpop.f32.mrf.mxu0
        %4345 = vmatprep.mubr.bf16.mxu0 0
        %4346 = vmatmul.mubr.bf16.gmra.mxu0 %v4206
        %v4347 = vpop.f32.mrf.mxu0
        %v4348 = vadd.f32 %v4231, %v4347
        %v4349 = vpop.f32.mrf.mxu0
        %v4350 = vpop.f32.mrf.mxu0
        %v4351 = vadd.f32 %v4231, %v4350
        %v4352 = vpop.f32.mrf.mxu0
        %4353 = vmatprep.mubr.bf16.mxu0 0
        %4354 = vmatmul.mubr.bf16.gmra.mxu0 %v4207
        %v4355 = vpop.f32.mrf.mxu0
        %v4356 = vadd.f32 %v4231, %v4355
        %v4357 = vpop.f32.mrf.mxu0
        %v4358 = vpop.f32.mrf.mxu0
        %v4359 = vadd.f32 %v4231, %v4358
        %v4360 = vpop.f32.mrf.mxu0
        %4361 = vmatprep.mubr.bf16.mxu0 0
        %4362 = vmatmul.mubr.bf16.gmra.mxu0 %v4208
        %v4363 = vpop.f32.mrf.mxu0
        %v4364 = vadd.f32 %v4231, %v4363
        %v4365 = vpop.f32.mrf.mxu0
        %v4366 = vpop.f32.mrf.mxu0
        %v4367 = vadd.f32 %v4231, %v4366
        %v4368 = vpop.f32.mrf.mxu0
        %4369 = vmatprep.mubr.bf16.mxu0 0
        %4370 = vmatmul.mubr.bf16.gmra.mxu0 %v4209
        %v4371 = vpop.f32.mrf.mxu0
        %v4372 = vadd.f32 %v4231, %v4371
        %v4373 = vpop.f32.mrf.mxu0
        %v4374 = vpop.f32.mrf.mxu0
        %v4375 = vadd.f32 %v4231, %v4374
        %v4376 = vpop.f32.mrf.mxu0
        %4377 = vdwg.mxu0
        %v4378 = vadd.f32 %v3409, %v4316
        %v4379 = vadd.f32 %v3410, %v4319
        %v4380 = vadd.f32 %v3411, %v4324
        %v4381 = vadd.f32 %v3412, %v4327
        %v4382 = vadd.f32 %v3413, %v4332
        %v4383 = vadd.f32 %v3414, %v4335
        %v4384 = vadd.f32 %v3415, %v4340
        %v4385 = vadd.f32 %v3416, %v4343
        %v4386 = vadd.f32 %v3417, %v4348
        %v4387 = vadd.f32 %v3418, %v4351
        %v4388 = vadd.f32 %v3419, %v4356
        %v4389 = vadd.f32 %v3420, %v4359
        %v4390 = vadd.f32 %v3421, %v4364
        %v4391 = vadd.f32 %v3422, %v4367
        %v4392 = vadd.f32 %v3423, %v4372
        %v4393 = vadd.f32 %v3424, %v4375
        %4394 = vst [vmem:[%s20] sm:$0xff] %v4378
        %4395 = vst [vmem:[%s20 + $0x8] sm:$0xff] %v4379
        %4396 = vst [vmem:[%s20 + $0x10] sm:$0xff] %v4380
        %4397 = vst [vmem:[%s20 + $0x18] sm:$0xff] %v4381
        %4398 = vst [vmem:[%s20 + $0x20] sm:$0xff] %v4382
        %4399 = vst [vmem:[%s20 + $0x28] sm:$0xff] %v4383
        %4400 = vst [vmem:[%s20 + $0x30] sm:$0xff] %v4384
        %4401 = vst [vmem:[%s20 + $0x38] sm:$0xff] %v4385
        %4402 = vst [vmem:[%s20 + $0x40] sm:$0xff] %v4386
        %4403 = vst [vmem:[%s20 + $0x48] sm:$0xff] %v4387
        %4404 = vst [vmem:[%s20 + $0x50] sm:$0xff] %v4388
        %4405 = vst [vmem:[%s20 + $0x58] sm:$0xff] %v4389
        %4406 = vst [vmem:[%s20 + $0x60] sm:$0xff] %v4390
        %4407 = vst [vmem:[%s20 + $0x68] sm:$0xff] %v4391
        %4408 = vst [vmem:[%s20 + $0x70] sm:$0xff] %v4392
        %4409 = vst [vmem:[%s20 + $0x78] sm:$0xff] %v4393
      $region108: #{_egcn_block.1} parent=99 // pred_fallthru
        _
      %s4410 = smul.u32 32, %s33
      %p4411 = scmp.lt.s32.totalorder %s4410, 95
      %s4412 = scalar_select %p4411, %s4410, 95
      %s4413 = smul.addr %s4412, 8
      %s4414 = scalar_lea.vmem %s21, %s4413
      // Predicated region
      $region109: #{_egcn_block.1} parent=99 // pred_check
        %p4415 = pneg %p481
      $region110: #{_egcn_block.1} parent=99 // pred_check_branch
        %4417 = sbr.rel (%p4415) target = $region112
      $region111: #{_egcn_block.1} parent=99 // pred_region
        _
      $region112: #{_egcn_block.1} parent=99 // pred_fallthru
        _
      // Predicated region
      $region113: #{_egcn_block.1} parent=99 // pred_check
        %p4418 = pneg %p507
      $region114: #{_egcn_block.1} parent=99 // pred_check_branch
        %4420 = sbr.rel (%p4418) target = $region116
      $region115: #{_egcn_block.1} parent=99 // pred_region
        %s4421 = smul.u32 32, %s33
      $region116: #{_egcn_block.1} parent=99 // pred_fallthru
        _
      // Predicated region
      $region117: #{_egcn_block.1} parent=99 // pred_check
        %p4422 = pneg %p481
      $region118: #{_egcn_block.1} parent=99 // pred_check_branch
        %4424 = sbr.rel (%p4422) target = $region120
      $region119: #{_egcn_block.1} parent=99 // pred_region
        _
      $region120: #{_egcn_block.1} parent=99 // pred_fallthru
        _
    $region100: #{_egcn_block.1} parent=5 // pred_fallthru
      _
    %p4425 = scmp.le.s32.totalorder 2, %s28
    // Predicated region
    $region121: #{_egcn_block.1} parent=5 // pred_check
      %p4426 = pneg %p4425
    $region122: #{_egcn_block.1} parent=5 // pred_check_branch
      %4428 = sbr.rel (%p4426) target = $region124
    $region123: #{_egcn_block.1} parent=5 // pred_region
      %s4429 = ssub.s32 %s28, 2
      // Predicated region
      $region125: #{_egcn_block.1} parent=123 // pred_check
        %p4430 = pneg %p513
      $region126: #{_egcn_block.1} parent=123 // pred_check_branch
        %4432 = sbr.rel (%p4430) target = $region128
      $region127: #{_egcn_block.1} parent=123 // pred_region
        %s4433 = smul.u32 32, %s34
        %p4434 = scmp.lt.s32.totalorder %s4433, 95
        %s4435 = scalar_select %p4434, %s4433, 95
        %s4436 = smul.addr %s4435, 8
        %s4437 = scalar_lea.vmem %s21, %s4436
      $region128: #{_egcn_block.1} parent=123 // pred_fallthru
        _
    $region124: #{_egcn_block.1} parent=5 // pred_fallthru
      _
  $region6: #{_egcn_block.1} parent=0 // loop_footer
    %s32 = sadd.s32 1, %s28
  $region7: #{_egcn_block.1} parent=0 // loop_footer_branch
    %27 = sbr.rel target = $region3
  $region8: #{_egcn_block.1} parent=0 // loop_exit
    _

</llo_original>
